<compile_context>
chip_gen: v7x
topology: tpu7x:2x2x1
jax: 0.10.0
libtpu: 0.0.40
codegen_flags: <defaults>
</compile_context>

<pallas_src>
import math
import functools

import jax
import jax.numpy as jnp
from jax import lax
from jax.experimental import pallas as pl
from jax.experimental.pallas import tpu as pltpu


def _matT(x, w):
    """x: (m, in), w: (out, in) -> (m, out) == x @ w.T with f32 accumulation."""
    return lax.dot_general(
        x, w, dimension_numbers=(((1,), (1,)), ((), ())),
        preferred_element_type=jnp.float32)


def _topdown_kernel(*refs, tr, nk, h, d_k, d_v, has_mask, ew_dtype):
    q_ref, k_ref, v_ref = refs[0], refs[1], refs[2]
    if has_mask:
        bias_ref = refs[3]
        rest = refs[4:]
    else:
        bias_ref = None
        rest = refs[3:]
    (wq_ref, bq_ref, wk_ref, bk_ref, wv_ref, bv_ref,
     wo_ref, bo_ref, g_ref, e_ref, out_ref, att_ref) = rest

    hdk = h * d_k
    hdv = h * d_v
    f32 = jnp.float32

    # --- bf16 MXU projections, f32 accumulation (1/sqrt(d_k) pre-folded into
    #     the query projection in the wrapper). ---
    qp = _matT(q_ref[...], wq_ref[...]) + bq_ref[...]          # (tr, hdk)      f32
    kp = _matT(k_ref[...], wk_ref[...]) + bk_ref[...]          # (tr*nk, hdk)   f32
    vp = _matT(v_ref[...], wv_ref[...]) + bv_ref[...]          # (tr*nk, hdv)   f32

    # --- q*k elementwise for every (row, key) pair (sublane broadcast of each
    #     query row).  bf16 on v6e/v7x (4x bf16 VALUs), f32 on older gens. ---
    qpe = qp.astype(ew_dtype)
    kpe = kp.astype(ew_dtype)
    prod = (qpe[:, None, :] * kpe.reshape(tr, nk, hdk)).reshape(tr * nk, hdk)

    # --- per-head sum over d_k: ONE bf16 MXU matmul with the 0/1 matrix G
    #     (single MXU pass; f32 accumulation). ---
    scores = jnp.dot(prod.astype(jnp.bfloat16), g_ref[...],
                     preferred_element_type=f32)               # (tr*nk, h)     f32

    # --- lane-dense (nk on the lane axis) mask + softmax; EUP exp/recip. ---
    s3 = jnp.transpose(scores.reshape(tr, nk, h), (0, 2, 1))   # (tr, h, nk)
    if bias_ref is not None:
        s3 = s3 + bias_ref[...]                                # additive -1e9 mask
    m = jnp.max(s3, axis=-1, keepdims=True)
    ex = jnp.exp(s3 - m)
    denom = jnp.sum(ex, axis=-1, keepdims=True)
    att3 = ex * pl.reciprocal(denom, approx=True)              # (tr, h, nk)    f32

    # lane-dense att store straight from the softmax layout.
    att_ref[...] = att3.astype(att_ref.dtype)

    # --- head -> d_v broadcast: ONE bf16 MXU matmul with the 0/1 matrix E,
    #     then weight values and reduce over nk with f32 accumulation. ---
    att_tk = jnp.transpose(att3, (0, 2, 1)).reshape(tr * nk, h)
    att_exp = jnp.dot(att_tk.astype(jnp.bfloat16), e_ref[...],
                      preferred_element_type=ew_dtype)          # (tr*nk, hdv)
    wv_prod = (att_exp * vp.astype(ew_dtype)).astype(f32)
    ctx = jnp.sum(wv_prod.reshape(tr, nk, hdv), axis=1)         # (tr, hdv)     f32

    # --- fc_o output projection (bf16 MXU, f32 accumulation). ---
    out_ref[...] = _matT(ctx.astype(wo_ref.dtype), wo_ref[...]) + bo_ref[...]


def _vmem_capacity_bytes(default_bytes=64 << 20):
    try:
        info = pltpu.get_tpu_info()
        cap = int(getattr(info, "vmem_capacity_bytes", 0))
        return cap if cap > 0 else default_bytes
    except Exception:
        return default_bytes


def _default_elementwise_dtype():
    # bf16 VALUs only exist on v6e / v7x; older generations would emulate
    # bf16 elementwise math, so keep their elementwise path in f32.
    try:
        kind = jax.devices()[0].device_kind.lower()
    except Exception:
        return jnp.bfloat16
    if ("v6" in kind) or ("v7" in kind) or ("7x" in kind):
        return jnp.bfloat16
    return jnp.float32


def _per_row_bytes(nk, dm, h, hdk, hdv, has_mask, att_itemsize):
    """VMEM bytes per fused row (streamed tiles double-buffered + generous
    allowance for the in-kernel f32 intermediates)."""
    streamed = (2 * (2 * nk * dm * 2)                 # k + v bf16 tiles (x2 buffers)
                + 2 * (dm * 2)                        # q bf16 tile
                + 2 * (dm * 4)                        # out f32 tile
                + 2 * (h * nk * att_itemsize)         # att tile
                + (2 * (h * nk * 2) if has_mask else 0))  # additive mask bias (bf16)
    interm = nk * (6 * hdk + 8 * hdv + 12 * h)        # kp/vp/prod/att_exp/softmax tmps
    return streamed + interm


def _choose_row_tile(rows, nk, per_row_bytes, vmem_budget_bytes,
                     min_steps=4, target_kv_rows=1024):
    """Fused-row tile: multiple of 8, streams ~target_kv_rows k/v rows per
    step, keeps >= min_steps grid steps for pipelining / megacore, and stays
    inside the VMEM budget."""
    up8 = lambda x: max(8, ((x + 7) // 8) * 8)
    down8 = lambda x: max(8, (x // 8) * 8)
    cap = down8(vmem_budget_bytes // max(per_row_bytes, 1))   # VMEM ceiling
    want = up8(-(-target_kv_rows // max(nk, 1)))              # k/v block target
    steps_cap = up8(-(-rows // min_steps))                    # keep >= min_steps steps
    return min(cap, want, steps_cap, up8(rows))


def top_down_attention(queries, keys, values, params, h, attention_mask=None,
                       row_tile=None, att_dtype=jnp.float32,
                       elementwise_dtype=None):
    """queries (b, nq, dm); keys/values (b, nq, nk, dm); mask (b, h, nq, nk),
    True = masked.  Returns (out (b, nq, dm) f32, att (b, h, nq, nk)).

    Notes: att is returned compact (the module's expand to (..., d_v) is a
    zero-copy view); att rows sum to 1 to ~1e-3 (EUP approx reciprocal);
    set att_dtype=jnp.bfloat16 to halve the att HBM writeback.
    """
    wq, bq, wk, bk, wv, bv, wo, bo = params
    b, nq, dm = queries.shape
    nk = keys.shape[-2]
    hdk = wq.shape[0]
    hdv = wv.shape[0]
    assert hdk % h == 0 and hdv % h == 0
    d_k = hdk // h
    d_v = hdv // h
    has_mask = attention_mask is not None
    ew_dtype = (jnp.dtype(elementwise_dtype) if elementwise_dtype is not None
                else _default_elementwise_dtype())

    rows = b * nq
    cdt = jnp.bfloat16                         # HBM->VMEM activation dtype

    # ---- row tile / grid / VMEM budget (generation-aware) ----
    att_itemsize = jnp.dtype(att_dtype).itemsize
    prb = _per_row_bytes(nk, dm, h, hdk, hdv, has_mask, att_itemsize)
    inv_bytes = (2 * dm * (2 * hdk + 2 * hdv)       # wq, wk, wv, wo in bf16
                 + 4 * (2 * hdk + hdv + dm)         # biases in f32
                 + 2 * h * (hdk + hdv))             # G, E in bf16
    vmem_cap = _vmem_capacity_bytes()
    row_budget = max(8 << 20, (vmem_cap * 3) // 4 - 2 * inv_bytes)
    tr = int(row_tile) if row_tile is not None else _choose_row_tile(
        rows, nk, prb, row_budget)
    assert tr >= 1
    n_steps = -(-rows // tr)
    padded_rows = n_steps * tr

    vmem_limit = int(min(max(tr * prb + 2 * inv_bytes + (4 << 20), 32 << 20),
                         max((vmem_cap * 3) // 4, 24 << 20)))

    # ---- operand preparation (all layout work happens once, here) ----
    scale = 1.0 / math.sqrt(d_k)
    q2 = queries.reshape(rows, dm).astype(cdt)
    k2 = keys.reshape(rows * nk, dm).astype(cdt)
    v2 = values.reshape(rows * nk, dm).astype(cdt)

    bias2 = None
    if has_mask:
        # Additive -1e9 bias in the lane-dense (rows, h, nk) softmax layout.
        bias2 = (jnp.where(attention_mask.astype(bool), -1000000000.0, 0.0)
                 .astype(jnp.bfloat16)
                 .transpose(0, 2, 1, 3)              # (b, nq, h, nk)
                 .reshape(rows, h, nk))

    if padded_rows != rows:        # rows are independent -> zero-pad is exact
        pad = padded_rows - rows
        q2 = jnp.pad(q2, ((0, pad), (0, 0)))
        k2 = jnp.pad(k2, ((0, pad * nk), (0, 0)))
        v2 = jnp.pad(v2, ((0, pad * nk), (0, 0)))
        if bias2 is not None:
            bias2 = jnp.pad(bias2, ((0, pad), (0, 0), (0, 0)))

    # 1/sqrt(d_k) folded into fc_q (free; removes a per-step VPU multiply).
    wq_b = (wq * scale).astype(cdt)
    wk_b = wk.astype(cdt)
    wv_b = wv.astype(cdt)
    wo_b = wo.astype(cdt)
    bq2 = (bq * scale).reshape(1, -1).astype(jnp.float32)
    bk2 = bk.reshape(1, -1).astype(jnp.float32)
    bv2 = bv.reshape(1, -1).astype(jnp.float32)
    bo2 = bo.reshape(1, -1).astype(jnp.float32)

    # Exact 0/1 grouping (per-head sum over d_k) and expansion (head -> d_v)
    # matrices, bf16 so the helper matmuls are single-pass on the MXU.
    G = (jnp.arange(hdk)[:, None] // d_k ==
         jnp.arange(h)[None, :]).astype(jnp.bfloat16)           # (hdk, h)
    E = (jnp.arange(h)[:, None] ==
         jnp.arange(hdv)[None, :] // d_v).astype(jnp.bfloat16)  # (h, hdv)

    kernel = functools.partial(_topdown_kernel, tr=tr, nk=nk, h=h,
                               d_k=d_k, d_v=d_v, has_mask=has_mask,
                               ew_dtype=ew_dtype)

    stream_args = [q2, k2, v2] + ([bias2] if has_mask else [])
    fixed_args = [wq_b, bq2, wk_b, bk2, wv_b, bv2, wo_b, bo2, G, E]

    stream_specs = [pl.BlockSpec((tr, dm), lambda r: (r, 0)),
                    pl.BlockSpec((tr * nk, dm), lambda r: (r, 0)),
                    pl.BlockSpec((tr * nk, dm), lambda r: (r, 0))]
    if has_mask:
        stream_specs.append(pl.BlockSpec((tr, h, nk), lambda r: (r, 0, 0)))

    def run(single_buffer_invariants):
        def fixed(a):
            shape = a.shape
            imap = lambda r: (0,) * len(shape)
            if single_buffer_invariants:
                # Grid-invariant operand: one VMEM buffer instead of two.
                return pl.BlockSpec(shape, imap, pipeline_mode=pl.Buffered(1))
            return pl.BlockSpec(shape, imap)

        return pl.pallas_call(
            kernel,
            out_shape=(jax.ShapeDtypeStruct((padded_rows, dm), jnp.float32),
                       jax.ShapeDtypeStruct((padded_rows, h, nk), att_dtype)),
            grid=(n_steps,),
            in_specs=stream_specs + [fixed(a) for a in fixed_args],
            out_specs=[pl.BlockSpec((tr, dm), lambda r: (r, 0)),
                       pl.BlockSpec((tr, h, nk), lambda r: (r, 0, 0))],
            compiler_params=pltpu.CompilerParams(
                dimension_semantics=("parallel",),
                vmem_limit_bytes=vmem_limit),
        )(*stream_args, *fixed_args)

    try:
        out2, att2 = run(True)
    except Exception:
        # pipeline_mode=pl.Buffered(1) unsupported on this Pallas build:
        # fall back to the default double-buffered invariant operands.
        out2, att2 = run(False)

    out = out2[:rows].reshape(b, nq, dm)
    att = (att2[:rows].astype(jnp.float32)
           .reshape(b, nq, h, nk).transpose(0, 2, 1, 3))        # (b, h, nq, nk)
    return out, att


def init_params(key, d_model, d_k, d_v, h):
    """Mirrors the PyTorch module's xavier_uniform_ weights / zero biases."""
    def xavier(k, out_f, in_f):
        a = math.sqrt(6.0 / (in_f + out_f))
        return jax.random.uniform(k, (out_f, in_f), jnp.float32, -a, a)

    k1, k2, k3, k4 = jax.random.split(key, 4)
    wq = xavier(k1, h * d_k, d_model)
    wk = xavier(k2, h * d_k, d_model)
    wv = xavier(k3, h * d_v, d_model)
    wo = xavier(k4, d_model, h * d_v)
    bq = jnp.zeros((h * d_k,), jnp.float32)
    bk = jnp.zeros((h * d_k,), jnp.float32)
    bv = jnp.zeros((h * d_v,), jnp.float32)
    bo = jnp.zeros((d_model,), jnp.float32)
    return (wq, bq, wk, bk, wv, bv, wo, bo)


def reference(queries, keys, values, params, h, attention_mask=None,
              matmul_dtype=jnp.float32):
    """Pure-JAX port of TopDownAttention.forward.  matmul_dtype=bfloat16
    mirrors the kernel's bf16 matmul operands (f32 accumulation)."""
    wq, bq, wk, bk, wv, bv, wo, bo = params
    b, nq, dm = queries.shape
    nk = keys.shape[-2]
    d_k = wq.shape[0] // h
    d_v = wv.shape[0] // h
    c = lambda x: x.astype(matmul_dtype)

    def lin(x, w, bias):
        return jnp.dot(c(x), c(w).T, preferred_element_type=jnp.float32) + bias

    q = lin(queries, wq, bq)                                       # (b, nq, h*d_k)
    q = q.reshape(b, nq, h, d_k).transpose(0, 2, 1, 3)             # b h q d
    k = lin(keys.reshape(b, nq * nk, dm), wk, bk)
    k = k.reshape(b, nq, nk, h, d_k).transpose(0, 3, 1, 2, 4)      # b h q k d
    v = lin(values.reshape(b, nq * nk, dm), wv, bv)
    v = v.reshape(b, nq, nk, h, d_v).transpose(0, 3, 1, 2, 4)      # b h q k d

    att = jnp.sum(q[:, :, :, None, :] * k, axis=-1) / math.sqrt(d_k)   # b h q k
    if attention_mask is not None:
        att = jnp.where(attention_mask.astype(bool), -1000000000.0, att)
    att = jax.nn.softmax(att, axis=-1)
    out = jnp.sum(att[..., None] * v, axis=-2)                     # b h q d_v
    out = out.transpose(0, 2, 1, 3).reshape(b, nq, h * d_v)
    out = lin(out, wo, bo)
    return out, att


if __name__ == "__main__":
    B, NQ, NK = 2, 16, 16
    D_MODEL, D_K, D_V, H = 32, 8, 8, 4

    root = jax.random.PRNGKey(0)
    k_par, k_q, k_k, k_v, k_m = jax.random.split(root, 5)
    params = init_params(k_par, D_MODEL, D_K, D_V, H)

    queries = jax.random.normal(k_q, (B, NQ, D_MODEL), jnp.float32)
    keys = jax.random.normal(k_k, (B, NQ, NK, D_MODEL), jnp.float32)
    values = jax.random.normal(k_v, (B, NQ, NK, D_MODEL), jnp.float32)
    attention_mask = jax.random.bernoulli(k_m, 0.25, (B, H, NQ, NK))

    def rel(a, b_):
        return float(jnp.linalg.norm((a - b_).ravel()) /
                     (jnp.linalg.norm(b_.ravel()) + 1e-30))

    # --- masked path ---
    out, att = top_down_attention(queries, keys, values, params, H,
                                  attention_mask=attention_mask)
    jax.block_until_ready((out, att))
    assert out.shape == (B, NQ, D_MODEL)
    assert att.shape == (B, H, NQ, NK)

    out_bf, att_bf = reference(queries, keys, values, params, H,
                               attention_mask=attention_mask,
                               matmul_dtype=jnp.bfloat16)
    out_f32, att_f32 = reference(queries, keys, values, params, H,
                                 attention_mask=attention_mask,
                                 matmul_dtype=jnp.float32)

    # (1) vs. a reference that mirrors the bf16 matmul-operand / f32-accum path.
    assert jnp.allclose(out, out_bf, atol=5e-2, rtol=5e-2), "out vs bf16 ref"
    assert jnp.allclose(att, att_bf, atol=2e-2, rtol=2e-2), "att vs bf16 ref"
    # (2) relative-norm vs. the full-f32 math of the PyTorch module.
    assert rel(out, out_f32) < 5e-2, "out vs f32 ref (norm)"
    assert rel(att, att_f32) < 5e-2, "att vs f32 ref (norm)"

    # --- no-mask specialization path (mask stream dropped entirely) ---
    out_nm, att_nm = top_down_attention(queries, keys, values, params, H)
    jax.block_until_ready((out_nm, att_nm))
    out_f32_nm, att_f32_nm = reference(queries, keys, values, params, H)
    assert rel(out_nm, out_f32_nm) < 5e-2, "no-mask out vs f32 ref (norm)"
    assert rel(att_nm, att_f32_nm) < 5e-2, "no-mask att vs f32 ref (norm)"

    print("KERNEL_OK")
</pallas_src>

<mosaic_0001>
module attributes {stable_mosaic.version = 11 : i64} {
  func.func @_topdown_kernel(%arg0: i32, %arg1: memref<8x32xbf16, #tpu.memory_space<vmem>>, %arg2: memref<128x32xbf16, #tpu.memory_space<vmem>>, %arg3: memref<128x32xbf16, #tpu.memory_space<vmem>>, %arg4: memref<8x4x16xbf16, #tpu.memory_space<vmem>>, %arg5: memref<32x32xbf16, #tpu.memory_space<vmem>>, %arg6: memref<1x32xf32, #tpu.memory_space<vmem>>, %arg7: memref<32x32xbf16, #tpu.memory_space<vmem>>, %arg8: memref<1x32xf32, #tpu.memory_space<vmem>>, %arg9: memref<32x32xbf16, #tpu.memory_space<vmem>>, %arg10: memref<1x32xf32, #tpu.memory_space<vmem>>, %arg11: memref<32x32xbf16, #tpu.memory_space<vmem>>, %arg12: memref<1x32xf32, #tpu.memory_space<vmem>>, %arg13: memref<32x4xbf16, #tpu.memory_space<vmem>>, %arg14: memref<4x32xbf16, #tpu.memory_space<vmem>>, %arg15: memref<8x32xf32, #tpu.memory_space<vmem>>, %arg16: memref<8x4x16xf32, #tpu.memory_space<vmem>>) attributes {dimension_semantics = [#tpu.dimension_semantics<parallel>], iteration_bounds = array<i64: 4>, scalar_prefetch = 0 : i64, scratch_operands = 0 : i64, tpu.core_type = #tpu.core_type<tc>, window_params = [{transform_indices = @transform_0, window_bounds = array<i64: 8, 32>}, {transform_indices = @transform_1, window_bounds = array<i64: 128, 32>}, {transform_indices = @transform_2, window_bounds = array<i64: 128, 32>}, {transform_indices = @transform_3, window_bounds = array<i64: 8, 4, 16>}, {pipeline_mode = #tpu.pipeline_mode<synchronous>, transform_indices = @transform_4, window_bounds = array<i64: 32, 32>}, {pipeline_mode = #tpu.pipeline_mode<synchronous>, transform_indices = @transform_5, window_bounds = array<i64: 1, 32>}, {pipeline_mode = #tpu.pipeline_mode<synchronous>, transform_indices = @transform_6, window_bounds = array<i64: 32, 32>}, {pipeline_mode = #tpu.pipeline_mode<synchronous>, transform_indices = @transform_7, window_bounds = array<i64: 1, 32>}, {pipeline_mode = #tpu.pipeline_mode<synchronous>, transform_indices = @transform_8, window_bounds = array<i64: 32, 32>}, {pipeline_mode = #tpu.pipeline_mode<synchronous>, transform_indices = @transform_9, window_bounds = array<i64: 1, 32>}, {pipeline_mode = #tpu.pipeline_mode<synchronous>, transform_indices = @transform_10, window_bounds = array<i64: 32, 32>}, {pipeline_mode = #tpu.pipeline_mode<synchronous>, transform_indices = @transform_11, window_bounds = array<i64: 1, 32>}, {pipeline_mode = #tpu.pipeline_mode<synchronous>, transform_indices = @transform_12, window_bounds = array<i64: 32, 4>}, {pipeline_mode = #tpu.pipeline_mode<synchronous>, transform_indices = @transform_13, window_bounds = array<i64: 4, 32>}, {transform_indices = @transform_14, window_bounds = array<i64: 8, 32>}, {transform_indices = @transform_15, window_bounds = array<i64: 8, 4, 16>}]} {
    %c0 = arith.constant 0 : index
    %c0_0 = arith.constant 0 : index
    %0 = vector.load %arg1[%c0, %c0_0] : memref<8x32xbf16, #tpu.memory_space<vmem>>, vector<8x32xbf16>
    %c0_1 = arith.constant 0 : index
    %c0_2 = arith.constant 0 : index
    %1 = vector.load %arg5[%c0_1, %c0_2] : memref<32x32xbf16, #tpu.memory_space<vmem>>, vector<32x32xbf16>
    %cst = arith.constant dense<0.000000e+00> : vector<8x32xf32>
    %2 = tpu.matmul %0, %1, %cst {dimension_numbers = #tpu.dot_dimension_numbers<[1], [1], [0], [0], [0, 0, 1, 0], [], []>} : vector<8x32xbf16>, vector<32x32xbf16>, vector<8x32xf32> -> vector<8x32xf32>
    %c0_3 = arith.constant 0 : index
    %c0_4 = arith.constant 0 : index
    %3 = vector.load %arg6[%c0_3, %c0_4] : memref<1x32xf32, #tpu.memory_space<vmem>>, vector<1x32xf32>
    %4 = vector.broadcast %3 : vector<1x32xf32> to vector<8x32xf32>
    %5 = arith.addf %2, %4 : vector<8x32xf32>
    %c0_5 = arith.constant 0 : index
    %c0_6 = arith.constant 0 : index
    %6 = vector.load %arg2[%c0_5, %c0_6] : memref<128x32xbf16, #tpu.memory_space<vmem>>, vector<128x32xbf16>
    %c0_7 = arith.constant 0 : index
    %c0_8 = arith.constant 0 : index
    %7 = vector.load %arg7[%c0_7, %c0_8] : memref<32x32xbf16, #tpu.memory_space<vmem>>, vector<32x32xbf16>
    %cst_9 = arith.constant dense<0.000000e+00> : vector<128x32xf32>
    %8 = tpu.matmul %6, %7, %cst_9 {dimension_numbers = #tpu.dot_dimension_numbers<[1], [1], [0], [0], [0, 0, 1, 0], [], []>} : vector<128x32xbf16>, vector<32x32xbf16>, vector<128x32xf32> -> vector<128x32xf32>
    %c0_10 = arith.constant 0 : index
    %c0_11 = arith.constant 0 : index
    %9 = vector.load %arg8[%c0_10, %c0_11] : memref<1x32xf32, #tpu.memory_space<vmem>>, vector<1x32xf32>
    %10 = vector.broadcast %9 : vector<1x32xf32> to vector<128x32xf32>
    %11 = arith.addf %8, %10 : vector<128x32xf32>
    %c0_12 = arith.constant 0 : index
    %c0_13 = arith.constant 0 : index
    %12 = vector.load %arg3[%c0_12, %c0_13] : memref<128x32xbf16, #tpu.memory_space<vmem>>, vector<128x32xbf16>
    %c0_14 = arith.constant 0 : index
    %c0_15 = arith.constant 0 : index
    %13 = vector.load %arg9[%c0_14, %c0_15] : memref<32x32xbf16, #tpu.memory_space<vmem>>, vector<32x32xbf16>
    %cst_16 = arith.constant dense<0.000000e+00> : vector<128x32xf32>
    %14 = tpu.matmul %12, %13, %cst_16 {dimension_numbers = #tpu.dot_dimension_numbers<[1], [1], [0], [0], [0, 0, 1, 0], [], []>} : vector<128x32xbf16>, vector<32x32xbf16>, vector<128x32xf32> -> vector<128x32xf32>
    %c0_17 = arith.constant 0 : index
    %c0_18 = arith.constant 0 : index
    %15 = vector.load %arg10[%c0_17, %c0_18] : memref<1x32xf32, #tpu.memory_space<vmem>>, vector<1x32xf32>
    %16 = vector.broadcast %15 : vector<1x32xf32> to vector<128x32xf32>
    %17 = arith.addf %14, %16 : vector<128x32xf32>
    %18 = vector.shape_cast %5 : vector<8x32xf32> to vector<8x1x32xf32>
    %19 = vector.shape_cast %11 : vector<128x32xf32> to vector<8x16x32xf32>
    %20 = vector.broadcast %18 : vector<8x1x32xf32> to vector<8x16x32xf32>
    %21 = arith.mulf %20, %19 : vector<8x16x32xf32>
    %22 = vector.shape_cast %21 : vector<8x16x32xf32> to vector<128x32xf32>
    %23 = arith.truncf %22 : vector<128x32xf32> to vector<128x32xbf16>
    %c0_19 = arith.constant 0 : index
    %c0_20 = arith.constant 0 : index
    %24 = vector.load %arg13[%c0_19, %c0_20] : memref<32x4xbf16, #tpu.memory_space<vmem>>, vector<32x4xbf16>
    %cst_21 = arith.constant dense<0.000000e+00> : vector<128x4xf32>
    %25 = tpu.matmul %23, %24, %cst_21 {dimension_numbers = #tpu.dot_dimension_numbers<[1], [0], [0], [1], [0, 0, 1, 1], [], []>} : vector<128x32xbf16>, vector<32x4xbf16>, vector<128x4xf32> -> vector<128x4xf32>
    %26 = vector.shape_cast %25 : vector<128x4xf32> to vector<8x16x4xf32>
    %27 = tpu.transpose %26, [0, 2, 1] : vector<8x16x4xf32> -> vector<8x4x16xf32>
    %c0_22 = arith.constant 0 : index
    %c0_23 = arith.constant 0 : index
    %c0_24 = arith.constant 0 : index
    %28 = vector.load %arg4[%c0_22, %c0_23, %c0_24] : memref<8x4x16xbf16, #tpu.memory_space<vmem>>, vector<8x4x16xbf16>
    %29 = arith.extf %28 : vector<8x4x16xbf16> to vector<8x4x16xf32>
    %30 = arith.addf %27, %29 : vector<8x4x16xf32>
    %cst_25 = arith.constant dense<0xFF800000> : vector<8x4xf32>
    %31 = vector.multi_reduction <maximumf>, %30, %cst_25 [2] : vector<8x4x16xf32> to vector<8x4xf32>
    %32 = vector.shape_cast %31 : vector<8x4xf32> to vector<8x4x1xf32>
    %33 = vector.broadcast %32 : vector<8x4x1xf32> to vector<8x4x16xf32>
    %34 = arith.subf %30, %33 : vector<8x4x16xf32>
    %35 = math.exp %34 : vector<8x4x16xf32>
    %cst_26 = arith.constant dense<0.000000e+00> : vector<8x4xf32>
    %36 = vector.multi_reduction <add>, %35, %cst_26 [2] : vector<8x4x16xf32> to vector<8x4xf32>
    %37 = vector.shape_cast %36 : vector<8x4xf32> to vector<8x4x1xf32>
    %38 = tpu.reciprocal %37 {approx = true} : vector<8x4x1xf32> -> vector<8x4x1xf32>
    %39 = vector.broadcast %38 : vector<8x4x1xf32> to vector<8x4x16xf32>
    %40 = arith.mulf %35, %39 : vector<8x4x16xf32>
    %c0_27 = arith.constant 0 : index
    %c0_28 = arith.constant 0 : index
    %c0_29 = arith.constant 0 : index
    %41 = vector.load %arg16[%c0_27, %c0_28, %c0_29] : memref<8x4x16xf32, #tpu.memory_space<vmem>>, vector<8x4x16xf32>
    tpu.vector_store %arg16[%c0_27, %c0_28, %c0_29], %40 {strides = array<i32>} : memref<8x4x16xf32, #tpu.memory_space<vmem>>, vector<8x4x16xf32>,
    %42 = tpu.transpose %40, [0, 2, 1] : vector<8x4x16xf32> -> vector<8x16x4xf32>
    %43 = vector.shape_cast %42 : vector<8x16x4xf32> to vector<128x4xf32>
    %44 = arith.truncf %43 : vector<128x4xf32> to vector<128x4xbf16>
    %c0_30 = arith.constant 0 : index
    %c0_31 = arith.constant 0 : index
    %45 = vector.load %arg14[%c0_30, %c0_31] : memref<4x32xbf16, #tpu.memory_space<vmem>>, vector<4x32xbf16>
    %cst_32 = arith.constant dense<0.000000e+00> : vector<128x32xf32>
    %46 = tpu.matmul %44, %45, %cst_32 {dimension_numbers = #tpu.dot_dimension_numbers<[1], [0], [0], [1], [0, 0, 1, 1], [], []>} : vector<128x4xbf16>, vector<4x32xbf16>, vector<128x32xf32> -> vector<128x32xf32>
    %47 = arith.mulf %46, %17 : vector<128x32xf32>
    %48 = vector.shape_cast %47 : vector<128x32xf32> to vector<8x16x32xf32>
    %cst_33 = arith.constant dense<0.000000e+00> : vector<8x32xf32>
    %49 = vector.multi_reduction <add>, %48, %cst_33 [1] : vector<8x16x32xf32> to vector<8x32xf32>
    %50 = arith.truncf %49 : vector<8x32xf32> to vector<8x32xbf16>
    %c0_34 = arith.constant 0 : index
    %c0_35 = arith.constant 0 : index
    %51 = vector.load %arg11[%c0_34, %c0_35] : memref<32x32xbf16, #tpu.memory_space<vmem>>, vector<32x32xbf16>
    %cst_36 = arith.constant dense<0.000000e+00> : vector<8x32xf32>
    %52 = tpu.matmul %50, %51, %cst_36 {dimension_numbers = #tpu.dot_dimension_numbers<[1], [1], [0], [0], [0, 0, 1, 0], [], []>} : vector<8x32xbf16>, vector<32x32xbf16>, vector<8x32xf32> -> vector<8x32xf32>
    %c0_37 = arith.constant 0 : index
    %c0_38 = arith.constant 0 : index
    %53 = vector.load %arg12[%c0_37, %c0_38] : memref<1x32xf32, #tpu.memory_space<vmem>>, vector<1x32xf32>
    %54 = vector.broadcast %53 : vector<1x32xf32> to vector<8x32xf32>
    %55 = arith.addf %52, %54 : vector<8x32xf32>
    %c0_39 = arith.constant 0 : index
    %c0_40 = arith.constant 0 : index
    %56 = vector.load %arg15[%c0_39, %c0_40] : memref<8x32xf32, #tpu.memory_space<vmem>>, vector<8x32xf32>
    tpu.vector_store %arg15[%c0_39, %c0_40], %55 {strides = array<i32>} : memref<8x32xf32, #tpu.memory_space<vmem>>, vector<8x32xf32>,
    return
  }
  func.func @transform_0(%arg0: i32) -> (i32, i32) {
    %c0_i32 = arith.constant 0 : i32
    %c0_i32_0 = arith.constant 0 : i32
    return %arg0, %c0_i32 : i32, i32
  }
  func.func @transform_1(%arg0: i32) -> (i32, i32) {
    %c0_i32 = arith.constant 0 : i32
    %c0_i32_0 = arith.constant 0 : i32
    return %arg0, %c0_i32 : i32, i32
  }
  func.func @transform_2(%arg0: i32) -> (i32, i32) {
    %c0_i32 = arith.constant 0 : i32
    %c0_i32_0 = arith.constant 0 : i32
    return %arg0, %c0_i32 : i32, i32
  }
  func.func @transform_3(%arg0: i32) -> (i32, i32, i32) {
    %c0_i32 = arith.constant 0 : i32
    %c0_i32_0 = arith.constant 0 : i32
    %c0_i32_1 = arith.constant 0 : i32
    return %arg0, %c0_i32, %c0_i32_0 : i32, i32, i32
  }
  func.func @transform_4(%arg0: i32) -> (i32, i32) {
    %c0_i32 = arith.constant 0 : i32
    %c0_i32_0 = arith.constant 0 : i32
    %c0_i32_1 = arith.constant 0 : i32
    return %c0_i32, %c0_i32_0 : i32, i32
  }
  func.func @transform_5(%arg0: i32) -> (i32, i32) {
    %c0_i32 = arith.constant 0 : i32
    %c0_i32_0 = arith.constant 0 : i32
    %c0_i32_1 = arith.constant 0 : i32
    return %c0_i32, %c0_i32_0 : i32, i32
  }
  func.func @transform_6(%arg0: i32) -> (i32, i32) {
    %c0_i32 = arith.constant 0 : i32
    %c0_i32_0 = arith.constant 0 : i32
    %c0_i32_1 = arith.constant 0 : i32
    return %c0_i32, %c0_i32_0 : i32, i32
  }
  func.func @transform_7(%arg0: i32) -> (i32, i32) {
    %c0_i32 = arith.constant 0 : i32
    %c0_i32_0 = arith.constant 0 : i32
    %c0_i32_1 = arith.constant 0 : i32
    return %c0_i32, %c0_i32_0 : i32, i32
  }
  func.func @transform_8(%arg0: i32) -> (i32, i32) {
    %c0_i32 = arith.constant 0 : i32
    %c0_i32_0 = arith.constant 0 : i32
    %c0_i32_1 = arith.constant 0 : i32
    return %c0_i32, %c0_i32_0 : i32, i32
  }
  func.func @transform_9(%arg0: i32) -> (i32, i32) {
    %c0_i32 = arith.constant 0 : i32
    %c0_i32_0 = arith.constant 0 : i32
    %c0_i32_1 = arith.constant 0 : i32
    return %c0_i32, %c0_i32_0 : i32, i32
  }
  func.func @transform_10(%arg0: i32) -> (i32, i32) {
    %c0_i32 = arith.constant 0 : i32
    %c0_i32_0 = arith.constant 0 : i32
    %c0_i32_1 = arith.constant 0 : i32
    return %c0_i32, %c0_i32_0 : i32, i32
  }
  func.func @transform_11(%arg0: i32) -> (i32, i32) {
    %c0_i32 = arith.constant 0 : i32
    %c0_i32_0 = arith.constant 0 : i32
    %c0_i32_1 = arith.constant 0 : i32
    return %c0_i32, %c0_i32_0 : i32, i32
  }
  func.func @transform_12(%arg0: i32) -> (i32, i32) {
    %c0_i32 = arith.constant 0 : i32
    %c0_i32_0 = arith.constant 0 : i32
    %c0_i32_1 = arith.constant 0 : i32
    return %c0_i32, %c0_i32_0 : i32, i32
  }
  func.func @transform_13(%arg0: i32) -> (i32, i32) {
    %c0_i32 = arith.constant 0 : i32
    %c0_i32_0 = arith.constant 0 : i32
    %c0_i32_1 = arith.constant 0 : i32
    return %c0_i32, %c0_i32_0 : i32, i32
  }
  func.func @transform_14(%arg0: i32) -> (i32, i32) {
    %c0_i32 = arith.constant 0 : i32
    %c0_i32_0 = arith.constant 0 : i32
    return %arg0, %c0_i32 : i32, i32
  }
  func.func @transform_15(%arg0: i32) -> (i32, i32, i32) {
    %c0_i32 = arith.constant 0 : i32
    %c0_i32_0 = arith.constant 0 : i32
    %c0_i32_1 = arith.constant 0 : i32
    return %arg0, %c0_i32, %c0_i32_0 : i32, i32, i32
  }
}

module attributes {stable_mosaic.version = 11 : i64} {
  func.func @_topdown_kernel(%arg0: i32, %arg1: memref<8x32xbf16, #tpu.memory_space<vmem>>, %arg2: memref<128x32xbf16, #tpu.memory_space<vmem>>, %arg3: memref<128x32xbf16, #tpu.memory_space<vmem>>, %arg4: memref<8x4x16xbf16, #tpu.memory_space<vmem>>, %arg5: memref<32x32xbf16, #tpu.memory_space<vmem>>, %arg6: memref<1x32xf32, #tpu.memory_space<vmem>>, %arg7: memref<32x32xbf16, #tpu.memory_space<vmem>>, %arg8: memref<1x32xf32, #tpu.memory_space<vmem>>, %arg9: memref<32x32xbf16, #tpu.memory_space<vmem>>, %arg10: memref<1x32xf32, #tpu.memory_space<vmem>>, %arg11: memref<32x32xbf16, #tpu.memory_space<vmem>>, %arg12: memref<1x32xf32, #tpu.memory_space<vmem>>, %arg13: memref<32x4xbf16, #tpu.memory_space<vmem>>, %arg14: memref<4x32xbf16, #tpu.memory_space<vmem>>, %arg15: memref<8x32xf32, #tpu.memory_space<vmem>>, %arg16: memref<8x4x16xf32, #tpu.memory_space<vmem>>) attributes {dimension_semantics = [#tpu.dimension_semantics<parallel>], iteration_bounds = array<i64: 4>, scalar_prefetch = 0 : i64, scratch_operands = 0 : i64, tpu.core_type = #tpu.core_type<tc>, window_params = [{transform_indices = @transform_0, window_bounds = array<i64: 8, 32>}, {transform_indices = @transform_1, window_bounds = array<i64: 128, 32>}, {transform_indices = @transform_2, window_bounds = array<i64: 128, 32>}, {transform_indices = @transform_3, window_bounds = array<i64: 8, 4, 16>}, {pipeline_mode = #tpu.pipeline_mode<synchronous>, transform_indices = @transform_4, window_bounds = array<i64: 32, 32>}, {pipeline_mode = #tpu.pipeline_mode<synchronous>, transform_indices = @transform_5, window_bounds = array<i64: 1, 32>}, {pipeline_mode = #tpu.pipeline_mode<synchronous>, transform_indices = @transform_6, window_bounds = array<i64: 32, 32>}, {pipeline_mode = #tpu.pipeline_mode<synchronous>, transform_indices = @transform_7, window_bounds = array<i64: 1, 32>}, {pipeline_mode = #tpu.pipeline_mode<synchronous>, transform_indices = @transform_8, window_bounds = array<i64: 32, 32>}, {pipeline_mode = #tpu.pipeline_mode<synchronous>, transform_indices = @transform_9, window_bounds = array<i64: 1, 32>}, {pipeline_mode = #tpu.pipeline_mode<synchronous>, transform_indices = @transform_10, window_bounds = array<i64: 32, 32>}, {pipeline_mode = #tpu.pipeline_mode<synchronous>, transform_indices = @transform_11, window_bounds = array<i64: 1, 32>}, {pipeline_mode = #tpu.pipeline_mode<synchronous>, transform_indices = @transform_12, window_bounds = array<i64: 32, 4>}, {pipeline_mode = #tpu.pipeline_mode<synchronous>, transform_indices = @transform_13, window_bounds = array<i64: 4, 32>}, {transform_indices = @transform_14, window_bounds = array<i64: 8, 32>}, {transform_indices = @transform_15, window_bounds = array<i64: 8, 4, 16>}]} {
    %c0 = arith.constant 0 : index
    %c0_0 = arith.constant 0 : index
    %0 = vector.load %arg1[%c0, %c0_0] : memref<8x32xbf16, #tpu.memory_space<vmem>>, vector<8x32xbf16>
    %c0_1 = arith.constant 0 : index
    %c0_2 = arith.constant 0 : index
    %1 = vector.load %arg5[%c0_1, %c0_2] : memref<32x32xbf16, #tpu.memory_space<vmem>>, vector<32x32xbf16>
    %cst = arith.constant dense<0.000000e+00> : vector<8x32xf32>
    %2 = tpu.matmul %0, %1, %cst {dimension_numbers = #tpu.dot_dimension_numbers<[1], [1], [0], [0], [0, 0, 1, 0], [], []>} : vector<8x32xbf16>, vector<32x32xbf16>, vector<8x32xf32> -> vector<8x32xf32>
    %c0_3 = arith.constant 0 : index
    %c0_4 = arith.constant 0 : index
    %3 = vector.load %arg6[%c0_3, %c0_4] : memref<1x32xf32, #tpu.memory_space<vmem>>, vector<1x32xf32>
    %4 = vector.broadcast %3 : vector<1x32xf32> to vector<8x32xf32>
    %5 = arith.addf %2, %4 : vector<8x32xf32>
    %c0_5 = arith.constant 0 : index
    %c0_6 = arith.constant 0 : index
    %6 = vector.load %arg2[%c0_5, %c0_6] : memref<128x32xbf16, #tpu.memory_space<vmem>>, vector<128x32xbf16>
    %c0_7 = arith.constant 0 : index
    %c0_8 = arith.constant 0 : index
    %7 = vector.load %arg7[%c0_7, %c0_8] : memref<32x32xbf16, #tpu.memory_space<vmem>>, vector<32x32xbf16>
    %cst_9 = arith.constant dense<0.000000e+00> : vector<128x32xf32>
    %8 = tpu.matmul %6, %7, %cst_9 {dimension_numbers = #tpu.dot_dimension_numbers<[1], [1], [0], [0], [0, 0, 1, 0], [], []>} : vector<128x32xbf16>, vector<32x32xbf16>, vector<128x32xf32> -> vector<128x32xf32>
    %c0_10 = arith.constant 0 : index
    %c0_11 = arith.constant 0 : index
    %9 = vector.load %arg8[%c0_10, %c0_11] : memref<1x32xf32, #tpu.memory_space<vmem>>, vector<1x32xf32>
    %10 = vector.broadcast %9 : vector<1x32xf32> to vector<128x32xf32>
    %11 = arith.addf %8, %10 : vector<128x32xf32>
    %c0_12 = arith.constant 0 : index
    %c0_13 = arith.constant 0 : index
    %12 = vector.load %arg3[%c0_12, %c0_13] : memref<128x32xbf16, #tpu.memory_space<vmem>>, vector<128x32xbf16>
    %c0_14 = arith.constant 0 : index
    %c0_15 = arith.constant 0 : index
    %13 = vector.load %arg9[%c0_14, %c0_15] : memref<32x32xbf16, #tpu.memory_space<vmem>>, vector<32x32xbf16>
    %cst_16 = arith.constant dense<0.000000e+00> : vector<128x32xf32>
    %14 = tpu.matmul %12, %13, %cst_16 {dimension_numbers = #tpu.dot_dimension_numbers<[1], [1], [0], [0], [0, 0, 1, 0], [], []>} : vector<128x32xbf16>, vector<32x32xbf16>, vector<128x32xf32> -> vector<128x32xf32>
    %c0_17 = arith.constant 0 : index
    %c0_18 = arith.constant 0 : index
    %15 = vector.load %arg10[%c0_17, %c0_18] : memref<1x32xf32, #tpu.memory_space<vmem>>, vector<1x32xf32>
    %16 = vector.broadcast %15 : vector<1x32xf32> to vector<128x32xf32>
    %17 = arith.addf %14, %16 : vector<128x32xf32>
    %18 = vector.shape_cast %5 : vector<8x32xf32> to vector<8x1x32xf32>
    %19 = vector.shape_cast %11 : vector<128x32xf32> to vector<8x16x32xf32>
    %20 = vector.broadcast %18 : vector<8x1x32xf32> to vector<8x16x32xf32>
    %21 = arith.mulf %20, %19 : vector<8x16x32xf32>
    %22 = vector.shape_cast %21 : vector<8x16x32xf32> to vector<128x32xf32>
    %23 = arith.truncf %22 : vector<128x32xf32> to vector<128x32xbf16>
    %c0_19 = arith.constant 0 : index
    %c0_20 = arith.constant 0 : index
    %24 = vector.load %arg13[%c0_19, %c0_20] : memref<32x4xbf16, #tpu.memory_space<vmem>>, vector<32x4xbf16>
    %cst_21 = arith.constant dense<0.000000e+00> : vector<128x4xf32>
    %25 = tpu.matmul %23, %24, %cst_21 {dimension_numbers = #tpu.dot_dimension_numbers<[1], [0], [0], [1], [0, 0, 1, 1], [], []>} : vector<128x32xbf16>, vector<32x4xbf16>, vector<128x4xf32> -> vector<128x4xf32>
    %26 = vector.shape_cast %25 : vector<128x4xf32> to vector<8x16x4xf32>
    %27 = tpu.transpose %26, [0, 2, 1] : vector<8x16x4xf32> -> vector<8x4x16xf32>
    %c0_22 = arith.constant 0 : index
    %c0_23 = arith.constant 0 : index
    %c0_24 = arith.constant 0 : index
    %28 = vector.load %arg4[%c0_22, %c0_23, %c0_24] : memref<8x4x16xbf16, #tpu.memory_space<vmem>>, vector<8x4x16xbf16>
    %29 = arith.extf %28 : vector<8x4x16xbf16> to vector<8x4x16xf32>
    %30 = arith.addf %27, %29 : vector<8x4x16xf32>
    %cst_25 = arith.constant dense<0xFF800000> : vector<8x4xf32>
    %31 = vector.multi_reduction <maximumf>, %30, %cst_25 [2] : vector<8x4x16xf32> to vector<8x4xf32>
    %32 = vector.shape_cast %31 : vector<8x4xf32> to vector<8x4x1xf32>
    %33 = vector.broadcast %32 : vector<8x4x1xf32> to vector<8x4x16xf32>
    %34 = arith.subf %30, %33 : vector<8x4x16xf32>
    %35 = math.exp %34 : vector<8x4x16xf32>
    %cst_26 = arith.constant dense<0.000000e+00> : vector<8x4xf32>
    %36 = vector.multi_reduction <add>, %35, %cst_26 [2] : vector<8x4x16xf32> to vector<8x4xf32>
    %37 = vector.shape_cast %36 : vector<8x4xf32> to vector<8x4x1xf32>
    %38 = tpu.reciprocal %37 {approx = true} : vector<8x4x1xf32> -> vector<8x4x1xf32>
    %39 = vector.broadcast %38 : vector<8x4x1xf32> to vector<8x4x16xf32>
    %40 = arith.mulf %35, %39 : vector<8x4x16xf32>
    %c0_27 = arith.constant 0 : index
    %c0_28 = arith.constant 0 : index
    %c0_29 = arith.constant 0 : index
    %41 = vector.load %arg16[%c0_27, %c0_28, %c0_29] : memref<8x4x16xf32, #tpu.memory_space<vmem>>, vector<8x4x16xf32>
    tpu.vector_store %arg16[%c0_27, %c0_28, %c0_29], %40 {strides = array<i32>} : memref<8x4x16xf32, #tpu.memory_space<vmem>>, vector<8x4x16xf32>,
    %42 = tpu.transpose %40, [0, 2, 1] : vector<8x4x16xf32> -> vector<8x16x4xf32>
    %43 = vector.shape_cast %42 : vector<8x16x4xf32> to vector<128x4xf32>
    %44 = arith.truncf %43 : vector<128x4xf32> to vector<128x4xbf16>
    %c0_30 = arith.constant 0 : index
    %c0_31 = arith.constant 0 : index
    %45 = vector.load %arg14[%c0_30, %c0_31] : memref<4x32xbf16, #tpu.memory_space<vmem>>, vector<4x32xbf16>
    %cst_32 = arith.constant dense<0.000000e+00> : vector<128x32xf32>
    %46 = tpu.matmul %44, %45, %cst_32 {dimension_numbers = #tpu.dot_dimension_numbers<[1], [0], [0], [1], [0, 0, 1, 1], [], []>} : vector<128x4xbf16>, vector<4x32xbf16>, vector<128x32xf32> -> vector<128x32xf32>
    %47 = arith.mulf %46, %17 : vector<128x32xf32>
    %48 = vector.shape_cast %47 : vector<128x32xf32> to vector<8x16x32xf32>
    %cst_33 = arith.constant dense<0.000000e+00> : vector<8x32xf32>
    %49 = vector.multi_reduction <add>, %48, %cst_33 [1] : vector<8x16x32xf32> to vector<8x32xf32>
    %50 = arith.truncf %49 : vector<8x32xf32> to vector<8x32xbf16>
    %c0_34 = arith.constant 0 : index
    %c0_35 = arith.constant 0 : index
    %51 = vector.load %arg11[%c0_34, %c0_35] : memref<32x32xbf16, #tpu.memory_space<vmem>>, vector<32x32xbf16>
    %cst_36 = arith.constant dense<0.000000e+00> : vector<8x32xf32>
    %52 = tpu.matmul %50, %51, %cst_36 {dimension_numbers = #tpu.dot_dimension_numbers<[1], [1], [0], [0], [0, 0, 1, 0], [], []>} : vector<8x32xbf16>, vector<32x32xbf16>, vector<8x32xf32> -> vector<8x32xf32>
    %c0_37 = arith.constant 0 : index
    %c0_38 = arith.constant 0 : index
    %53 = vector.load %arg12[%c0_37, %c0_38] : memref<1x32xf32, #tpu.memory_space<vmem>>, vector<1x32xf32>
    %54 = vector.broadcast %53 : vector<1x32xf32> to vector<8x32xf32>
    %55 = arith.addf %52, %54 : vector<8x32xf32>
    %c0_39 = arith.constant 0 : index
    %c0_40 = arith.constant 0 : index
    %56 = vector.load %arg15[%c0_39, %c0_40] : memref<8x32xf32, #tpu.memory_space<vmem>>, vector<8x32xf32>
    tpu.vector_store %arg15[%c0_39, %c0_40], %55 {strides = array<i32>} : memref<8x32xf32, #tpu.memory_space<vmem>>, vector<8x32xf32>,
    return
  }
  func.func @transform_0(%arg0: i32) -> (i32, i32) {
    %c0_i32 = arith.constant 0 : i32
    %c0_i32_0 = arith.constant 0 : i32
    return %arg0, %c0_i32 : i32, i32
  }
  func.func @transform_1(%arg0: i32) -> (i32, i32) {
    %c0_i32 = arith.constant 0 : i32
    %c0_i32_0 = arith.constant 0 : i32
    return %arg0, %c0_i32 : i32, i32
  }
  func.func @transform_2(%arg0: i32) -> (i32, i32) {
    %c0_i32 = arith.constant 0 : i32
    %c0_i32_0 = arith.constant 0 : i32
    return %arg0, %c0_i32 : i32, i32
  }
  func.func @transform_3(%arg0: i32) -> (i32, i32, i32) {
    %c0_i32 = arith.constant 0 : i32
    %c0_i32_0 = arith.constant 0 : i32
    %c0_i32_1 = arith.constant 0 : i32
    return %arg0, %c0_i32, %c0_i32_0 : i32, i32, i32
  }
  func.func @transform_4(%arg0: i32) -> (i32, i32) {
    %c0_i32 = arith.constant 0 : i32
    %c0_i32_0 = arith.constant 0 : i32
    %c0_i32_1 = arith.constant 0 : i32
    return %c0_i32, %c0_i32_0 : i32, i32
  }
  func.func @transform_5(%arg0: i32) -> (i32, i32) {
    %c0_i32 = arith.constant 0 : i32
    %c0_i32_0 = arith.constant 0 : i32
    %c0_i32_1 = arith.constant 0 : i32
    return %c0_i32, %c0_i32_0 : i32, i32
  }
  func.func @transform_6(%arg0: i32) -> (i32, i32) {
    %c0_i32 = arith.constant 0 : i32
    %c0_i32_0 = arith.constant 0 : i32
    %c0_i32_1 = arith.constant 0 : i32
    return %c0_i32, %c0_i32_0 : i32, i32
  }
  func.func @transform_7(%arg0: i32) -> (i32, i32) {
    %c0_i32 = arith.constant 0 : i32
    %c0_i32_0 = arith.constant 0 : i32
    %c0_i32_1 = arith.constant 0 : i32
    return %c0_i32, %c0_i32_0 : i32, i32
  }
  func.func @transform_8(%arg0: i32) -> (i32, i32) {
    %c0_i32 = arith.constant 0 : i32
    %c0_i32_0 = arith.constant 0 : i32
    %c0_i32_1 = arith.constant 0 : i32
    return %c0_i32, %c0_i32_0 : i32, i32
  }
  func.func @transform_9(%arg0: i32) -> (i32, i32) {
    %c0_i32 = arith.constant 0 : i32
    %c0_i32_0 = arith.constant 0 : i32
    %c0_i32_1 = arith.constant 0 : i32
    return %c0_i32, %c0_i32_0 : i32, i32
  }
  func.func @transform_10(%arg0: i32) -> (i32, i32) {
    %c0_i32 = arith.constant 0 : i32
    %c0_i32_0 = arith.constant 0 : i32
    %c0_i32_1 = arith.constant 0 : i32
    return %c0_i32, %c0_i32_0 : i32, i32
  }
  func.func @transform_11(%arg0: i32) -> (i32, i32) {
    %c0_i32 = arith.constant 0 : i32
    %c0_i32_0 = arith.constant 0 : i32
    %c0_i32_1 = arith.constant 0 : i32
    return %c0_i32, %c0_i32_0 : i32, i32
  }
  func.func @transform_12(%arg0: i32) -> (i32, i32) {
    %c0_i32 = arith.constant 0 : i32
    %c0_i32_0 = arith.constant 0 : i32
    %c0_i32_1 = arith.constant 0 : i32
    return %c0_i32, %c0_i32_0 : i32, i32
  }
  func.func @transform_13(%arg0: i32) -> (i32, i32) {
    %c0_i32 = arith.constant 0 : i32
    %c0_i32_0 = arith.constant 0 : i32
    %c0_i32_1 = arith.constant 0 : i32
    return %c0_i32, %c0_i32_0 : i32, i32
  }
  func.func @transform_14(%arg0: i32) -> (i32, i32) {
    %c0_i32 = arith.constant 0 : i32
    %c0_i32_0 = arith.constant 0 : i32
    return %arg0, %c0_i32 : i32, i32
  }
  func.func @transform_15(%arg0: i32) -> (i32, i32, i32) {
    %c0_i32 = arith.constant 0 : i32
    %c0_i32_0 = arith.constant 0 : i32
    %c0_i32_1 = arith.constant 0 : i32
    return %arg0, %c0_i32, %c0_i32_0 : i32, i32, i32
  }
}

</mosaic_0001>

<llo_original>
// kernel: tpu_custom_call.1
$region0: #{tpu_custom_call.1}
  #allocation0 [shape = 'u32[]', space=smem, size = 0x4, offset = 0x4, fixed_abs, tag = 'smem constant byte address 0x4 - core index']
  #allocation1 [shape = 'u32[144,128]{1,0:T(1,128)}', space=vmem, size = 0x12000, scoped, tag = 'internal scratch']
  %s0 = inlined_call_operand.vmem [shape: bf16[32,32], index: 0, kind: input, shape index: {}]
  %s1 = inlined_call_operand.vmem [shape: bf16[512,32], index: 1, kind: input, shape index: {}]
  %s2 = inlined_call_operand.vmem [shape: bf16[512,32], index: 2, kind: input, shape index: {}]
  %s3 = inlined_call_operand.vmem [shape: bf16[32,4,16], index: 3, kind: input, shape index: {}]
  %s4 = inlined_call_operand.vmem [shape: bf16[32,32], index: 4, kind: input, shape index: {}]
  %s5 = inlined_call_operand.vmem [shape: f32[1,32], index: 5, kind: input, shape index: {}]
  %s6 = inlined_call_operand.vmem [shape: bf16[32,32], index: 6, kind: input, shape index: {}]
  %s7 = inlined_call_operand.vmem [shape: f32[1,32], index: 7, kind: input, shape index: {}]
  %s8 = inlined_call_operand.vmem [shape: bf16[32,32], index: 8, kind: input, shape index: {}]
  %s9 = inlined_call_operand.vmem [shape: f32[1,32], index: 9, kind: input, shape index: {}]
  %s10 = inlined_call_operand.vmem [shape: bf16[32,32], index: 10, kind: input, shape index: {}]
  %s11 = inlined_call_operand.vmem [shape: f32[1,32], index: 11, kind: input, shape index: {}]
  %s12 = inlined_call_operand.vmem [shape: bf16[32,4], index: 12, kind: input, shape index: {}]
  %s13 = inlined_call_operand.vmem [shape: bf16[4,32], index: 13, kind: input, shape index: {}]
  %s14 = inlined_call_operand.hbm [shape: f32[32,32], index: 14, kind: output, shape index: {0}]
  %s15 = inlined_call_operand.vmem [shape: f32[32,4,16], index: 15, kind: output, shape index: {1}]
  %16 = xla_tuple %s14, %s15
  %s17 = sld [smem:[#allocation0]]
  $region97: #{tpu_custom_call.1} parent=0
    _
  %s19 = ssub.s32 1, %s17
  %s20 = scalar_select 0, %s19, %s17
  $region1: #{tpu_custom_call.1} parent=0
    #allocation2 [shape = 'u8[8192]{0}', space=vmem, size = 0x2000, scoped, tag = 'output window, operand 0']
    #allocation3 [shape = 's32[2]{0}', space=sflag, size = 0x8, scoped, tag = 'scoped memory for tpu_custom_call.1']
    %21 = vsyncpa [#allocation3], 0
    %s22 = scalar_lea.sflag [#allocation3], 1
    %23 = vsyncpa %s22, 0
    loop: start=0, step=1, limit=6
    $region2: #{tpu_custom_call.1} parent=1 // loop_pre_header
      _
    $region3: #{tpu_custom_call.1} parent=1 // loop_header
      %s25 = sphi 0, %s29
      %p26 = scmp.ge.s32.totalorder %s25, 6
      %s35 = sphi 0, %s37
      %s38 = sphi 0, %s35
      %s39 = sphi 0, %s38
      %s55 = sphi 0, %s39
      %s61 = sphi 0, %s63
      %s64 = sphi 0, %s61
      %s65 = sphi 0, %s64
      %s81 = sphi 0, %s65
      %s87 = sphi 0, %s89
      %s90 = sphi 0, %s87
      %s91 = sphi 0, %s90
      %s107 = sphi 0, %s91
      %s113 = sphi 0, %s115
      %s116 = sphi 0, %s113
      %s117 = sphi 0, %s116
      %s133 = sphi 0, %s117
      %s137 = sphi 0, %s137
      %s139 = sphi 0, %s137
      %s140 = sphi 0, %s139
      %s154 = sphi 0, %s140
      %s158 = sphi 0, %s158
      %s160 = sphi 0, %s158
      %s161 = sphi 0, %s160
      %s175 = sphi 0, %s161
      %s179 = sphi 0, %s179
      %s181 = sphi 0, %s179
      %s182 = sphi 0, %s181
      %s196 = sphi 0, %s182
      %s200 = sphi 0, %s200
      %s202 = sphi 0, %s200
      %s203 = sphi 0, %s202
      %s217 = sphi 0, %s203
      %s221 = sphi 0, %s221
      %s223 = sphi 0, %s221
      %s224 = sphi 0, %s223
      %s238 = sphi 0, %s224
      %s242 = sphi 0, %s242
      %s244 = sphi 0, %s242
      %s245 = sphi 0, %s244
      %s259 = sphi 0, %s245
      %s263 = sphi 0, %s263
      %s265 = sphi 0, %s263
      %s266 = sphi 0, %s265
      %s280 = sphi 0, %s266
      %s284 = sphi 0, %s284
      %s286 = sphi 0, %s284
      %s287 = sphi 0, %s286
      %s301 = sphi 0, %s287
      %s305 = sphi 0, %s305
      %s307 = sphi 0, %s305
      %s308 = sphi 0, %s307
      %s322 = sphi 0, %s308
      %s326 = sphi 0, %s326
      %s328 = sphi 0, %s326
      %s329 = sphi 0, %s328
      %s343 = sphi 0, %s329
      %s349 = sphi 0, %s351
      %s352 = sphi 0, %s349
      %s353 = sphi 0, %s352
      %s369 = sphi 0, %s353
      %s375 = sphi 0, %s377
      %s378 = sphi 0, %s375
      %s379 = sphi 0, %s378
      %s395 = sphi 0, %s379
    $region4: #{tpu_custom_call.1} parent=1 // loop_header_branch
      %28 = sbr.rel (%p26) target = $region8
    $region5: #{tpu_custom_call.1} parent=1 // loop_body
      %s30 = ssub.s32 %s25, 1
      %s31 = ssub.s32 %s25, 2
      %s32 = sadd.s32 %s25, 1
      %s33 = ssub.s32 %s25, %s32
      %p34 = scmp.eq.s32.totalorder %s33, 0
      %s36 = sadd.s32 %s35, 1
      %s37 = scalar_select %p34, %s35, %s36
      %p40 = pneg %p34
      %p41 = scmp.eq.s32.totalorder %s25, 3
      %p42 = por %p40, %p41
      %p43 = scmp.ne.s32.totalorder %s35, %s38
      %p44 = scmp.eq.s32.totalorder %s25, 0
      %p45 = por %p43, %p44
      %p46 = scmp.ne.s32.totalorder %s35, %s38
      %p47 = scmp.eq.s32.totalorder %s30, 3
      %p48 = por %p46, %p47
      %p49 = scmp.ne.s32.totalorder %s38, %s39
      %p50 = scmp.eq.s32.totalorder %s30, 0
      %p51 = por %p49, %p50
      %p52 = scmp.ne.s32.totalorder %s38, %s39
      %p53 = scmp.eq.s32.totalorder %s31, 3
      %p54 = por %p52, %p53
      %p56 = scmp.ne.s32.totalorder %s39, %s55
      %p57 = scmp.eq.s32.totalorder %s31, 0
      %p58 = por %p56, %p57
      %s59 = ssub.s32 %s25, %s32
      %p60 = scmp.eq.s32.totalorder %s59, 0
      %s62 = sadd.s32 %s61, 1
      %s63 = scalar_select %p60, %s61, %s62
      %p66 = pneg %p60
      %p67 = scmp.eq.s32.totalorder %s25, 3
      %p68 = por %p66, %p67
      %p69 = scmp.ne.s32.totalorder %s61, %s64
      %p70 = scmp.eq.s32.totalorder %s25, 0
      %p71 = por %p69, %p70
      %p72 = scmp.ne.s32.totalorder %s61, %s64
      %p73 = scmp.eq.s32.totalorder %s30, 3
      %p74 = por %p72, %p73
      %p75 = scmp.ne.s32.totalorder %s64, %s65
      %p76 = scmp.eq.s32.totalorder %s30, 0
      %p77 = por %p75, %p76
      %p78 = scmp.ne.s32.totalorder %s64, %s65
      %p79 = scmp.eq.s32.totalorder %s31, 3
      %p80 = por %p78, %p79
      %p82 = scmp.ne.s32.totalorder %s65, %s81
      %p83 = scmp.eq.s32.totalorder %s31, 0
      %p84 = por %p82, %p83
      %s85 = ssub.s32 %s25, %s32
      %p86 = scmp.eq.s32.totalorder %s85, 0
      %s88 = sadd.s32 %s87, 1
      %s89 = scalar_select %p86, %s87, %s88
      %p92 = pneg %p86
      %p93 = scmp.eq.s32.totalorder %s25, 3
      %p94 = por %p92, %p93
      %p95 = scmp.ne.s32.totalorder %s87, %s90
      %p96 = scmp.eq.s32.totalorder %s25, 0
      %p97 = por %p95, %p96
      %p98 = scmp.ne.s32.totalorder %s87, %s90
      %p99 = scmp.eq.s32.totalorder %s30, 3
      %p100 = por %p98, %p99
      %p101 = scmp.ne.s32.totalorder %s90, %s91
      %p102 = scmp.eq.s32.totalorder %s30, 0
      %p103 = por %p101, %p102
      %p104 = scmp.ne.s32.totalorder %s90, %s91
      %p105 = scmp.eq.s32.totalorder %s31, 3
      %p106 = por %p104, %p105
      %p108 = scmp.ne.s32.totalorder %s91, %s107
      %p109 = scmp.eq.s32.totalorder %s31, 0
      %p110 = por %p108, %p109
      %s111 = ssub.s32 %s25, %s32
      %p112 = scmp.eq.s32.totalorder %s111, 0
      %s114 = sadd.s32 %s113, 1
      %s115 = scalar_select %p112, %s113, %s114
      %p118 = pneg %p112
      %p119 = scmp.eq.s32.totalorder %s25, 3
      %p120 = por %p118, %p119
      %p121 = scmp.ne.s32.totalorder %s113, %s116
      %p122 = scmp.eq.s32.totalorder %s25, 0
      %p123 = por %p121, %p122
      %p124 = scmp.ne.s32.totalorder %s113, %s116
      %p125 = scmp.eq.s32.totalorder %s30, 3
      %p126 = por %p124, %p125
      %p127 = scmp.ne.s32.totalorder %s116, %s117
      %p128 = scmp.eq.s32.totalorder %s30, 0
      %p129 = por %p127, %p128
      %p130 = scmp.ne.s32.totalorder %s116, %s117
      %p131 = scmp.eq.s32.totalorder %s31, 3
      %p132 = por %p130, %p131
      %p134 = scmp.ne.s32.totalorder %s117, %s133
      %p135 = scmp.eq.s32.totalorder %s31, 0
      %p136 = por %p134, %p135
      %s138 = sadd.s32 %s137, 1
      %p141 = scmp.eq.s32.totalorder %s25, 3
      %p142 = scmp.ne.s32.totalorder %s137, %s139
      %p143 = scmp.eq.s32.totalorder %s25, 0
      %p144 = por %p142, %p143
      %p145 = scmp.ne.s32.totalorder %s137, %s139
      %p146 = scmp.eq.s32.totalorder %s30, 3
      %p147 = por %p145, %p146
      %p148 = scmp.ne.s32.totalorder %s139, %s140
      %p149 = scmp.eq.s32.totalorder %s30, 0
      %p150 = por %p148, %p149
      %p151 = scmp.ne.s32.totalorder %s139, %s140
      %p152 = scmp.eq.s32.totalorder %s31, 3
      %p153 = por %p151, %p152
      %p155 = scmp.ne.s32.totalorder %s140, %s154
      %p156 = scmp.eq.s32.totalorder %s31, 0
      %p157 = por %p155, %p156
      %s159 = sadd.s32 %s158, 1
      %p162 = scmp.eq.s32.totalorder %s25, 3
      %p163 = scmp.ne.s32.totalorder %s158, %s160
      %p164 = scmp.eq.s32.totalorder %s25, 0
      %p165 = por %p163, %p164
      %p166 = scmp.ne.s32.totalorder %s158, %s160
      %p167 = scmp.eq.s32.totalorder %s30, 3
      %p168 = por %p166, %p167
      %p169 = scmp.ne.s32.totalorder %s160, %s161
      %p170 = scmp.eq.s32.totalorder %s30, 0
      %p171 = por %p169, %p170
      %p172 = scmp.ne.s32.totalorder %s160, %s161
      %p173 = scmp.eq.s32.totalorder %s31, 3
      %p174 = por %p172, %p173
      %p176 = scmp.ne.s32.totalorder %s161, %s175
      %p177 = scmp.eq.s32.totalorder %s31, 0
      %p178 = por %p176, %p177
      %s180 = sadd.s32 %s179, 1
      %p183 = scmp.eq.s32.totalorder %s25, 3
      %p184 = scmp.ne.s32.totalorder %s179, %s181
      %p185 = scmp.eq.s32.totalorder %s25, 0
      %p186 = por %p184, %p185
      %p187 = scmp.ne.s32.totalorder %s179, %s181
      %p188 = scmp.eq.s32.totalorder %s30, 3
      %p189 = por %p187, %p188
      %p190 = scmp.ne.s32.totalorder %s181, %s182
      %p191 = scmp.eq.s32.totalorder %s30, 0
      %p192 = por %p190, %p191
      %p193 = scmp.ne.s32.totalorder %s181, %s182
      %p194 = scmp.eq.s32.totalorder %s31, 3
      %p195 = por %p193, %p194
      %p197 = scmp.ne.s32.totalorder %s182, %s196
      %p198 = scmp.eq.s32.totalorder %s31, 0
      %p199 = por %p197, %p198
      %s201 = sadd.s32 %s200, 1
      %p204 = scmp.eq.s32.totalorder %s25, 3
      %p205 = scmp.ne.s32.totalorder %s200, %s202
      %p206 = scmp.eq.s32.totalorder %s25, 0
      %p207 = por %p205, %p206
      %p208 = scmp.ne.s32.totalorder %s200, %s202
      %p209 = scmp.eq.s32.totalorder %s30, 3
      %p210 = por %p208, %p209
      %p211 = scmp.ne.s32.totalorder %s202, %s203
      %p212 = scmp.eq.s32.totalorder %s30, 0
      %p213 = por %p211, %p212
      %p214 = scmp.ne.s32.totalorder %s202, %s203
      %p215 = scmp.eq.s32.totalorder %s31, 3
      %p216 = por %p214, %p215
      %p218 = scmp.ne.s32.totalorder %s203, %s217
      %p219 = scmp.eq.s32.totalorder %s31, 0
      %p220 = por %p218, %p219
      %s222 = sadd.s32 %s221, 1
      %p225 = scmp.eq.s32.totalorder %s25, 3
      %p226 = scmp.ne.s32.totalorder %s221, %s223
      %p227 = scmp.eq.s32.totalorder %s25, 0
      %p228 = por %p226, %p227
      %p229 = scmp.ne.s32.totalorder %s221, %s223
      %p230 = scmp.eq.s32.totalorder %s30, 3
      %p231 = por %p229, %p230
      %p232 = scmp.ne.s32.totalorder %s223, %s224
      %p233 = scmp.eq.s32.totalorder %s30, 0
      %p234 = por %p232, %p233
      %p235 = scmp.ne.s32.totalorder %s223, %s224
      %p236 = scmp.eq.s32.totalorder %s31, 3
      %p237 = por %p235, %p236
      %p239 = scmp.ne.s32.totalorder %s224, %s238
      %p240 = scmp.eq.s32.totalorder %s31, 0
      %p241 = por %p239, %p240
      %s243 = sadd.s32 %s242, 1
      %p246 = scmp.eq.s32.totalorder %s25, 3
      %p247 = scmp.ne.s32.totalorder %s242, %s244
      %p248 = scmp.eq.s32.totalorder %s25, 0
      %p249 = por %p247, %p248
      %p250 = scmp.ne.s32.totalorder %s242, %s244
      %p251 = scmp.eq.s32.totalorder %s30, 3
      %p252 = por %p250, %p251
      %p253 = scmp.ne.s32.totalorder %s244, %s245
      %p254 = scmp.eq.s32.totalorder %s30, 0
      %p255 = por %p253, %p254
      %p256 = scmp.ne.s32.totalorder %s244, %s245
      %p257 = scmp.eq.s32.totalorder %s31, 3
      %p258 = por %p256, %p257
      %p260 = scmp.ne.s32.totalorder %s245, %s259
      %p261 = scmp.eq.s32.totalorder %s31, 0
      %p262 = por %p260, %p261
      %s264 = sadd.s32 %s263, 1
      %p267 = scmp.eq.s32.totalorder %s25, 3
      %p268 = scmp.ne.s32.totalorder %s263, %s265
      %p269 = scmp.eq.s32.totalorder %s25, 0
      %p270 = por %p268, %p269
      %p271 = scmp.ne.s32.totalorder %s263, %s265
      %p272 = scmp.eq.s32.totalorder %s30, 3
      %p273 = por %p271, %p272
      %p274 = scmp.ne.s32.totalorder %s265, %s266
      %p275 = scmp.eq.s32.totalorder %s30, 0
      %p276 = por %p274, %p275
      %p277 = scmp.ne.s32.totalorder %s265, %s266
      %p278 = scmp.eq.s32.totalorder %s31, 3
      %p279 = por %p277, %p278
      %p281 = scmp.ne.s32.totalorder %s266, %s280
      %p282 = scmp.eq.s32.totalorder %s31, 0
      %p283 = por %p281, %p282
      %s285 = sadd.s32 %s284, 1
      %p288 = scmp.eq.s32.totalorder %s25, 3
      %p289 = scmp.ne.s32.totalorder %s284, %s286
      %p290 = scmp.eq.s32.totalorder %s25, 0
      %p291 = por %p289, %p290
      %p292 = scmp.ne.s32.totalorder %s284, %s286
      %p293 = scmp.eq.s32.totalorder %s30, 3
      %p294 = por %p292, %p293
      %p295 = scmp.ne.s32.totalorder %s286, %s287
      %p296 = scmp.eq.s32.totalorder %s30, 0
      %p297 = por %p295, %p296
      %p298 = scmp.ne.s32.totalorder %s286, %s287
      %p299 = scmp.eq.s32.totalorder %s31, 3
      %p300 = por %p298, %p299
      %p302 = scmp.ne.s32.totalorder %s287, %s301
      %p303 = scmp.eq.s32.totalorder %s31, 0
      %p304 = por %p302, %p303
      %s306 = sadd.s32 %s305, 1
      %p309 = scmp.eq.s32.totalorder %s25, 3
      %p310 = scmp.ne.s32.totalorder %s305, %s307
      %p311 = scmp.eq.s32.totalorder %s25, 0
      %p312 = por %p310, %p311
      %p313 = scmp.ne.s32.totalorder %s305, %s307
      %p314 = scmp.eq.s32.totalorder %s30, 3
      %p315 = por %p313, %p314
      %p316 = scmp.ne.s32.totalorder %s307, %s308
      %p317 = scmp.eq.s32.totalorder %s30, 0
      %p318 = por %p316, %p317
      %p319 = scmp.ne.s32.totalorder %s307, %s308
      %p320 = scmp.eq.s32.totalorder %s31, 3
      %p321 = por %p319, %p320
      %p323 = scmp.ne.s32.totalorder %s308, %s322
      %p324 = scmp.eq.s32.totalorder %s31, 0
      %p325 = por %p323, %p324
      %s327 = sadd.s32 %s326, 1
      %p330 = scmp.eq.s32.totalorder %s25, 3
      %p331 = scmp.ne.s32.totalorder %s326, %s328
      %p332 = scmp.eq.s32.totalorder %s25, 0
      %p333 = por %p331, %p332
      %p334 = scmp.ne.s32.totalorder %s326, %s328
      %p335 = scmp.eq.s32.totalorder %s30, 3
      %p336 = por %p334, %p335
      %p337 = scmp.ne.s32.totalorder %s328, %s329
      %p338 = scmp.eq.s32.totalorder %s30, 0
      %p339 = por %p337, %p338
      %p340 = scmp.ne.s32.totalorder %s328, %s329
      %p341 = scmp.eq.s32.totalorder %s31, 3
      %p342 = por %p340, %p341
      %p344 = scmp.ne.s32.totalorder %s329, %s343
      %p345 = scmp.eq.s32.totalorder %s31, 0
      %p346 = por %p344, %p345
      %s347 = ssub.s32 %s25, %s32
      %p348 = scmp.eq.s32.totalorder %s347, 0
      %s350 = sadd.s32 %s349, 1
      %s351 = scalar_select %p348, %s349, %s350
      %p354 = pneg %p348
      %p355 = scmp.eq.s32.totalorder %s25, 3
      %p356 = por %p354, %p355
      %p357 = scmp.ne.s32.totalorder %s349, %s352
      %p358 = scmp.eq.s32.totalorder %s25, 0
      %p359 = por %p357, %p358
      %p360 = scmp.ne.s32.totalorder %s349, %s352
      %p361 = scmp.eq.s32.totalorder %s30, 3
      %p362 = por %p360, %p361
      %p363 = scmp.ne.s32.totalorder %s352, %s353
      %p364 = scmp.eq.s32.totalorder %s30, 0
      %p365 = por %p363, %p364
      %p366 = scmp.ne.s32.totalorder %s352, %s353
      %p367 = scmp.eq.s32.totalorder %s31, 3
      %p368 = por %p366, %p367
      %p370 = scmp.ne.s32.totalorder %s353, %s369
      %p371 = scmp.eq.s32.totalorder %s31, 0
      %p372 = por %p370, %p371
      %s373 = ssub.s32 %s25, %s32
      %p374 = scmp.eq.s32.totalorder %s373, 0
      %s376 = sadd.s32 %s375, 1
      %s377 = scalar_select %p374, %s375, %s376
      %p380 = pneg %p374
      %p381 = scmp.eq.s32.totalorder %s25, 3
      %p382 = por %p380, %p381
      %p383 = scmp.ne.s32.totalorder %s375, %s378
      %p384 = scmp.eq.s32.totalorder %s25, 0
      %p385 = por %p383, %p384
      %p386 = scmp.ne.s32.totalorder %s375, %s378
      %p387 = scmp.eq.s32.totalorder %s30, 3
      %p388 = por %p386, %p387
      %p389 = scmp.ne.s32.totalorder %s378, %s379
      %p390 = scmp.eq.s32.totalorder %s30, 0
      %p391 = por %p389, %p390
      %p392 = scmp.ne.s32.totalorder %s378, %s379
      %p393 = scmp.eq.s32.totalorder %s31, 3
      %p394 = por %p392, %p393
      %p396 = scmp.ne.s32.totalorder %s379, %s395
      %p397 = scmp.eq.s32.totalorder %s31, 0
      %p398 = por %p396, %p397
      %p399 = scmp.le.s32.totalorder 1, %s25
      %p400 = scmp.lt.s32.totalorder %s25, 5
      %p401 = pnand %p399, %p400
      %p402 = pneg %p401
      // Predicated region
      $region9: #{tpu_custom_call.1} parent=5 // pred_check
        _
      $region10: #{tpu_custom_call.1} parent=5 // pred_check_branch
        %404 = sbr.rel (%p401) target = $region12
      $region11: #{tpu_custom_call.1} parent=5 // pred_region
        %s405 = ssub.s32 %s25, 1
        // Predicated region
        $region13: #{tpu_custom_call.1} parent=11 // pred_check
          %p406 = pneg %p150
        $region14: #{tpu_custom_call.1} parent=11 // pred_check_branch
          %408 = sbr.rel (%p406) target = $region16
        $region15: #{tpu_custom_call.1} parent=11 // pred_region
          _
        $region16: #{tpu_custom_call.1} parent=11 // pred_fallthru
          _
        // Predicated region
        $region17: #{tpu_custom_call.1} parent=11 // pred_check
          %p409 = pneg %p171
        $region18: #{tpu_custom_call.1} parent=11 // pred_check_branch
          %411 = sbr.rel (%p409) target = $region20
        $region19: #{tpu_custom_call.1} parent=11 // pred_region
          _
        $region20: #{tpu_custom_call.1} parent=11 // pred_fallthru
          _
        // Predicated region
        $region21: #{tpu_custom_call.1} parent=11 // pred_check
          %p412 = pneg %p192
        $region22: #{tpu_custom_call.1} parent=11 // pred_check_branch
          %414 = sbr.rel (%p412) target = $region24
        $region23: #{tpu_custom_call.1} parent=11 // pred_region
          _
        $region24: #{tpu_custom_call.1} parent=11 // pred_fallthru
          _
        // Predicated region
        $region25: #{tpu_custom_call.1} parent=11 // pred_check
          %p415 = pneg %p213
        $region26: #{tpu_custom_call.1} parent=11 // pred_check_branch
          %417 = sbr.rel (%p415) target = $region28
        $region27: #{tpu_custom_call.1} parent=11 // pred_region
          _
        $region28: #{tpu_custom_call.1} parent=11 // pred_fallthru
          _
        // Predicated region
        $region29: #{tpu_custom_call.1} parent=11 // pred_check
          %p418 = pneg %p234
        $region30: #{tpu_custom_call.1} parent=11 // pred_check_branch
          %420 = sbr.rel (%p418) target = $region32
        $region31: #{tpu_custom_call.1} parent=11 // pred_region
          _
        $region32: #{tpu_custom_call.1} parent=11 // pred_fallthru
          _
        // Predicated region
        $region33: #{tpu_custom_call.1} parent=11 // pred_check
          %p421 = pneg %p255
        $region34: #{tpu_custom_call.1} parent=11 // pred_check_branch
          %423 = sbr.rel (%p421) target = $region36
        $region35: #{tpu_custom_call.1} parent=11 // pred_region
          _
        $region36: #{tpu_custom_call.1} parent=11 // pred_fallthru
          _
        // Predicated region
        $region37: #{tpu_custom_call.1} parent=11 // pred_check
          %p424 = pneg %p276
        $region38: #{tpu_custom_call.1} parent=11 // pred_check_branch
          %426 = sbr.rel (%p424) target = $region40
        $region39: #{tpu_custom_call.1} parent=11 // pred_region
          _
        $region40: #{tpu_custom_call.1} parent=11 // pred_fallthru
          _
        // Predicated region
        $region41: #{tpu_custom_call.1} parent=11 // pred_check
          %p427 = pneg %p297
        $region42: #{tpu_custom_call.1} parent=11 // pred_check_branch
          %429 = sbr.rel (%p427) target = $region44
        $region43: #{tpu_custom_call.1} parent=11 // pred_region
          _
        $region44: #{tpu_custom_call.1} parent=11 // pred_fallthru
          _
        // Predicated region
        $region45: #{tpu_custom_call.1} parent=11 // pred_check
          %p430 = pneg %p318
        $region46: #{tpu_custom_call.1} parent=11 // pred_check_branch
          %432 = sbr.rel (%p430) target = $region48
        $region47: #{tpu_custom_call.1} parent=11 // pred_region
          _
        $region48: #{tpu_custom_call.1} parent=11 // pred_fallthru
          _
        // Predicated region
        $region49: #{tpu_custom_call.1} parent=11 // pred_check
          %p433 = pneg %p339
        $region50: #{tpu_custom_call.1} parent=11 // pred_check_branch
          %435 = sbr.rel (%p433) target = $region52
        $region51: #{tpu_custom_call.1} parent=11 // pred_region
          _
        $region52: #{tpu_custom_call.1} parent=11 // pred_fallthru
          _
      $region12: #{tpu_custom_call.1} parent=5 // pred_fallthru
        _
      %p436 = scmp.lt.s32.totalorder %s25, 4
      // Predicated region
      $region53: #{tpu_custom_call.1} parent=5 // pred_check
        %p437 = pneg %p436
      $region54: #{tpu_custom_call.1} parent=5 // pred_check_branch
        %439 = sbr.rel (%p437) target = $region56
      $region55: #{tpu_custom_call.1} parent=5 // pred_region
        // Predicated region
        $region57: #{tpu_custom_call.1} parent=55 // pred_check
          %p440 = pneg %p45
        $region58: #{tpu_custom_call.1} parent=55 // pred_check_branch
          %442 = sbr.rel (%p440) target = $region60
        $region59: #{tpu_custom_call.1} parent=55 // pred_region
          %p443 = scmp.lt.s32.totalorder %s25, 3
          %s444 = scalar_select %p443, %s25, 3
          %s445 = smul.addr %s444, 4
          %s446 = scalar_lea.vmem %s0, %s445
        $region60: #{tpu_custom_call.1} parent=55 // pred_fallthru
          _
        // Predicated region
        $region61: #{tpu_custom_call.1} parent=55 // pred_check
          %p447 = pneg %p71
        $region62: #{tpu_custom_call.1} parent=55 // pred_check_branch
          %449 = sbr.rel (%p447) target = $region64
        $region63: #{tpu_custom_call.1} parent=55 // pred_region
          %s450 = smul.u32 16, %s25
          %p451 = scmp.lt.s32.totalorder %s450, 63
          %s452 = scalar_select %p451, %s450, 63
          %s453 = smul.addr %s452, 4
          %s454 = scalar_lea.vmem %s1, %s453
          %s455 = smul.u32 16, %s25
        $region64: #{tpu_custom_call.1} parent=55 // pred_fallthru
          _
        // Predicated region
        $region65: #{tpu_custom_call.1} parent=55 // pred_check
          %p456 = pneg %p97
        $region66: #{tpu_custom_call.1} parent=55 // pred_check_branch
          %458 = sbr.rel (%p456) target = $region68
        $region67: #{tpu_custom_call.1} parent=55 // pred_region
          %s459 = smul.u32 16, %s25
          %p460 = scmp.lt.s32.totalorder %s459, 63
          %s461 = scalar_select %p460, %s459, 63
          %s462 = smul.addr %s461, 4
          %s463 = scalar_lea.vmem %s2, %s462
          %s464 = smul.u32 16, %s25
        $region68: #{tpu_custom_call.1} parent=55 // pred_fallthru
          _
        // Predicated region
        $region69: #{tpu_custom_call.1} parent=55 // pred_check
          %p465 = pneg %p123
        $region70: #{tpu_custom_call.1} parent=55 // pred_check_branch
          %467 = sbr.rel (%p465) target = $region72
        $region71: #{tpu_custom_call.1} parent=55 // pred_region
          %s468 = smul.u32 8, %s25
          %p469 = scmp.lt.s32.totalorder %s468, 31
          %s470 = scalar_select %p469, %s468, 31
          %s471 = smul.addr %s470, 2
          %s472 = scalar_lea.vmem %s3, %s471
          %s473 = smul.u32 8, %s25
        $region72: #{tpu_custom_call.1} parent=55 // pred_fallthru
          _
      $region56: #{tpu_custom_call.1} parent=5 // pred_fallthru
        _
      %p474 = scmp.le.s32.totalorder 1, %s25
      %p475 = scmp.lt.s32.totalorder %s25, 5
      %p476 = pnand %p474, %p475
      %p477 = pneg %p476
      // Predicated region
      $region73: #{tpu_custom_call.1} parent=5 // pred_check
        _
      $region74: #{tpu_custom_call.1} parent=5 // pred_check_branch
        %479 = sbr.rel (%p476) target = $region76
      $region75: #{tpu_custom_call.1} parent=5 // pred_region
        %s480 = ssub.s32 %s25, 1
        %p481 = scmp.lt.s32.totalorder %s30, 3
        %s482 = scalar_select %p481, %s30, 3
        %s483 = smul.addr %s482, 4
        %s484 = scalar_lea.vmem %s0, %s483
        %p485 = pneg %p51
        %p486 = pneg %p48
        %s487 = smul.u32 16, %s30
        %p488 = scmp.lt.s32.totalorder %s487, 63
        %s489 = scalar_select %p488, %s487, 63
        %s490 = smul.addr %s489, 4
        %s491 = scalar_lea.vmem %s1, %s490
        %p492 = pneg %p77
        %p493 = pneg %p74
        %s494 = smul.u32 16, %s30
        %p495 = scmp.lt.s32.totalorder %s494, 63
        %s496 = scalar_select %p495, %s494, 63
        %s497 = smul.addr %s496, 4
        %s498 = scalar_lea.vmem %s2, %s497
        %p499 = pneg %p103
        %p500 = pneg %p100
        %s501 = smul.u32 8, %s30
        %p502 = scmp.lt.s32.totalorder %s501, 31
        %s503 = scalar_select %p502, %s501, 31
        %s504 = smul.addr %s503, 2
        %s505 = scalar_lea.vmem %s3, %s504
        %p506 = pneg %p129
        %p507 = pneg %p126
        %p508 = pneg %p150
        %p509 = pneg %p147
        %p510 = pneg %p171
        %p511 = pneg %p168
        %p512 = pneg %p192
        %p513 = pneg %p189
        %p514 = pneg %p213
        %p515 = pneg %p210
        %p516 = pneg %p234
        %p517 = pneg %p231
        %p518 = pneg %p255
        %p519 = pneg %p252
        %p520 = pneg %p276
        %p521 = pneg %p273
        %p522 = pneg %p297
        %p523 = pneg %p294
        %p524 = pneg %p318
        %p525 = pneg %p315
        %p526 = pneg %p339
        %p527 = pneg %p336
        %p528 = pneg %p365
        %p529 = pneg %p362
        %s530 = sand.u32 %s352, 1
        %s531 = scalar_lea.sflag [#allocation3], %s530
        %s532 = sand.u32 %s352, 1
        %s533 = smul.addr %s532, 8
        %s534 = scalar_lea.vmem [#allocation2], %s533
        %p535 = pneg %p391
        %p536 = pneg %p388
        %s537 = smul.u32 8, %s30
        %p538 = scmp.lt.s32.totalorder %s537, 31
        %s539 = scalar_select %p538, %s537, 31
        %s540 = smul.addr %s539, 4
        %s541 = scalar_lea.vmem %s15, %s540
        %p542 = scmp.lt.s32.totalorder %s30, 3
        %s543 = scalar_select %p542, %s30, 3
        %s544 = smul.addr %s543, 4
        %s545 = scalar_lea.vmem %s0, %s544
        %s546 = smul.u32 16, %s30
        %p547 = scmp.lt.s32.totalorder %s546, 63
        %s548 = scalar_select %p547, %s546, 63
        %s549 = smul.addr %s548, 4
        %s550 = scalar_lea.vmem %s1, %s549
        %s551 = smul.u32 16, %s30
        %s552 = smul.u32 16, %s30
        %p553 = scmp.lt.s32.totalorder %s552, 63
        %s554 = scalar_select %p553, %s552, 63
        %s555 = smul.addr %s554, 4
        %s556 = scalar_lea.vmem %s2, %s555
        %s557 = smul.u32 16, %s30
        %s558 = smul.u32 8, %s30
        %p559 = scmp.lt.s32.totalorder %s558, 31
        %s560 = scalar_select %p559, %s558, 31
        %s561 = smul.addr %s560, 2
        %s562 = scalar_lea.vmem %s3, %s561
        %s563 = smul.u32 8, %s30
        %s564 = smul.u32 8, %s30
        %p565 = scmp.lt.s32.totalorder %s564, 31
        %s566 = scalar_select %p565, %s564, 31
        %s567 = smul.addr %s566, 4
        %s568 = scalar_lea.vmem %s15, %s567
        %s569 = smul.u32 8, %s30
        %v571 = vld [vmem:[%s545] sm:$0xf]
        %v572 = vld [vmem:[%s4] sm:$0xf]
        %v573 = vld [vmem:[%s4 + $0x4] sm:$0xf]
        %v574 = vld [vmem:[%s4 + $0x8] sm:$0xf]
        %v575 = vld [vmem:[%s4 + $0xc] sm:$0xf]
        %v576 = vld [vmem:[%s5] sm:$0x1]
        %v578 = vlaneseq
        %v579 = vshrl.u32 %v578, 7
        %v580 = vsub.s32 0, %v579
        %v581 = vrot.slane %v576, %v580
        %v587 = vunpack.c.l.b16 %v572
        %v588 = vunpack.c.l.b16 %v573
        %v589 = vunpack.c.l.b16 %v574
        %v590 = vunpack.c.l.b16 %v575
        %v591 = vpack.c.b16 %v588, %v587
        %v592 = vpack.c.b16 %v590, %v589
        %vm593 = vcmask 261120
        %v595 = vsel %vm593, %v571, 0
        %v598 = vsel %vm593, %v591, 0
        %v601 = vsel %vm593, %v592, 0
        %603 = vmatprep.subr.bf16.mxu0 0
        %604 = vmatpush1.bf16.xpose.msra.mxu0 %v598
        %605 = vmatprep.subr.bf16.mxu0 0
        %606 = vmatpush1.bf16.xpose.msra.mxu0 %v601
        %607 = vmatprep.subr.bf16.mxu0 0
        %608 = vmatpush1.bf16.xpose.msra.mxu0 0
        %609 = vmatprep.subr.bf16.mxu0 0
        %610 = vmatpush1.bf16.xpose.msra.mxu0 0
        %611 = vmatprep.subr.bf16.mxu0 0
        %612 = vmatpush1.bf16.xpose.msra.mxu0 0
        %613 = vmatprep.subr.bf16.mxu0 0
        %614 = vmatpush1.bf16.xpose.msra.mxu0 0
        %615 = vmatprep.subr.bf16.mxu0 0
        %616 = vmatpush1.bf16.xpose.msra.mxu0 0
        %617 = vmatprep.subr.bf16.mxu0 0
        %618 = vmatpush1.bf16.xpose.msra.mxu0 0
        %619 = vmatprep.subr.bf16.mxu0 0
        %620 = vmatpush1.bf16.xpose.msra.mxu0 0
        %621 = vmatprep.subr.bf16.mxu0 0
        %622 = vmatpush1.bf16.xpose.msra.mxu0 0
        %623 = vmatprep.subr.bf16.mxu0 0
        %624 = vmatpush1.bf16.xpose.msra.mxu0 0
        %625 = vmatprep.subr.bf16.mxu0 0
        %626 = vmatpush1.bf16.xpose.msra.mxu0 0
        %627 = vmatprep.subr.bf16.mxu0 0
        %628 = vmatpush1.bf16.xpose.msra.mxu0 0
        %629 = vmatprep.subr.bf16.mxu0 0
        %630 = vmatpush1.bf16.xpose.msra.mxu0 0
        %631 = vmatprep.subr.bf16.mxu0 0
        %632 = vmatpush1.bf16.xpose.msra.mxu0 0
        %633 = vmatprep.subr.bf16.mxu0 0
        %634 = vmatpush1.bf16.xpose.msra.mxu0 0
        %635 = vmatprep.mubr.bf16.mxu0 0
        %636 = vmatmul.mubr.bf16.gmra.mrb[0].mxu0 %v595
        %v637 = vpop.f32.mrb[0].mxu0
        %v638 = vadd.f32 %v581, %v637
        %v639 = vpop.f32.mrb[0].mxu0
        %v640 = vpop.f32.mrb[0].mxu0
        %v641 = vpop.f32.mrb[0].mxu0
        %642 = vdwg.mxu0
        %v643 = vld [vmem:[%s550] sm:$0xf]
        %v644 = vld [vmem:[%s550 + $0x4] sm:$0xf]
        %v645 = vld [vmem:[%s550 + $0x8] sm:$0xf]
        %v646 = vld [vmem:[%s550 + $0xc] sm:$0xf]
        %v647 = vld [vmem:[%s550 + $0x10] sm:$0xf]
        %v648 = vld [vmem:[%s550 + $0x14] sm:$0xf]
        %v649 = vld [vmem:[%s550 + $0x18] sm:$0xf]
        %v650 = vld [vmem:[%s550 + $0x1c] sm:$0xf]
        %v651 = vld [vmem:[%s550 + $0x20] sm:$0xf]
        %v652 = vld [vmem:[%s550 + $0x24] sm:$0xf]
        %v653 = vld [vmem:[%s550 + $0x28] sm:$0xf]
        %v654 = vld [vmem:[%s550 + $0x2c] sm:$0xf]
        %v655 = vld [vmem:[%s550 + $0x30] sm:$0xf]
        %v656 = vld [vmem:[%s550 + $0x34] sm:$0xf]
        %v657 = vld [vmem:[%s550 + $0x38] sm:$0xf]
        %v658 = vld [vmem:[%s550 + $0x3c] sm:$0xf]
        %v659 = vld [vmem:[%s6] sm:$0xf]
        %v660 = vld [vmem:[%s6 + $0x4] sm:$0xf]
        %v661 = vld [vmem:[%s6 + $0x8] sm:$0xf]
        %v662 = vld [vmem:[%s6 + $0xc] sm:$0xf]
        %v663 = vld [vmem:[%s7] sm:$0x1]
        %v665 = vlaneseq
        %v666 = vshrl.u32 %v665, 7
        %v667 = vsub.s32 0, %v666
        %v668 = vrot.slane %v663, %v667
        %v686 = vunpack.c.l.b16 %v643
        %v687 = vunpack.c.l.b16 %v644
        %v688 = vunpack.c.l.b16 %v645
        %v689 = vunpack.c.l.b16 %v646
        %v690 = vunpack.c.l.b16 %v647
        %v691 = vunpack.c.l.b16 %v648
        %v692 = vunpack.c.l.b16 %v649
        %v693 = vunpack.c.l.b16 %v650
        %v694 = vunpack.c.l.b16 %v651
        %v695 = vunpack.c.l.b16 %v652
        %v696 = vunpack.c.l.b16 %v653
        %v697 = vunpack.c.l.b16 %v654
        %v698 = vunpack.c.l.b16 %v655
        %v699 = vunpack.c.l.b16 %v656
        %v700 = vunpack.c.l.b16 %v657
        %v701 = vunpack.c.l.b16 %v658
        %v702 = vpack.c.b16 %v687, %v686
        %v703 = vpack.c.b16 %v689, %v688
        %v704 = vpack.c.b16 %v691, %v690
        %v705 = vpack.c.b16 %v693, %v692
        %v706 = vpack.c.b16 %v695, %v694
        %v707 = vpack.c.b16 %v697, %v696
        %v708 = vpack.c.b16 %v699, %v698
        %v709 = vpack.c.b16 %v701, %v700
        %v714 = vunpack.c.l.b16 %v659
        %v715 = vunpack.c.l.b16 %v660
        %v716 = vunpack.c.l.b16 %v661
        %v717 = vunpack.c.l.b16 %v662
        %v718 = vpack.c.b16 %v715, %v714
        %v719 = vpack.c.b16 %v717, %v716
        %v721 = vsel %vm593, %v702, 0
        %v724 = vsel %vm593, %v703, 0
        %v727 = vsel %vm593, %v704, 0
        %v730 = vsel %vm593, %v705, 0
        %v733 = vsel %vm593, %v706, 0
        %v736 = vsel %vm593, %v707, 0
        %v739 = vsel %vm593, %v708, 0
        %v742 = vsel %vm593, %v709, 0
        %v745 = vsel %vm593, %v718, 0
        %v748 = vsel %vm593, %v719, 0
        %750 = vmatprep.subr.bf16.mxu0 0
        %751 = vmatpush1.bf16.xpose.msra.mxu0 %v745
        %752 = vmatprep.subr.bf16.mxu0 0
        %753 = vmatpush1.bf16.xpose.msra.mxu0 %v748
        %754 = vmatprep.subr.bf16.mxu0 0
        %755 = vmatpush1.bf16.xpose.msra.mxu0 0
        %756 = vmatprep.subr.bf16.mxu0 0
        %757 = vmatpush1.bf16.xpose.msra.mxu0 0
        %758 = vmatprep.subr.bf16.mxu0 0
        %759 = vmatpush1.bf16.xpose.msra.mxu0 0
        %760 = vmatprep.subr.bf16.mxu0 0
        %761 = vmatpush1.bf16.xpose.msra.mxu0 0
        %762 = vmatprep.subr.bf16.mxu0 0
        %763 = vmatpush1.bf16.xpose.msra.mxu0 0
        %764 = vmatprep.subr.bf16.mxu0 0
        %765 = vmatpush1.bf16.xpose.msra.mxu0 0
        %766 = vmatprep.subr.bf16.mxu0 0
        %767 = vmatpush1.bf16.xpose.msra.mxu0 0
        %768 = vmatprep.subr.bf16.mxu0 0
        %769 = vmatpush1.bf16.xpose.msra.mxu0 0
        %770 = vmatprep.subr.bf16.mxu0 0
        %771 = vmatpush1.bf16.xpose.msra.mxu0 0
        %772 = vmatprep.subr.bf16.mxu0 0
        %773 = vmatpush1.bf16.xpose.msra.mxu0 0
        %774 = vmatprep.subr.bf16.mxu0 0
        %775 = vmatpush1.bf16.xpose.msra.mxu0 0
        %776 = vmatprep.subr.bf16.mxu0 0
        %777 = vmatpush1.bf16.xpose.msra.mxu0 0
        %778 = vmatprep.subr.bf16.mxu0 0
        %779 = vmatpush1.bf16.xpose.msra.mxu0 0
        %780 = vmatprep.subr.bf16.mxu0 0
        %781 = vmatpush1.bf16.xpose.msra.mxu0 0
        %782 = vmatprep.mubr.bf16.mxu0 0
        %783 = vmatmul.mubr.bf16.gmra.mrb[0].mxu0 %v721
        %v784 = vpop.f32.mrb[0].mxu0
        %v785 = vadd.f32 %v668, %v784
        %v786 = vpop.f32.mrb[0].mxu0
        %v787 = vpop.f32.mrb[0].mxu0
        %v788 = vadd.f32 %v668, %v787
        %v789 = vpop.f32.mrb[0].mxu0
        %790 = vmatprep.mubr.bf16.mxu0 0
        %791 = vmatmul.mubr.bf16.gmra.mrb[0].mxu0 %v724
        %v792 = vpop.f32.mrb[0].mxu0
        %v793 = vadd.f32 %v668, %v792
        %v794 = vpop.f32.mrb[0].mxu0
        %v795 = vpop.f32.mrb[0].mxu0
        %v796 = vadd.f32 %v668, %v795
        %v797 = vpop.f32.mrb[0].mxu0
        %798 = vmatprep.mubr.bf16.mxu0 0
        %799 = vmatmul.mubr.bf16.gmra.mrb[0].mxu0 %v727
        %v800 = vpop.f32.mrb[0].mxu0
        %v801 = vadd.f32 %v668, %v800
        %v802 = vpop.f32.mrb[0].mxu0
        %v803 = vpop.f32.mrb[0].mxu0
        %v804 = vadd.f32 %v668, %v803
        %v805 = vpop.f32.mrb[0].mxu0
        %806 = vmatprep.mubr.bf16.mxu0 0
        %807 = vmatmul.mubr.bf16.gmra.mrb[0].mxu0 %v730
        %v808 = vpop.f32.mrb[0].mxu0
        %v809 = vadd.f32 %v668, %v808
        %v810 = vpop.f32.mrb[0].mxu0
        %v811 = vpop.f32.mrb[0].mxu0
        %v812 = vadd.f32 %v668, %v811
        %v813 = vpop.f32.mrb[0].mxu0
        %814 = vmatprep.mubr.bf16.mxu0 0
        %815 = vmatmul.mubr.bf16.gmra.mrb[0].mxu0 %v733
        %v816 = vpop.f32.mrb[0].mxu0
        %v817 = vadd.f32 %v668, %v816
        %v818 = vpop.f32.mrb[0].mxu0
        %v819 = vpop.f32.mrb[0].mxu0
        %v820 = vadd.f32 %v668, %v819
        %v821 = vpop.f32.mrb[0].mxu0
        %822 = vmatprep.mubr.bf16.mxu0 0
        %823 = vmatmul.mubr.bf16.gmra.mrb[0].mxu0 %v736
        %v824 = vpop.f32.mrb[0].mxu0
        %v825 = vadd.f32 %v668, %v824
        %v826 = vpop.f32.mrb[0].mxu0
        %v827 = vpop.f32.mrb[0].mxu0
        %v828 = vadd.f32 %v668, %v827
        %v829 = vpop.f32.mrb[0].mxu0
        %830 = vmatprep.mubr.bf16.mxu0 0
        %831 = vmatmul.mubr.bf16.gmra.mrb[0].mxu0 %v739
        %v832 = vpop.f32.mrb[0].mxu0
        %v833 = vadd.f32 %v668, %v832
        %v834 = vpop.f32.mrb[0].mxu0
        %v835 = vpop.f32.mrb[0].mxu0
        %v836 = vadd.f32 %v668, %v835
        %v837 = vpop.f32.mrb[0].mxu0
        %838 = vmatprep.mubr.bf16.mxu0 0
        %839 = vmatmul.mubr.bf16.gmra.mrb[0].mxu0 %v742
        %v840 = vpop.f32.mrb[0].mxu0
        %v841 = vadd.f32 %v668, %v840
        %v842 = vpop.f32.mrb[0].mxu0
        %v843 = vpop.f32.mrb[0].mxu0
        %v844 = vadd.f32 %v668, %v843
        %v845 = vpop.f32.mrb[0].mxu0
        %846 = vdwg.mxu0
        %v847 = vld [vmem:[%s556] sm:$0xf]
        %v848 = vld [vmem:[%s556 + $0x4] sm:$0xf]
        %v849 = vld [vmem:[%s556 + $0x8] sm:$0xf]
        %v850 = vld [vmem:[%s556 + $0xc] sm:$0xf]
        %v851 = vld [vmem:[%s556 + $0x10] sm:$0xf]
        %v852 = vld [vmem:[%s556 + $0x14] sm:$0xf]
        %v853 = vld [vmem:[%s556 + $0x18] sm:$0xf]
        %v854 = vld [vmem:[%s556 + $0x1c] sm:$0xf]
        %v855 = vld [vmem:[%s556 + $0x20] sm:$0xf]
        %v856 = vld [vmem:[%s556 + $0x24] sm:$0xf]
        %v857 = vld [vmem:[%s556 + $0x28] sm:$0xf]
        %v858 = vld [vmem:[%s556 + $0x2c] sm:$0xf]
        %v859 = vld [vmem:[%s556 + $0x30] sm:$0xf]
        %v860 = vld [vmem:[%s556 + $0x34] sm:$0xf]
        %v861 = vld [vmem:[%s556 + $0x38] sm:$0xf]
        %v862 = vld [vmem:[%s556 + $0x3c] sm:$0xf]
        %v863 = vld [vmem:[%s8] sm:$0xf]
        %v864 = vld [vmem:[%s8 + $0x4] sm:$0xf]
        %v865 = vld [vmem:[%s8 + $0x8] sm:$0xf]
        %v866 = vld [vmem:[%s8 + $0xc] sm:$0xf]
        %v867 = vld [vmem:[%s9] sm:$0x1]
        %v869 = vlaneseq
        %v870 = vshrl.u32 %v869, 7
        %v871 = vsub.s32 0, %v870
        %v872 = vrot.slane %v867, %v871
        %v890 = vunpack.c.l.b16 %v847
        %v891 = vunpack.c.l.b16 %v848
        %v892 = vunpack.c.l.b16 %v849
        %v893 = vunpack.c.l.b16 %v850
        %v894 = vunpack.c.l.b16 %v851
        %v895 = vunpack.c.l.b16 %v852
        %v896 = vunpack.c.l.b16 %v853
        %v897 = vunpack.c.l.b16 %v854
        %v898 = vunpack.c.l.b16 %v855
        %v899 = vunpack.c.l.b16 %v856
        %v900 = vunpack.c.l.b16 %v857
        %v901 = vunpack.c.l.b16 %v858
        %v902 = vunpack.c.l.b16 %v859
        %v903 = vunpack.c.l.b16 %v860
        %v904 = vunpack.c.l.b16 %v861
        %v905 = vunpack.c.l.b16 %v862
        %v906 = vpack.c.b16 %v891, %v890
        %v907 = vpack.c.b16 %v893, %v892
        %v908 = vpack.c.b16 %v895, %v894
        %v909 = vpack.c.b16 %v897, %v896
        %v910 = vpack.c.b16 %v899, %v898
        %v911 = vpack.c.b16 %v901, %v900
        %v912 = vpack.c.b16 %v903, %v902
        %v913 = vpack.c.b16 %v905, %v904
        %v918 = vunpack.c.l.b16 %v863
        %v919 = vunpack.c.l.b16 %v864
        %v920 = vunpack.c.l.b16 %v865
        %v921 = vunpack.c.l.b16 %v866
        %v922 = vpack.c.b16 %v919, %v918
        %v923 = vpack.c.b16 %v921, %v920
        %v925 = vsel %vm593, %v906, 0
        %v928 = vsel %vm593, %v907, 0
        %v931 = vsel %vm593, %v908, 0
        %v934 = vsel %vm593, %v909, 0
        %v937 = vsel %vm593, %v910, 0
        %v940 = vsel %vm593, %v911, 0
        %v943 = vsel %vm593, %v912, 0
        %v946 = vsel %vm593, %v913, 0
        %v949 = vsel %vm593, %v922, 0
        %v952 = vsel %vm593, %v923, 0
        %954 = vmatprep.subr.bf16.mxu0 0
        %955 = vmatpush1.bf16.xpose.msra.mxu0 %v949
        %956 = vmatprep.subr.bf16.mxu0 0
        %957 = vmatpush1.bf16.xpose.msra.mxu0 %v952
        %958 = vmatprep.subr.bf16.mxu0 0
        %959 = vmatpush1.bf16.xpose.msra.mxu0 0
        %960 = vmatprep.subr.bf16.mxu0 0
        %961 = vmatpush1.bf16.xpose.msra.mxu0 0
        %962 = vmatprep.subr.bf16.mxu0 0
        %963 = vmatpush1.bf16.xpose.msra.mxu0 0
        %964 = vmatprep.subr.bf16.mxu0 0
        %965 = vmatpush1.bf16.xpose.msra.mxu0 0
        %966 = vmatprep.subr.bf16.mxu0 0
        %967 = vmatpush1.bf16.xpose.msra.mxu0 0
        %968 = vmatprep.subr.bf16.mxu0 0
        %969 = vmatpush1.bf16.xpose.msra.mxu0 0
        %970 = vmatprep.subr.bf16.mxu0 0
        %971 = vmatpush1.bf16.xpose.msra.mxu0 0
        %972 = vmatprep.subr.bf16.mxu0 0
        %973 = vmatpush1.bf16.xpose.msra.mxu0 0
        %974 = vmatprep.subr.bf16.mxu0 0
        %975 = vmatpush1.bf16.xpose.msra.mxu0 0
        %976 = vmatprep.subr.bf16.mxu0 0
        %977 = vmatpush1.bf16.xpose.msra.mxu0 0
        %978 = vmatprep.subr.bf16.mxu0 0
        %979 = vmatpush1.bf16.xpose.msra.mxu0 0
        %980 = vmatprep.subr.bf16.mxu0 0
        %981 = vmatpush1.bf16.xpose.msra.mxu0 0
        %982 = vmatprep.subr.bf16.mxu0 0
        %983 = vmatpush1.bf16.xpose.msra.mxu0 0
        %984 = vmatprep.subr.bf16.mxu0 0
        %985 = vmatpush1.bf16.xpose.msra.mxu0 0
        %986 = vmatprep.mubr.bf16.mxu0 0
        %987 = vmatmul.mubr.bf16.gmra.mrb[0].mxu0 %v925
        %v988 = vpop.f32.mrb[0].mxu0
        %v989 = vadd.f32 %v872, %v988
        %v990 = vpop.f32.mrb[0].mxu0
        %v991 = vpop.f32.mrb[0].mxu0
        %v992 = vadd.f32 %v872, %v991
        %v993 = vpop.f32.mrb[0].mxu0
        %994 = vmatprep.mubr.bf16.mxu0 0
        %995 = vmatmul.mubr.bf16.gmra.mrb[0].mxu0 %v928
        %v996 = vpop.f32.mrb[0].mxu0
        %v997 = vadd.f32 %v872, %v996
        %v998 = vpop.f32.mrb[0].mxu0
        %v999 = vpop.f32.mrb[0].mxu0
        %v1000 = vadd.f32 %v872, %v999
        %v1001 = vpop.f32.mrb[0].mxu0
        %1002 = vmatprep.mubr.bf16.mxu0 0
        %1003 = vmatmul.mubr.bf16.gmra.mrb[0].mxu0 %v931
        %v1004 = vpop.f32.mrb[0].mxu0
        %v1005 = vadd.f32 %v872, %v1004
        %v1006 = vpop.f32.mrb[0].mxu0
        %v1007 = vpop.f32.mrb[0].mxu0
        %v1008 = vadd.f32 %v872, %v1007
        %v1009 = vpop.f32.mrb[0].mxu0
        %1010 = vmatprep.mubr.bf16.mxu0 0
        %1011 = vmatmul.mubr.bf16.gmra.mrb[0].mxu0 %v934
        %v1012 = vpop.f32.mrb[0].mxu0
        %v1013 = vadd.f32 %v872, %v1012
        %v1014 = vpop.f32.mrb[0].mxu0
        %v1015 = vpop.f32.mrb[0].mxu0
        %v1016 = vadd.f32 %v872, %v1015
        %v1017 = vpop.f32.mrb[0].mxu0
        %1018 = vmatprep.mubr.bf16.mxu0 0
        %1019 = vmatmul.mubr.bf16.gmra.mrb[0].mxu0 %v937
        %v1020 = vpop.f32.mrb[0].mxu0
        %v1021 = vadd.f32 %v872, %v1020
        %v1022 = vpop.f32.mrb[0].mxu0
        %v1023 = vpop.f32.mrb[0].mxu0
        %v1024 = vadd.f32 %v872, %v1023
        %v1025 = vpop.f32.mrb[0].mxu0
        %1026 = vmatprep.mubr.bf16.mxu0 0
        %1027 = vmatmul.mubr.bf16.gmra.mrb[0].mxu0 %v940
        %v1028 = vpop.f32.mrb[0].mxu0
        %v1029 = vadd.f32 %v872, %v1028
        %v1030 = vpop.f32.mrb[0].mxu0
        %v1031 = vpop.f32.mrb[0].mxu0
        %v1032 = vadd.f32 %v872, %v1031
        %v1033 = vpop.f32.mrb[0].mxu0
        %1034 = vmatprep.mubr.bf16.mxu0 0
        %1035 = vmatmul.mubr.bf16.gmra.mrb[0].mxu0 %v943
        %v1036 = vpop.f32.mrb[0].mxu0
        %v1037 = vadd.f32 %v872, %v1036
        %v1038 = vpop.f32.mrb[0].mxu0
        %v1039 = vpop.f32.mrb[0].mxu0
        %v1040 = vadd.f32 %v872, %v1039
        %v1041 = vpop.f32.mrb[0].mxu0
        %1042 = vmatprep.mubr.bf16.mxu0 0
        %1043 = vmatmul.mubr.bf16.gmra.mrb[0].mxu0 %v946
        %v1044 = vpop.f32.mrb[0].mxu0
        %v1045 = vadd.f32 %v872, %v1044
        %v1046 = vpop.f32.mrb[0].mxu0
        %v1047 = vpop.f32.mrb[0].mxu0
        %v1048 = vadd.f32 %v872, %v1047
        %v1049 = vpop.f32.mrb[0].mxu0
        %1050 = vdwg.mxu0
        %v1052 = vcombine.high %v638, %v638
        %v1054 = vunpack.c.l.s4 1966171168
        %v1055 = vunpack.c.0.s8 %v1054
        %v1056 = vlaneseq
        %v1057 = vshrl.u32 %v1056, 7
        %v1058 = vsub.s32 %v1055, %v1057
        %v1059 = vrot.slane %v638, %v1058
        %v1061 = vunpack.c.l.s4 1966171168
        %v1062 = vunpack.c.0.s8 %v1061
        %v1063 = vlaneseq
        %v1064 = vshrl.u32 %v1063, 7
        %v1065 = vsub.s32 %v1062, %v1064
        %v1066 = vrot.slane %v1052, %v1065
        %v1067 = vcombine.high %v1059, %v1059
        %v1068 = vcombine.high %v1066, %v1066
        %v1070 = vunpack.c.l.s4 1966171168
        %v1071 = vunpack.c.0.s8 %v1070
        %v1072 = vlaneseq
        %v1073 = vshrl.u32 %v1072, 7
        %v1074 = vsub.s32 %v1071, %v1073
        %v1075 = vrot.slane %v1059, %v1074
        %v1077 = vunpack.c.l.s4 1966171168
        %v1078 = vunpack.c.0.s8 %v1077
        %v1079 = vlaneseq
        %v1080 = vshrl.u32 %v1079, 7
        %v1081 = vsub.s32 %v1078, %v1080
        %v1082 = vrot.slane %v1066, %v1081
        %v1084 = vunpack.c.l.s4 1966171168
        %v1085 = vunpack.c.0.s8 %v1084
        %v1086 = vlaneseq
        %v1087 = vshrl.u32 %v1086, 7
        %v1088 = vsub.s32 %v1085, %v1087
        %v1089 = vrot.slane %v1067, %v1088
        %v1091 = vunpack.c.l.s4 1966171168
        %v1092 = vunpack.c.0.s8 %v1091
        %v1093 = vlaneseq
        %v1094 = vshrl.u32 %v1093, 7
        %v1095 = vsub.s32 %v1092, %v1094
        %v1096 = vrot.slane %v1068, %v1095
        %v1097 = vcombine.high %v1075, %v1075
        %v1098 = vcombine.high %v1082, %v1082
        %v1099 = vcombine.high %v1089, %v1089
        %v1100 = vcombine.high %v1096, %v1096
        %v1101 = vlaneseq
        %v1102 = vshrl.u32 %v1101, 7
        %v1103 = vsub.s32 0, %v1102
        %v1104 = vrot.slane %v1075, %v1103
        %v1105 = vlaneseq
        %v1106 = vshrl.u32 %v1105, 7
        %v1107 = vsub.s32 0, %v1106
        %v1108 = vrot.slane %v1089, %v1107
        %v1109 = vlaneseq
        %v1110 = vshrl.u32 %v1109, 7
        %v1111 = vsub.s32 0, %v1110
        %v1112 = vrot.slane %v1097, %v1111
        %v1113 = vlaneseq
        %v1114 = vshrl.u32 %v1113, 7
        %v1115 = vsub.s32 0, %v1114
        %v1116 = vrot.slane %v1099, %v1115
        %v1117 = vlaneseq
        %v1118 = vshrl.u32 %v1117, 7
        %v1119 = vsub.s32 0, %v1118
        %v1120 = vrot.slane %v1082, %v1119
        %v1121 = vlaneseq
        %v1122 = vshrl.u32 %v1121, 7
        %v1123 = vsub.s32 0, %v1122
        %v1124 = vrot.slane %v1096, %v1123
        %v1125 = vlaneseq
        %v1126 = vshrl.u32 %v1125, 7
        %v1127 = vsub.s32 0, %v1126
        %v1128 = vrot.slane %v1098, %v1127
        %v1129 = vlaneseq
        %v1130 = vshrl.u32 %v1129, 7
        %v1131 = vsub.s32 0, %v1130
        %v1132 = vrot.slane %v1100, %v1131
        %v1141 = vmul.f32 %v1104, %v785
        %v1142 = vmul.f32 %v1104, %v788
        %v1143 = vmul.f32 %v1108, %v793
        %v1144 = vmul.f32 %v1108, %v796
        %v1145 = vmul.f32 %v1112, %v801
        %v1146 = vmul.f32 %v1112, %v804
        %v1147 = vmul.f32 %v1116, %v809
        %v1148 = vmul.f32 %v1116, %v812
        %v1149 = vmul.f32 %v1120, %v817
        %v1150 = vmul.f32 %v1120, %v820
        %v1151 = vmul.f32 %v1124, %v825
        %v1152 = vmul.f32 %v1124, %v828
        %v1153 = vmul.f32 %v1128, %v833
        %v1154 = vmul.f32 %v1128, %v836
        %v1155 = vmul.f32 %v1132, %v841
        %v1156 = vmul.f32 %v1132, %v844
        %v1157 = vpack.c.bf16 %v1142, %v1141
        %v1158 = vpack.c.bf16 %v1144, %v1143
        %v1159 = vpack.c.bf16 %v1146, %v1145
        %v1160 = vpack.c.bf16 %v1148, %v1147
        %v1161 = vpack.c.bf16 %v1150, %v1149
        %v1162 = vpack.c.bf16 %v1152, %v1151
        %v1163 = vpack.c.bf16 %v1154, %v1153
        %v1164 = vpack.c.bf16 %v1156, %v1155
        %v1165 = vld [vmem:[%s12] sm:$0xf]
        %v1166 = vld [vmem:[%s12 + $0x4] sm:$0xf]
        %v1167 = vld [vmem:[%s12 + $0x8] sm:$0xf]
        %v1168 = vld [vmem:[%s12 + $0xc] sm:$0xf]
        %v1173 = vunpack.c.l.b16 %v1165
        %v1174 = vunpack.c.l.b16 %v1166
        %v1175 = vunpack.c.l.b16 %v1167
        %v1176 = vunpack.c.l.b16 %v1168
        %v1177 = vpack.c.b16 %v1174, %v1173
        %v1178 = vpack.c.b16 %v1176, %v1175
        %v1182 = vsel %vm593, %v1157, 0
        %v1185 = vsel %vm593, %v1158, 0
        %v1188 = vsel %vm593, %v1159, 0
        %v1191 = vsel %vm593, %v1160, 0
        %v1194 = vsel %vm593, %v1161, 0
        %v1197 = vsel %vm593, %v1162, 0
        %v1200 = vsel %vm593, %v1163, 0
        %v1203 = vsel %vm593, %v1164, 0
        %1205 = vmatprep.subr.bf16.mxu0 0
        %1206 = vmatpush1.bf16.msra.mxu0 %v1177
        %1207 = vmatprep.subr.bf16.mxu0 0
        %1208 = vmatpush1.bf16.msra.mxu0 %v1178
        %1209 = vmatprep.subr.bf16.mxu0 0
        %1210 = vmatpush1.bf16.msra.mxu0 0
        %1211 = vmatprep.subr.bf16.mxu0 0
        %1212 = vmatpush1.bf16.msra.mxu0 0
        %1213 = vmatprep.subr.bf16.mxu0 0
        %1214 = vmatpush1.bf16.msra.mxu0 0
        %1215 = vmatprep.subr.bf16.mxu0 0
        %1216 = vmatpush1.bf16.msra.mxu0 0
        %1217 = vmatprep.subr.bf16.mxu0 0
        %1218 = vmatpush1.bf16.msra.mxu0 0
        %1219 = vmatprep.subr.bf16.mxu0 0
        %1220 = vmatpush1.bf16.msra.mxu0 0
        %1221 = vmatprep.subr.bf16.mxu0 0
        %1222 = vmatpush1.bf16.msra.mxu0 0
        %1223 = vmatprep.subr.bf16.mxu0 0
        %1224 = vmatpush1.bf16.msra.mxu0 0
        %1225 = vmatprep.subr.bf16.mxu0 0
        %1226 = vmatpush1.bf16.msra.mxu0 0
        %1227 = vmatprep.subr.bf16.mxu0 0
        %1228 = vmatpush1.bf16.msra.mxu0 0
        %1229 = vmatprep.subr.bf16.mxu0 0
        %1230 = vmatpush1.bf16.msra.mxu0 0
        %1231 = vmatprep.subr.bf16.mxu0 0
        %1232 = vmatpush1.bf16.msra.mxu0 0
        %1233 = vmatprep.subr.bf16.mxu0 0
        %1234 = vmatpush1.bf16.msra.mxu0 0
        %1235 = vmatprep.subr.bf16.mxu0 0
        %1236 = vmatpush1.bf16.msra.mxu0 0
        %1237 = vmatprep.mubr.bf16.mxu0 0
        %1238 = vmatmul.mubr.bf16.gmra.mrb[0].mxu0 %v1182
        %v1239 = vpop.f32.mrb[0].mxu0
        %v1240 = vadd.f32 0.0, %v1239
        %v1241 = vpop.f32.mrb[0].mxu0
        %v1242 = vpop.f32.mrb[0].mxu0
        %v1243 = vadd.f32 0.0, %v1242
        %v1244 = vpop.f32.mrb[0].mxu0
        %1245 = vmatprep.mubr.bf16.mxu0 0
        %1246 = vmatmul.mubr.bf16.gmra.mrb[0].mxu0 %v1185
        %v1247 = vpop.f32.mrb[0].mxu0
        %v1248 = vadd.f32 0.0, %v1247
        %v1249 = vpop.f32.mrb[0].mxu0
        %v1250 = vpop.f32.mrb[0].mxu0
        %v1251 = vadd.f32 0.0, %v1250
        %v1252 = vpop.f32.mrb[0].mxu0
        %1253 = vmatprep.mubr.bf16.mxu0 0
        %1254 = vmatmul.mubr.bf16.gmra.mrb[0].mxu0 %v1188
        %v1255 = vpop.f32.mrb[0].mxu0
        %v1256 = vadd.f32 0.0, %v1255
        %v1257 = vpop.f32.mrb[0].mxu0
        %v1258 = vpop.f32.mrb[0].mxu0
        %v1259 = vadd.f32 0.0, %v1258
        %v1260 = vpop.f32.mrb[0].mxu0
        %1261 = vmatprep.mubr.bf16.mxu0 0
        %1262 = vmatmul.mubr.bf16.gmra.mrb[0].mxu0 %v1191
        %v1263 = vpop.f32.mrb[0].mxu0
        %v1264 = vadd.f32 0.0, %v1263
        %v1265 = vpop.f32.mrb[0].mxu0
        %v1266 = vpop.f32.mrb[0].mxu0
        %v1267 = vadd.f32 0.0, %v1266
        %v1268 = vpop.f32.mrb[0].mxu0
        %1269 = vmatprep.mubr.bf16.mxu0 0
        %1270 = vmatmul.mubr.bf16.gmra.mrb[0].mxu0 %v1194
        %v1271 = vpop.f32.mrb[0].mxu0
        %v1272 = vadd.f32 0.0, %v1271
        %v1273 = vpop.f32.mrb[0].mxu0
        %v1274 = vpop.f32.mrb[0].mxu0
        %v1275 = vadd.f32 0.0, %v1274
        %v1276 = vpop.f32.mrb[0].mxu0
        %1277 = vmatprep.mubr.bf16.mxu0 0
        %1278 = vmatmul.mubr.bf16.gmra.mrb[0].mxu0 %v1197
        %v1279 = vpop.f32.mrb[0].mxu0
        %v1280 = vadd.f32 0.0, %v1279
        %v1281 = vpop.f32.mrb[0].mxu0
        %v1282 = vpop.f32.mrb[0].mxu0
        %v1283 = vadd.f32 0.0, %v1282
        %v1284 = vpop.f32.mrb[0].mxu0
        %1285 = vmatprep.mubr.bf16.mxu0 0
        %1286 = vmatmul.mubr.bf16.gmra.mrb[0].mxu0 %v1200
        %v1287 = vpop.f32.mrb[0].mxu0
        %v1288 = vadd.f32 0.0, %v1287
        %v1289 = vpop.f32.mrb[0].mxu0
        %v1290 = vpop.f32.mrb[0].mxu0
        %v1291 = vadd.f32 0.0, %v1290
        %v1292 = vpop.f32.mrb[0].mxu0
        %1293 = vmatprep.mubr.bf16.mxu0 0
        %1294 = vmatmul.mubr.bf16.gmra.mrb[0].mxu0 %v1203
        %v1295 = vpop.f32.mrb[0].mxu0
        %v1296 = vadd.f32 0.0, %v1295
        %v1297 = vpop.f32.mrb[0].mxu0
        %v1298 = vpop.f32.mrb[0].mxu0
        %v1299 = vadd.f32 0.0, %v1298
        %v1300 = vpop.f32.mrb[0].mxu0
        %1301 = vdwg.mxu0
        %1302 = vxpose.xlu0.b32.start [1/16] %v1240, 128
        %1303 = vxpose.xlu0.b32.cont [2/16] %v1243, 128
        %1304 = vxpose.xlu0.b32.cont [3/16] 0.0, 128
        %1305 = vxpose.xlu0.b32.cont [4/16] 0.0, 128
        %1306 = vxpose.xlu0.b32.cont [5/16] 0.0, 128
        %1307 = vxpose.xlu0.b32.cont [6/16] 0.0, 128
        %1308 = vxpose.xlu0.b32.cont [7/16] 0.0, 128
        %1309 = vxpose.xlu0.b32.cont [8/16] 0.0, 128
        %1310 = vxpose.xlu0.b32.cont [9/16] 0.0, 128
        %1311 = vxpose.xlu0.b32.cont [10/16] 0.0, 128
        %1312 = vxpose.xlu0.b32.cont [11/16] 0.0, 128
        %1313 = vxpose.xlu0.b32.cont [12/16] 0.0, 128
        %1314 = vxpose.xlu0.b32.cont [13/16] 0.0, 128
        %1315 = vxpose.xlu0.b32.cont [14/16] 0.0, 128
        %1316 = vxpose.xlu0.b32.cont [15/16] 0.0, 128
        %1317 = vxpose.xlu0.b32.end [16/16] 0.0, 128
        %v1318 = vpop.trf.xlu0
        %v1319 = vpop.trf.xlu0
        %v1320 = vpop.trf.xlu0
        %v1321 = vpop.trf.xlu0
        %v1322 = vpop.trf.xlu0
        %v1323 = vpop.trf.xlu0
        %v1324 = vpop.trf.xlu0
        %v1325 = vpop.trf.xlu0
        %v1326 = vpop.trf.xlu0
        %v1327 = vpop.trf.xlu0
        %v1328 = vpop.trf.xlu0
        %v1329 = vpop.trf.xlu0
        %v1330 = vpop.trf.xlu0
        %v1331 = vpop.trf.xlu0
        %v1332 = vpop.trf.xlu0
        %v1333 = vpop.trf.xlu0
        %1334 = vxpose.xlu0.b32.start [1/16] %v1248, 128
        %1335 = vxpose.xlu0.b32.cont [2/16] %v1251, 128
        %1336 = vxpose.xlu0.b32.cont [3/16] 0.0, 128
        %1337 = vxpose.xlu0.b32.cont [4/16] 0.0, 128
        %1338 = vxpose.xlu0.b32.cont [5/16] 0.0, 128
        %1339 = vxpose.xlu0.b32.cont [6/16] 0.0, 128
        %1340 = vxpose.xlu0.b32.cont [7/16] 0.0, 128
        %1341 = vxpose.xlu0.b32.cont [8/16] 0.0, 128
        %1342 = vxpose.xlu0.b32.cont [9/16] 0.0, 128
        %1343 = vxpose.xlu0.b32.cont [10/16] 0.0, 128
        %1344 = vxpose.xlu0.b32.cont [11/16] 0.0, 128
        %1345 = vxpose.xlu0.b32.cont [12/16] 0.0, 128
        %1346 = vxpose.xlu0.b32.cont [13/16] 0.0, 128
        %1347 = vxpose.xlu0.b32.cont [14/16] 0.0, 128
        %1348 = vxpose.xlu0.b32.cont [15/16] 0.0, 128
        %1349 = vxpose.xlu0.b32.end [16/16] 0.0, 128
        %v1350 = vpop.trf.xlu0
        %v1351 = vpop.trf.xlu0
        %v1352 = vpop.trf.xlu0
        %v1353 = vpop.trf.xlu0
        %v1354 = vpop.trf.xlu0
        %v1355 = vpop.trf.xlu0
        %v1356 = vpop.trf.xlu0
        %v1357 = vpop.trf.xlu0
        %v1358 = vpop.trf.xlu0
        %v1359 = vpop.trf.xlu0
        %v1360 = vpop.trf.xlu0
        %v1361 = vpop.trf.xlu0
        %v1362 = vpop.trf.xlu0
        %v1363 = vpop.trf.xlu0
        %v1364 = vpop.trf.xlu0
        %v1365 = vpop.trf.xlu0
        %1366 = vxpose.xlu0.b32.start [1/16] %v1256, 128
        %1367 = vxpose.xlu0.b32.cont [2/16] %v1259, 128
        %1368 = vxpose.xlu0.b32.cont [3/16] 0.0, 128
        %1369 = vxpose.xlu0.b32.cont [4/16] 0.0, 128
        %1370 = vxpose.xlu0.b32.cont [5/16] 0.0, 128
        %1371 = vxpose.xlu0.b32.cont [6/16] 0.0, 128
        %1372 = vxpose.xlu0.b32.cont [7/16] 0.0, 128
        %1373 = vxpose.xlu0.b32.cont [8/16] 0.0, 128
        %1374 = vxpose.xlu0.b32.cont [9/16] 0.0, 128
        %1375 = vxpose.xlu0.b32.cont [10/16] 0.0, 128
        %1376 = vxpose.xlu0.b32.cont [11/16] 0.0, 128
        %1377 = vxpose.xlu0.b32.cont [12/16] 0.0, 128
        %1378 = vxpose.xlu0.b32.cont [13/16] 0.0, 128
        %1379 = vxpose.xlu0.b32.cont [14/16] 0.0, 128
        %1380 = vxpose.xlu0.b32.cont [15/16] 0.0, 128
        %1381 = vxpose.xlu0.b32.end [16/16] 0.0, 128
        %v1382 = vpop.trf.xlu0
        %v1383 = vpop.trf.xlu0
        %v1384 = vpop.trf.xlu0
        %v1385 = vpop.trf.xlu0
        %v1386 = vpop.trf.xlu0
        %v1387 = vpop.trf.xlu0
        %v1388 = vpop.trf.xlu0
        %v1389 = vpop.trf.xlu0
        %v1390 = vpop.trf.xlu0
        %v1391 = vpop.trf.xlu0
        %v1392 = vpop.trf.xlu0
        %v1393 = vpop.trf.xlu0
        %v1394 = vpop.trf.xlu0
        %v1395 = vpop.trf.xlu0
        %v1396 = vpop.trf.xlu0
        %v1397 = vpop.trf.xlu0
        %1398 = vxpose.xlu0.b32.start [1/16] %v1264, 128
        %1399 = vxpose.xlu0.b32.cont [2/16] %v1267, 128
        %1400 = vxpose.xlu0.b32.cont [3/16] 0.0, 128
        %1401 = vxpose.xlu0.b32.cont [4/16] 0.0, 128
        %1402 = vxpose.xlu0.b32.cont [5/16] 0.0, 128
        %1403 = vxpose.xlu0.b32.cont [6/16] 0.0, 128
        %1404 = vxpose.xlu0.b32.cont [7/16] 0.0, 128
        %1405 = vxpose.xlu0.b32.cont [8/16] 0.0, 128
        %1406 = vxpose.xlu0.b32.cont [9/16] 0.0, 128
        %1407 = vxpose.xlu0.b32.cont [10/16] 0.0, 128
        %1408 = vxpose.xlu0.b32.cont [11/16] 0.0, 128
        %1409 = vxpose.xlu0.b32.cont [12/16] 0.0, 128
        %1410 = vxpose.xlu0.b32.cont [13/16] 0.0, 128
        %1411 = vxpose.xlu0.b32.cont [14/16] 0.0, 128
        %1412 = vxpose.xlu0.b32.cont [15/16] 0.0, 128
        %1413 = vxpose.xlu0.b32.end [16/16] 0.0, 128
        %v1414 = vpop.trf.xlu0
        %v1415 = vpop.trf.xlu0
        %v1416 = vpop.trf.xlu0
        %v1417 = vpop.trf.xlu0
        %v1418 = vpop.trf.xlu0
        %v1419 = vpop.trf.xlu0
        %v1420 = vpop.trf.xlu0
        %v1421 = vpop.trf.xlu0
        %v1422 = vpop.trf.xlu0
        %v1423 = vpop.trf.xlu0
        %v1424 = vpop.trf.xlu0
        %v1425 = vpop.trf.xlu0
        %v1426 = vpop.trf.xlu0
        %v1427 = vpop.trf.xlu0
        %v1428 = vpop.trf.xlu0
        %v1429 = vpop.trf.xlu0
        %1430 = vxpose.xlu0.b32.start [1/16] %v1272, 128
        %1431 = vxpose.xlu0.b32.cont [2/16] %v1275, 128
        %1432 = vxpose.xlu0.b32.cont [3/16] 0.0, 128
        %1433 = vxpose.xlu0.b32.cont [4/16] 0.0, 128
        %1434 = vxpose.xlu0.b32.cont [5/16] 0.0, 128
        %1435 = vxpose.xlu0.b32.cont [6/16] 0.0, 128
        %1436 = vxpose.xlu0.b32.cont [7/16] 0.0, 128
        %1437 = vxpose.xlu0.b32.cont [8/16] 0.0, 128
        %1438 = vxpose.xlu0.b32.cont [9/16] 0.0, 128
        %1439 = vxpose.xlu0.b32.cont [10/16] 0.0, 128
        %1440 = vxpose.xlu0.b32.cont [11/16] 0.0, 128
        %1441 = vxpose.xlu0.b32.cont [12/16] 0.0, 128
        %1442 = vxpose.xlu0.b32.cont [13/16] 0.0, 128
        %1443 = vxpose.xlu0.b32.cont [14/16] 0.0, 128
        %1444 = vxpose.xlu0.b32.cont [15/16] 0.0, 128
        %1445 = vxpose.xlu0.b32.end [16/16] 0.0, 128
        %v1446 = vpop.trf.xlu0
        %v1447 = vpop.trf.xlu0
        %v1448 = vpop.trf.xlu0
        %v1449 = vpop.trf.xlu0
        %v1450 = vpop.trf.xlu0
        %v1451 = vpop.trf.xlu0
        %v1452 = vpop.trf.xlu0
        %v1453 = vpop.trf.xlu0
        %v1454 = vpop.trf.xlu0
        %v1455 = vpop.trf.xlu0
        %v1456 = vpop.trf.xlu0
        %v1457 = vpop.trf.xlu0
        %v1458 = vpop.trf.xlu0
        %v1459 = vpop.trf.xlu0
        %v1460 = vpop.trf.xlu0
        %v1461 = vpop.trf.xlu0
        %1462 = vxpose.xlu0.b32.start [1/16] %v1280, 128
        %1463 = vxpose.xlu0.b32.cont [2/16] %v1283, 128
        %1464 = vxpose.xlu0.b32.cont [3/16] 0.0, 128
        %1465 = vxpose.xlu0.b32.cont [4/16] 0.0, 128
        %1466 = vxpose.xlu0.b32.cont [5/16] 0.0, 128
        %1467 = vxpose.xlu0.b32.cont [6/16] 0.0, 128
        %1468 = vxpose.xlu0.b32.cont [7/16] 0.0, 128
        %1469 = vxpose.xlu0.b32.cont [8/16] 0.0, 128
        %1470 = vxpose.xlu0.b32.cont [9/16] 0.0, 128
        %1471 = vxpose.xlu0.b32.cont [10/16] 0.0, 128
        %1472 = vxpose.xlu0.b32.cont [11/16] 0.0, 128
        %1473 = vxpose.xlu0.b32.cont [12/16] 0.0, 128
        %1474 = vxpose.xlu0.b32.cont [13/16] 0.0, 128
        %1475 = vxpose.xlu0.b32.cont [14/16] 0.0, 128
        %1476 = vxpose.xlu0.b32.cont [15/16] 0.0, 128
        %1477 = vxpose.xlu0.b32.end [16/16] 0.0, 128
        %v1478 = vpop.trf.xlu0
        %v1479 = vpop.trf.xlu0
        %v1480 = vpop.trf.xlu0
        %v1481 = vpop.trf.xlu0
        %v1482 = vpop.trf.xlu0
        %v1483 = vpop.trf.xlu0
        %v1484 = vpop.trf.xlu0
        %v1485 = vpop.trf.xlu0
        %v1486 = vpop.trf.xlu0
        %v1487 = vpop.trf.xlu0
        %v1488 = vpop.trf.xlu0
        %v1489 = vpop.trf.xlu0
        %v1490 = vpop.trf.xlu0
        %v1491 = vpop.trf.xlu0
        %v1492 = vpop.trf.xlu0
        %v1493 = vpop.trf.xlu0
        %1494 = vxpose.xlu0.b32.start [1/16] %v1288, 128
        %1495 = vxpose.xlu0.b32.cont [2/16] %v1291, 128
        %1496 = vxpose.xlu0.b32.cont [3/16] 0.0, 128
        %1497 = vxpose.xlu0.b32.cont [4/16] 0.0, 128
        %1498 = vxpose.xlu0.b32.cont [5/16] 0.0, 128
        %1499 = vxpose.xlu0.b32.cont [6/16] 0.0, 128
        %1500 = vxpose.xlu0.b32.cont [7/16] 0.0, 128
        %1501 = vxpose.xlu0.b32.cont [8/16] 0.0, 128
        %1502 = vxpose.xlu0.b32.cont [9/16] 0.0, 128
        %1503 = vxpose.xlu0.b32.cont [10/16] 0.0, 128
        %1504 = vxpose.xlu0.b32.cont [11/16] 0.0, 128
        %1505 = vxpose.xlu0.b32.cont [12/16] 0.0, 128
        %1506 = vxpose.xlu0.b32.cont [13/16] 0.0, 128
        %1507 = vxpose.xlu0.b32.cont [14/16] 0.0, 128
        %1508 = vxpose.xlu0.b32.cont [15/16] 0.0, 128
        %1509 = vxpose.xlu0.b32.end [16/16] 0.0, 128
        %v1510 = vpop.trf.xlu0
        %v1511 = vpop.trf.xlu0
        %v1512 = vpop.trf.xlu0
        %v1513 = vpop.trf.xlu0
        %v1514 = vpop.trf.xlu0
        %v1515 = vpop.trf.xlu0
        %v1516 = vpop.trf.xlu0
        %v1517 = vpop.trf.xlu0
        %v1518 = vpop.trf.xlu0
        %v1519 = vpop.trf.xlu0
        %v1520 = vpop.trf.xlu0
        %v1521 = vpop.trf.xlu0
        %v1522 = vpop.trf.xlu0
        %v1523 = vpop.trf.xlu0
        %v1524 = vpop.trf.xlu0
        %v1525 = vpop.trf.xlu0
        %1526 = vxpose.xlu0.b32.start [1/16] %v1296, 128
        %1527 = vxpose.xlu0.b32.cont [2/16] %v1299, 128
        %1528 = vxpose.xlu0.b32.cont [3/16] 0.0, 128
        %1529 = vxpose.xlu0.b32.cont [4/16] 0.0, 128
        %1530 = vxpose.xlu0.b32.cont [5/16] 0.0, 128
        %1531 = vxpose.xlu0.b32.cont [6/16] 0.0, 128
        %1532 = vxpose.xlu0.b32.cont [7/16] 0.0, 128
        %1533 = vxpose.xlu0.b32.cont [8/16] 0.0, 128
        %1534 = vxpose.xlu0.b32.cont [9/16] 0.0, 128
        %1535 = vxpose.xlu0.b32.cont [10/16] 0.0, 128
        %1536 = vxpose.xlu0.b32.cont [11/16] 0.0, 128
        %1537 = vxpose.xlu0.b32.cont [12/16] 0.0, 128
        %1538 = vxpose.xlu0.b32.cont [13/16] 0.0, 128
        %1539 = vxpose.xlu0.b32.cont [14/16] 0.0, 128
        %1540 = vxpose.xlu0.b32.cont [15/16] 0.0, 128
        %1541 = vxpose.xlu0.b32.end [16/16] 0.0, 128
        %v1542 = vpop.trf.xlu0
        %v1543 = vpop.trf.xlu0
        %v1544 = vpop.trf.xlu0
        %v1545 = vpop.trf.xlu0
        %v1546 = vpop.trf.xlu0
        %v1547 = vpop.trf.xlu0
        %v1548 = vpop.trf.xlu0
        %v1549 = vpop.trf.xlu0
        %v1550 = vpop.trf.xlu0
        %v1551 = vpop.trf.xlu0
        %v1552 = vpop.trf.xlu0
        %v1553 = vpop.trf.xlu0
        %v1554 = vpop.trf.xlu0
        %v1555 = vpop.trf.xlu0
        %v1556 = vpop.trf.xlu0
        %v1557 = vpop.trf.xlu0
        %v1558 = vld [vmem:[%s562] sm:$0x3]
        %v1559 = vld [vmem:[%s562 + $0x2] sm:$0x3]
        %v1560 = vld [vmem:[%s562 + $0x4] sm:$0x3]
        %v1561 = vld [vmem:[%s562 + $0x6] sm:$0x3]
        %v1562 = vld [vmem:[%s562 + $0x8] sm:$0x3]
        %v1563 = vld [vmem:[%s562 + $0xa] sm:$0x3]
        %v1564 = vld [vmem:[%s562 + $0xc] sm:$0x3]
        %v1565 = vld [vmem:[%s562 + $0xe] sm:$0x3]
        %v1566 = vunpack.c.l.bf16 %v1558
        %v1567 = vunpack.c.l.bf16 %v1559
        %v1568 = vunpack.c.l.bf16 %v1560
        %v1569 = vunpack.c.l.bf16 %v1561
        %v1570 = vunpack.c.l.bf16 %v1562
        %v1571 = vunpack.c.l.bf16 %v1563
        %v1572 = vunpack.c.l.bf16 %v1564
        %v1573 = vunpack.c.l.bf16 %v1565
        %v1574 = vadd.f32 %v1318, %v1566
        %v1575 = vadd.f32 %v1350, %v1567
        %v1576 = vadd.f32 %v1382, %v1568
        %v1577 = vadd.f32 %v1414, %v1569
        %v1578 = vadd.f32 %v1446, %v1570
        %v1579 = vadd.f32 %v1478, %v1571
        %v1580 = vadd.f32 %v1510, %v1572
        %v1581 = vadd.f32 %v1542, %v1573
        %vm1582 = vcmask 125952
        %v1583 = vsel %vm1582, %v1574, -inf
        %1584 = vmax.xlane.f32.xlu0 %v1583
        %v1585 = vpop.xlane.xlu0 %1584
        %v1586 = vsel %vm1582, %v1575, -inf
        %1587 = vmax.xlane.f32.xlu0 %v1586
        %v1588 = vpop.xlane.xlu0 %1587
        %v1589 = vsel %vm1582, %v1576, -inf
        %1590 = vmax.xlane.f32.xlu0 %v1589
        %v1591 = vpop.xlane.xlu0 %1590
        %v1592 = vsel %vm1582, %v1577, -inf
        %1593 = vmax.xlane.f32.xlu0 %v1592
        %v1594 = vpop.xlane.xlu0 %1593
        %v1595 = vsel %vm1582, %v1578, -inf
        %1596 = vmax.xlane.f32.xlu0 %v1595
        %v1597 = vpop.xlane.xlu0 %1596
        %v1598 = vsel %vm1582, %v1579, -inf
        %1599 = vmax.xlane.f32.xlu0 %v1598
        %v1600 = vpop.xlane.xlu0 %1599
        %v1601 = vsel %vm1582, %v1580, -inf
        %1602 = vmax.xlane.f32.xlu0 %v1601
        %v1603 = vpop.xlane.xlu0 %1602
        %v1604 = vsel %vm1582, %v1581, -inf
        %1605 = vmax.xlane.f32.xlu0 %v1604
        %v1606 = vpop.xlane.xlu0 %1605
        %v1607 = vsub.f32 %v1574, %v1585
        %v1608 = vsub.f32 %v1575, %v1588
        %v1609 = vsub.f32 %v1576, %v1591
        %v1610 = vsub.f32 %v1577, %v1594
        %v1611 = vsub.f32 %v1578, %v1597
        %v1612 = vsub.f32 %v1579, %v1600
        %v1613 = vsub.f32 %v1580, %v1603
        %v1614 = vsub.f32 %v1581, %v1606
        %v1615 = vmul.f32 %v1607, 1.442695
        %v1616 = vpow.pop %v1615
        %v1617 = vmul.f32 %v1608, 1.442695
        %v1618 = vpow.pop %v1617
        %v1619 = vmul.f32 %v1609, 1.442695
        %v1620 = vpow.pop %v1619
        %v1621 = vmul.f32 %v1610, 1.442695
        %v1622 = vpow.pop %v1621
        %v1623 = vmul.f32 %v1611, 1.442695
        %v1624 = vpow.pop %v1623
        %v1625 = vmul.f32 %v1612, 1.442695
        %v1626 = vpow.pop %v1625
        %v1627 = vmul.f32 %v1613, 1.442695
        %v1628 = vpow.pop %v1627
        %v1629 = vmul.f32 %v1614, 1.442695
        %v1630 = vpow.pop %v1629
        %v1631 = vsel %vm1582, %v1616, 0.0
        %1632 = vadd.xlane.f32.xlu0 %v1631
        %v1633 = vpop.xlane.xlu0 %1632
        %v1634 = vsel %vm1582, %v1618, 0.0
        %1635 = vadd.xlane.f32.xlu0 %v1634
        %v1636 = vpop.xlane.xlu0 %1635
        %v1637 = vsel %vm1582, %v1620, 0.0
        %1638 = vadd.xlane.f32.xlu0 %v1637
        %v1639 = vpop.xlane.xlu0 %1638
        %v1640 = vsel %vm1582, %v1622, 0.0
        %1641 = vadd.xlane.f32.xlu0 %v1640
        %v1642 = vpop.xlane.xlu0 %1641
        %v1643 = vsel %vm1582, %v1624, 0.0
        %1644 = vadd.xlane.f32.xlu0 %v1643
        %v1645 = vpop.xlane.xlu0 %1644
        %v1646 = vsel %vm1582, %v1626, 0.0
        %1647 = vadd.xlane.f32.xlu0 %v1646
        %v1648 = vpop.xlane.xlu0 %1647
        %v1649 = vsel %vm1582, %v1628, 0.0
        %1650 = vadd.xlane.f32.xlu0 %v1649
        %v1651 = vpop.xlane.xlu0 %1650
        %v1652 = vsel %vm1582, %v1630, 0.0
        %1653 = vadd.xlane.f32.xlu0 %v1652
        %v1654 = vpop.xlane.xlu0 %1653
        %v1655 = vrcp.pop %v1633
        %v1656 = vrcp.pop %v1636
        %v1657 = vrcp.pop %v1639
        %v1658 = vrcp.pop %v1642
        %v1659 = vrcp.pop %v1645
        %v1660 = vrcp.pop %v1648
        %v1661 = vrcp.pop %v1651
        %v1662 = vrcp.pop %v1654
        %v1663 = vmul.f32 %v1616, %v1655
        %v1664 = vmul.f32 %v1618, %v1656
        %v1665 = vmul.f32 %v1620, %v1657
        %v1666 = vmul.f32 %v1622, %v1658
        %v1667 = vmul.f32 %v1624, %v1659
        %v1668 = vmul.f32 %v1626, %v1660
        %v1669 = vmul.f32 %v1628, %v1661
        %v1670 = vmul.f32 %v1630, %v1662
        %1671 = vst.msk [vmem:[%s568] sm:$0xf] %vm1582, %v1663
        %1672 = vst.msk [vmem:[%s568 + $0x4] sm:$0xf] %vm1582, %v1664
        %1673 = vst.msk [vmem:[%s568 + $0x8] sm:$0xf] %vm1582, %v1665
        %1674 = vst.msk [vmem:[%s568 + $0xc] sm:$0xf] %vm1582, %v1666
        %1675 = vst.msk [vmem:[%s568 + $0x10] sm:$0xf] %vm1582, %v1667
        %1676 = vst.msk [vmem:[%s568 + $0x14] sm:$0xf] %vm1582, %v1668
        %1677 = vst.msk [vmem:[%s568 + $0x18] sm:$0xf] %vm1582, %v1669
        %1678 = vst.msk [vmem:[%s568 + $0x1c] sm:$0xf] %vm1582, %v1670
        %1679 = vxpose.xlu0.b32.start [1/16] %v1663, 128
        %1680 = vxpose.xlu0.b32.cont [2/16] 0.0, 128
        %1681 = vxpose.xlu0.b32.cont [3/16] 0.0, 128
        %1682 = vxpose.xlu0.b32.cont [4/16] 0.0, 128
        %1683 = vxpose.xlu0.b32.cont [5/16] 0.0, 128
        %1684 = vxpose.xlu0.b32.cont [6/16] 0.0, 128
        %1685 = vxpose.xlu0.b32.cont [7/16] 0.0, 128
        %1686 = vxpose.xlu0.b32.cont [8/16] 0.0, 128
        %1687 = vxpose.xlu0.b32.cont [9/16] 0.0, 128
        %1688 = vxpose.xlu0.b32.cont [10/16] 0.0, 128
        %1689 = vxpose.xlu0.b32.cont [11/16] 0.0, 128
        %1690 = vxpose.xlu0.b32.cont [12/16] 0.0, 128
        %1691 = vxpose.xlu0.b32.cont [13/16] 0.0, 128
        %1692 = vxpose.xlu0.b32.cont [14/16] 0.0, 128
        %1693 = vxpose.xlu0.b32.cont [15/16] 0.0, 128
        %1694 = vxpose.xlu0.b32.end [16/16] 0.0, 128
        %v1695 = vpop.trf.xlu0
        %v1696 = vpop.trf.xlu0
        %v1697 = vpop.trf.xlu0
        %v1698 = vpop.trf.xlu0
        %v1699 = vpop.trf.xlu0
        %v1700 = vpop.trf.xlu0
        %v1701 = vpop.trf.xlu0
        %v1702 = vpop.trf.xlu0
        %v1703 = vpop.trf.xlu0
        %v1704 = vpop.trf.xlu0
        %v1705 = vpop.trf.xlu0
        %v1706 = vpop.trf.xlu0
        %v1707 = vpop.trf.xlu0
        %v1708 = vpop.trf.xlu0
        %v1709 = vpop.trf.xlu0
        %v1710 = vpop.trf.xlu0
        %1711 = vxpose.xlu0.b32.start [1/16] %v1664, 128
        %1712 = vxpose.xlu0.b32.cont [2/16] 0.0, 128
        %1713 = vxpose.xlu0.b32.cont [3/16] 0.0, 128
        %1714 = vxpose.xlu0.b32.cont [4/16] 0.0, 128
        %1715 = vxpose.xlu0.b32.cont [5/16] 0.0, 128
        %1716 = vxpose.xlu0.b32.cont [6/16] 0.0, 128
        %1717 = vxpose.xlu0.b32.cont [7/16] 0.0, 128
        %1718 = vxpose.xlu0.b32.cont [8/16] 0.0, 128
        %1719 = vxpose.xlu0.b32.cont [9/16] 0.0, 128
        %1720 = vxpose.xlu0.b32.cont [10/16] 0.0, 128
        %1721 = vxpose.xlu0.b32.cont [11/16] 0.0, 128
        %1722 = vxpose.xlu0.b32.cont [12/16] 0.0, 128
        %1723 = vxpose.xlu0.b32.cont [13/16] 0.0, 128
        %1724 = vxpose.xlu0.b32.cont [14/16] 0.0, 128
        %1725 = vxpose.xlu0.b32.cont [15/16] 0.0, 128
        %1726 = vxpose.xlu0.b32.end [16/16] 0.0, 128
        %v1727 = vpop.trf.xlu0
        %v1728 = vpop.trf.xlu0
        %v1729 = vpop.trf.xlu0
        %v1730 = vpop.trf.xlu0
        %v1731 = vpop.trf.xlu0
        %v1732 = vpop.trf.xlu0
        %v1733 = vpop.trf.xlu0
        %v1734 = vpop.trf.xlu0
        %v1735 = vpop.trf.xlu0
        %v1736 = vpop.trf.xlu0
        %v1737 = vpop.trf.xlu0
        %v1738 = vpop.trf.xlu0
        %v1739 = vpop.trf.xlu0
        %v1740 = vpop.trf.xlu0
        %v1741 = vpop.trf.xlu0
        %v1742 = vpop.trf.xlu0
        %1743 = vxpose.xlu0.b32.start [1/16] %v1665, 128
        %1744 = vxpose.xlu0.b32.cont [2/16] 0.0, 128
        %1745 = vxpose.xlu0.b32.cont [3/16] 0.0, 128
        %1746 = vxpose.xlu0.b32.cont [4/16] 0.0, 128
        %1747 = vxpose.xlu0.b32.cont [5/16] 0.0, 128
        %1748 = vxpose.xlu0.b32.cont [6/16] 0.0, 128
        %1749 = vxpose.xlu0.b32.cont [7/16] 0.0, 128
        %1750 = vxpose.xlu0.b32.cont [8/16] 0.0, 128
        %1751 = vxpose.xlu0.b32.cont [9/16] 0.0, 128
        %1752 = vxpose.xlu0.b32.cont [10/16] 0.0, 128
        %1753 = vxpose.xlu0.b32.cont [11/16] 0.0, 128
        %1754 = vxpose.xlu0.b32.cont [12/16] 0.0, 128
        %1755 = vxpose.xlu0.b32.cont [13/16] 0.0, 128
        %1756 = vxpose.xlu0.b32.cont [14/16] 0.0, 128
        %1757 = vxpose.xlu0.b32.cont [15/16] 0.0, 128
        %1758 = vxpose.xlu0.b32.end [16/16] 0.0, 128
        %v1759 = vpop.trf.xlu0
        %v1760 = vpop.trf.xlu0
        %v1761 = vpop.trf.xlu0
        %v1762 = vpop.trf.xlu0
        %v1763 = vpop.trf.xlu0
        %v1764 = vpop.trf.xlu0
        %v1765 = vpop.trf.xlu0
        %v1766 = vpop.trf.xlu0
        %v1767 = vpop.trf.xlu0
        %v1768 = vpop.trf.xlu0
        %v1769 = vpop.trf.xlu0
        %v1770 = vpop.trf.xlu0
        %v1771 = vpop.trf.xlu0
        %v1772 = vpop.trf.xlu0
        %v1773 = vpop.trf.xlu0
        %v1774 = vpop.trf.xlu0
        %1775 = vxpose.xlu0.b32.start [1/16] %v1666, 128
        %1776 = vxpose.xlu0.b32.cont [2/16] 0.0, 128
        %1777 = vxpose.xlu0.b32.cont [3/16] 0.0, 128
        %1778 = vxpose.xlu0.b32.cont [4/16] 0.0, 128
        %1779 = vxpose.xlu0.b32.cont [5/16] 0.0, 128
        %1780 = vxpose.xlu0.b32.cont [6/16] 0.0, 128
        %1781 = vxpose.xlu0.b32.cont [7/16] 0.0, 128
        %1782 = vxpose.xlu0.b32.cont [8/16] 0.0, 128
        %1783 = vxpose.xlu0.b32.cont [9/16] 0.0, 128
        %1784 = vxpose.xlu0.b32.cont [10/16] 0.0, 128
        %1785 = vxpose.xlu0.b32.cont [11/16] 0.0, 128
        %1786 = vxpose.xlu0.b32.cont [12/16] 0.0, 128
        %1787 = vxpose.xlu0.b32.cont [13/16] 0.0, 128
        %1788 = vxpose.xlu0.b32.cont [14/16] 0.0, 128
        %1789 = vxpose.xlu0.b32.cont [15/16] 0.0, 128
        %1790 = vxpose.xlu0.b32.end [16/16] 0.0, 128
        %v1791 = vpop.trf.xlu0
        %v1792 = vpop.trf.xlu0
        %v1793 = vpop.trf.xlu0
        %v1794 = vpop.trf.xlu0
        %v1795 = vpop.trf.xlu0
        %v1796 = vpop.trf.xlu0
        %v1797 = vpop.trf.xlu0
        %v1798 = vpop.trf.xlu0
        %v1799 = vpop.trf.xlu0
        %v1800 = vpop.trf.xlu0
        %v1801 = vpop.trf.xlu0
        %v1802 = vpop.trf.xlu0
        %v1803 = vpop.trf.xlu0
        %v1804 = vpop.trf.xlu0
        %v1805 = vpop.trf.xlu0
        %v1806 = vpop.trf.xlu0
        %1807 = vxpose.xlu0.b32.start [1/16] %v1667, 128
        %1808 = vxpose.xlu0.b32.cont [2/16] 0.0, 128
        %1809 = vxpose.xlu0.b32.cont [3/16] 0.0, 128
        %1810 = vxpose.xlu0.b32.cont [4/16] 0.0, 128
        %1811 = vxpose.xlu0.b32.cont [5/16] 0.0, 128
        %1812 = vxpose.xlu0.b32.cont [6/16] 0.0, 128
        %1813 = vxpose.xlu0.b32.cont [7/16] 0.0, 128
        %1814 = vxpose.xlu0.b32.cont [8/16] 0.0, 128
        %1815 = vxpose.xlu0.b32.cont [9/16] 0.0, 128
        %1816 = vxpose.xlu0.b32.cont [10/16] 0.0, 128
        %1817 = vxpose.xlu0.b32.cont [11/16] 0.0, 128
        %1818 = vxpose.xlu0.b32.cont [12/16] 0.0, 128
        %1819 = vxpose.xlu0.b32.cont [13/16] 0.0, 128
        %1820 = vxpose.xlu0.b32.cont [14/16] 0.0, 128
        %1821 = vxpose.xlu0.b32.cont [15/16] 0.0, 128
        %1822 = vxpose.xlu0.b32.end [16/16] 0.0, 128
        %v1823 = vpop.trf.xlu0
        %v1824 = vpop.trf.xlu0
        %v1825 = vpop.trf.xlu0
        %v1826 = vpop.trf.xlu0
        %v1827 = vpop.trf.xlu0
        %v1828 = vpop.trf.xlu0
        %v1829 = vpop.trf.xlu0
        %v1830 = vpop.trf.xlu0
        %v1831 = vpop.trf.xlu0
        %v1832 = vpop.trf.xlu0
        %v1833 = vpop.trf.xlu0
        %v1834 = vpop.trf.xlu0
        %v1835 = vpop.trf.xlu0
        %v1836 = vpop.trf.xlu0
        %v1837 = vpop.trf.xlu0
        %v1838 = vpop.trf.xlu0
        %1839 = vxpose.xlu0.b32.start [1/16] %v1668, 128
        %1840 = vxpose.xlu0.b32.cont [2/16] 0.0, 128
        %1841 = vxpose.xlu0.b32.cont [3/16] 0.0, 128
        %1842 = vxpose.xlu0.b32.cont [4/16] 0.0, 128
        %1843 = vxpose.xlu0.b32.cont [5/16] 0.0, 128
        %1844 = vxpose.xlu0.b32.cont [6/16] 0.0, 128
        %1845 = vxpose.xlu0.b32.cont [7/16] 0.0, 128
        %1846 = vxpose.xlu0.b32.cont [8/16] 0.0, 128
        %1847 = vxpose.xlu0.b32.cont [9/16] 0.0, 128
        %1848 = vxpose.xlu0.b32.cont [10/16] 0.0, 128
        %1849 = vxpose.xlu0.b32.cont [11/16] 0.0, 128
        %1850 = vxpose.xlu0.b32.cont [12/16] 0.0, 128
        %1851 = vxpose.xlu0.b32.cont [13/16] 0.0, 128
        %1852 = vxpose.xlu0.b32.cont [14/16] 0.0, 128
        %1853 = vxpose.xlu0.b32.cont [15/16] 0.0, 128
        %1854 = vxpose.xlu0.b32.end [16/16] 0.0, 128
        %v1855 = vpop.trf.xlu0
        %v1856 = vpop.trf.xlu0
        %v1857 = vpop.trf.xlu0
        %v1858 = vpop.trf.xlu0
        %v1859 = vpop.trf.xlu0
        %v1860 = vpop.trf.xlu0
        %v1861 = vpop.trf.xlu0
        %v1862 = vpop.trf.xlu0
        %v1863 = vpop.trf.xlu0
        %v1864 = vpop.trf.xlu0
        %v1865 = vpop.trf.xlu0
        %v1866 = vpop.trf.xlu0
        %v1867 = vpop.trf.xlu0
        %v1868 = vpop.trf.xlu0
        %v1869 = vpop.trf.xlu0
        %v1870 = vpop.trf.xlu0
        %1871 = vxpose.xlu0.b32.start [1/16] %v1669, 128
        %1872 = vxpose.xlu0.b32.cont [2/16] 0.0, 128
        %1873 = vxpose.xlu0.b32.cont [3/16] 0.0, 128
        %1874 = vxpose.xlu0.b32.cont [4/16] 0.0, 128
        %1875 = vxpose.xlu0.b32.cont [5/16] 0.0, 128
        %1876 = vxpose.xlu0.b32.cont [6/16] 0.0, 128
        %1877 = vxpose.xlu0.b32.cont [7/16] 0.0, 128
        %1878 = vxpose.xlu0.b32.cont [8/16] 0.0, 128
        %1879 = vxpose.xlu0.b32.cont [9/16] 0.0, 128
        %1880 = vxpose.xlu0.b32.cont [10/16] 0.0, 128
        %1881 = vxpose.xlu0.b32.cont [11/16] 0.0, 128
        %1882 = vxpose.xlu0.b32.cont [12/16] 0.0, 128
        %1883 = vxpose.xlu0.b32.cont [13/16] 0.0, 128
        %1884 = vxpose.xlu0.b32.cont [14/16] 0.0, 128
        %1885 = vxpose.xlu0.b32.cont [15/16] 0.0, 128
        %1886 = vxpose.xlu0.b32.end [16/16] 0.0, 128
        %v1887 = vpop.trf.xlu0
        %v1888 = vpop.trf.xlu0
        %v1889 = vpop.trf.xlu0
        %v1890 = vpop.trf.xlu0
        %v1891 = vpop.trf.xlu0
        %v1892 = vpop.trf.xlu0
        %v1893 = vpop.trf.xlu0
        %v1894 = vpop.trf.xlu0
        %v1895 = vpop.trf.xlu0
        %v1896 = vpop.trf.xlu0
        %v1897 = vpop.trf.xlu0
        %v1898 = vpop.trf.xlu0
        %v1899 = vpop.trf.xlu0
        %v1900 = vpop.trf.xlu0
        %v1901 = vpop.trf.xlu0
        %v1902 = vpop.trf.xlu0
        %1903 = vxpose.xlu0.b32.start [1/16] %v1670, 128
        %1904 = vxpose.xlu0.b32.cont [2/16] 0.0, 128
        %1905 = vxpose.xlu0.b32.cont [3/16] 0.0, 128
        %1906 = vxpose.xlu0.b32.cont [4/16] 0.0, 128
        %1907 = vxpose.xlu0.b32.cont [5/16] 0.0, 128
        %1908 = vxpose.xlu0.b32.cont [6/16] 0.0, 128
        %1909 = vxpose.xlu0.b32.cont [7/16] 0.0, 128
        %1910 = vxpose.xlu0.b32.cont [8/16] 0.0, 128
        %1911 = vxpose.xlu0.b32.cont [9/16] 0.0, 128
        %1912 = vxpose.xlu0.b32.cont [10/16] 0.0, 128
        %1913 = vxpose.xlu0.b32.cont [11/16] 0.0, 128
        %1914 = vxpose.xlu0.b32.cont [12/16] 0.0, 128
        %1915 = vxpose.xlu0.b32.cont [13/16] 0.0, 128
        %1916 = vxpose.xlu0.b32.cont [14/16] 0.0, 128
        %1917 = vxpose.xlu0.b32.cont [15/16] 0.0, 128
        %1918 = vxpose.xlu0.b32.end [16/16] 0.0, 128
        %v1919 = vpop.trf.xlu0
        %v1920 = vpop.trf.xlu0
        %v1921 = vpop.trf.xlu0
        %v1922 = vpop.trf.xlu0
        %v1923 = vpop.trf.xlu0
        %v1924 = vpop.trf.xlu0
        %v1925 = vpop.trf.xlu0
        %v1926 = vpop.trf.xlu0
        %v1927 = vpop.trf.xlu0
        %v1928 = vpop.trf.xlu0
        %v1929 = vpop.trf.xlu0
        %v1930 = vpop.trf.xlu0
        %v1931 = vpop.trf.xlu0
        %v1932 = vpop.trf.xlu0
        %v1933 = vpop.trf.xlu0
        %v1934 = vpop.trf.xlu0
        %v1935 = vpack.c.bf16 %v1696, %v1695
        %v1936 = vpack.c.bf16 %v1728, %v1727
        %v1937 = vpack.c.bf16 %v1760, %v1759
        %v1938 = vpack.c.bf16 %v1792, %v1791
        %v1939 = vpack.c.bf16 %v1824, %v1823
        %v1940 = vpack.c.bf16 %v1856, %v1855
        %v1941 = vpack.c.bf16 %v1888, %v1887
        %v1942 = vpack.c.bf16 %v1920, %v1919
        %v1943 = vld [vmem:[%s13] sm:$0x3]
        %vm1944 = vcmask 31744
        %v1946 = vsel %vm1944, %v1935, 0
        %v1949 = vsel %vm1944, %v1936, 0
        %v1952 = vsel %vm1944, %v1937, 0
        %v1955 = vsel %vm1944, %v1938, 0
        %v1958 = vsel %vm1944, %v1939, 0
        %v1961 = vsel %vm1944, %v1940, 0
        %v1964 = vsel %vm1944, %v1941, 0
        %v1967 = vsel %vm1944, %v1942, 0
        %vm1969 = vcmask 1041408
        %v1971 = vsel %vm1969, %v1943, 0
        %1973 = vmatprep.subr.bf16.mxu0 0
        %1974 = vmatpush1.bf16.msra.mxu0 %v1971
        %1975 = vmatprep.subr.bf16.mxu0 0
        %1976 = vmatpush1.bf16.msra.mxu0 0
        %1977 = vmatprep.subr.bf16.mxu0 0
        %1978 = vmatpush1.bf16.msra.mxu0 0
        %1979 = vmatprep.subr.bf16.mxu0 0
        %1980 = vmatpush1.bf16.msra.mxu0 0
        %1981 = vmatprep.subr.bf16.mxu0 0
        %1982 = vmatpush1.bf16.msra.mxu0 0
        %1983 = vmatprep.subr.bf16.mxu0 0
        %1984 = vmatpush1.bf16.msra.mxu0 0
        %1985 = vmatprep.subr.bf16.mxu0 0
        %1986 = vmatpush1.bf16.msra.mxu0 0
        %1987 = vmatprep.subr.bf16.mxu0 0
        %1988 = vmatpush1.bf16.msra.mxu0 0
        %1989 = vmatprep.subr.bf16.mxu0 0
        %1990 = vmatpush1.bf16.msra.mxu0 0
        %1991 = vmatprep.subr.bf16.mxu0 0
        %1992 = vmatpush1.bf16.msra.mxu0 0
        %1993 = vmatprep.subr.bf16.mxu0 0
        %1994 = vmatpush1.bf16.msra.mxu0 0
        %1995 = vmatprep.subr.bf16.mxu0 0
        %1996 = vmatpush1.bf16.msra.mxu0 0
        %1997 = vmatprep.subr.bf16.mxu0 0
        %1998 = vmatpush1.bf16.msra.mxu0 0
        %1999 = vmatprep.subr.bf16.mxu0 0
        %2000 = vmatpush1.bf16.msra.mxu0 0
        %2001 = vmatprep.subr.bf16.mxu0 0
        %2002 = vmatpush1.bf16.msra.mxu0 0
        %2003 = vmatprep.subr.bf16.mxu0 0
        %2004 = vmatpush1.bf16.msra.mxu0 0
        %2005 = vmatprep.mubr.bf16.mxu0 0
        %2006 = vmatmul.mubr.bf16.gmra.mrb[0].mxu0 %v1946
        %v2007 = vpop.f32.mrb[0].mxu0
        %v2008 = vadd.f32 0.0, %v2007
        %v2009 = vpop.f32.mrb[0].mxu0
        %v2010 = vpop.f32.mrb[0].mxu0
        %v2011 = vadd.f32 0.0, %v2010
        %v2012 = vpop.f32.mrb[0].mxu0
        %2013 = vmatprep.mubr.bf16.mxu0 0
        %2014 = vmatmul.mubr.bf16.gmra.mrb[0].mxu0 %v1949
        %v2015 = vpop.f32.mrb[0].mxu0
        %v2016 = vadd.f32 0.0, %v2015
        %v2017 = vpop.f32.mrb[0].mxu0
        %v2018 = vpop.f32.mrb[0].mxu0
        %v2019 = vadd.f32 0.0, %v2018
        %v2020 = vpop.f32.mrb[0].mxu0
        %2021 = vmatprep.mubr.bf16.mxu0 0
        %2022 = vmatmul.mubr.bf16.gmra.mrb[0].mxu0 %v1952
        %v2023 = vpop.f32.mrb[0].mxu0
        %v2024 = vadd.f32 0.0, %v2023
        %v2025 = vpop.f32.mrb[0].mxu0
        %v2026 = vpop.f32.mrb[0].mxu0
        %v2027 = vadd.f32 0.0, %v2026
        %v2028 = vpop.f32.mrb[0].mxu0
        %2029 = vmatprep.mubr.bf16.mxu0 0
        %2030 = vmatmul.mubr.bf16.gmra.mrb[0].mxu0 %v1955
        %v2031 = vpop.f32.mrb[0].mxu0
        %v2032 = vadd.f32 0.0, %v2031
        %v2033 = vpop.f32.mrb[0].mxu0
        %v2034 = vpop.f32.mrb[0].mxu0
        %v2035 = vadd.f32 0.0, %v2034
        %v2036 = vpop.f32.mrb[0].mxu0
        %2037 = vmatprep.mubr.bf16.mxu0 0
        %2038 = vmatmul.mubr.bf16.gmra.mrb[0].mxu0 %v1958
        %v2039 = vpop.f32.mrb[0].mxu0
        %v2040 = vadd.f32 0.0, %v2039
        %v2041 = vpop.f32.mrb[0].mxu0
        %v2042 = vpop.f32.mrb[0].mxu0
        %v2043 = vadd.f32 0.0, %v2042
        %v2044 = vpop.f32.mrb[0].mxu0
        %2045 = vmatprep.mubr.bf16.mxu0 0
        %2046 = vmatmul.mubr.bf16.gmra.mrb[0].mxu0 %v1961
        %v2047 = vpop.f32.mrb[0].mxu0
        %v2048 = vadd.f32 0.0, %v2047
        %v2049 = vpop.f32.mrb[0].mxu0
        %v2050 = vpop.f32.mrb[0].mxu0
        %v2051 = vadd.f32 0.0, %v2050
        %v2052 = vpop.f32.mrb[0].mxu0
        %2053 = vmatprep.mubr.bf16.mxu0 0
        %2054 = vmatmul.mubr.bf16.gmra.mrb[0].mxu0 %v1964
        %v2055 = vpop.f32.mrb[0].mxu0
        %v2056 = vadd.f32 0.0, %v2055
        %v2057 = vpop.f32.mrb[0].mxu0
        %v2058 = vpop.f32.mrb[0].mxu0
        %v2059 = vadd.f32 0.0, %v2058
        %v2060 = vpop.f32.mrb[0].mxu0
        %2061 = vmatprep.mubr.bf16.mxu0 0
        %2062 = vmatmul.mubr.bf16.gmra.mrb[0].mxu0 %v1967
        %v2063 = vpop.f32.mrb[0].mxu0
        %v2064 = vadd.f32 0.0, %v2063
        %v2065 = vpop.f32.mrb[0].mxu0
        %v2066 = vpop.f32.mrb[0].mxu0
        %v2067 = vadd.f32 0.0, %v2066
        %v2068 = vpop.f32.mrb[0].mxu0
        %2069 = vdwg.mxu0
        %v2070 = vmul.f32 %v2008, %v989
        %v2071 = vmul.f32 %v2011, %v992
        %v2072 = vmul.f32 %v2016, %v997
        %v2073 = vmul.f32 %v2019, %v1000
        %v2074 = vmul.f32 %v2024, %v1005
        %v2075 = vmul.f32 %v2027, %v1008
        %v2076 = vmul.f32 %v2032, %v1013
        %v2077 = vmul.f32 %v2035, %v1016
        %v2078 = vmul.f32 %v2040, %v1021
        %v2079 = vmul.f32 %v2043, %v1024
        %v2080 = vmul.f32 %v2048, %v1029
        %v2081 = vmul.f32 %v2051, %v1032
        %v2082 = vmul.f32 %v2056, %v1037
        %v2083 = vmul.f32 %v2059, %v1040
        %v2084 = vmul.f32 %v2064, %v1045
        %v2085 = vmul.f32 %v2067, %v1048
        %v2086 = vsel %vm593, %v2070, 0.0
        %v2087 = vsel %vm593, %v2071, 0.0
        %v2088 = vadd.f32 %v2086, %v2087
        %v2089 = vrot.slane %v2088, 4
        %v2090 = vadd.f32 %v2088, %v2089
        %v2091 = vrot.slane %v2090, 2
        %v2092 = vadd.f32 %v2090, %v2091
        %v2093 = vrot.slane %v2092, 1
        %v2094 = vadd.f32 %v2092, %v2093
        %v2095 = vsel %vm593, %v2072, 0.0
        %v2096 = vsel %vm593, %v2073, 0.0
        %v2097 = vadd.f32 %v2095, %v2096
        %v2098 = vrot.slane %v2097, 4
        %v2099 = vadd.f32 %v2097, %v2098
        %v2100 = vrot.slane %v2099, 2
        %v2101 = vadd.f32 %v2099, %v2100
        %v2102 = vrot.slane %v2101, 1
        %v2103 = vadd.f32 %v2101, %v2102
        %v2104 = vsel %vm593, %v2074, 0.0
        %v2105 = vsel %vm593, %v2075, 0.0
        %v2106 = vadd.f32 %v2104, %v2105
        %v2107 = vrot.slane %v2106, 4
        %v2108 = vadd.f32 %v2106, %v2107
        %v2109 = vrot.slane %v2108, 2
        %v2110 = vadd.f32 %v2108, %v2109
        %v2111 = vrot.slane %v2110, 1
        %v2112 = vadd.f32 %v2110, %v2111
        %v2113 = vsel %vm593, %v2076, 0.0
        %v2114 = vsel %vm593, %v2077, 0.0
        %v2115 = vadd.f32 %v2113, %v2114
        %v2116 = vrot.slane %v2115, 4
        %v2117 = vadd.f32 %v2115, %v2116
        %v2118 = vrot.slane %v2117, 2
        %v2119 = vadd.f32 %v2117, %v2118
        %v2120 = vrot.slane %v2119, 1
        %v2121 = vadd.f32 %v2119, %v2120
        %v2122 = vsel %vm593, %v2078, 0.0
        %v2123 = vsel %vm593, %v2079, 0.0
        %v2124 = vadd.f32 %v2122, %v2123
        %v2125 = vrot.slane %v2124, 4
        %v2126 = vadd.f32 %v2124, %v2125
        %v2127 = vrot.slane %v2126, 2
        %v2128 = vadd.f32 %v2126, %v2127
        %v2129 = vrot.slane %v2128, 1
        %v2130 = vadd.f32 %v2128, %v2129
        %v2131 = vsel %vm593, %v2080, 0.0
        %v2132 = vsel %vm593, %v2081, 0.0
        %v2133 = vadd.f32 %v2131, %v2132
        %v2134 = vrot.slane %v2133, 4
        %v2135 = vadd.f32 %v2133, %v2134
        %v2136 = vrot.slane %v2135, 2
        %v2137 = vadd.f32 %v2135, %v2136
        %v2138 = vrot.slane %v2137, 1
        %v2139 = vadd.f32 %v2137, %v2138
        %v2140 = vsel %vm593, %v2082, 0.0
        %v2141 = vsel %vm593, %v2083, 0.0
        %v2142 = vadd.f32 %v2140, %v2141
        %v2143 = vrot.slane %v2142, 4
        %v2144 = vadd.f32 %v2142, %v2143
        %v2145 = vrot.slane %v2144, 2
        %v2146 = vadd.f32 %v2144, %v2145
        %v2147 = vrot.slane %v2146, 1
        %v2148 = vadd.f32 %v2146, %v2147
        %v2149 = vsel %vm593, %v2084, 0.0
        %v2150 = vsel %vm593, %v2085, 0.0
        %v2151 = vadd.f32 %v2149, %v2150
        %v2152 = vrot.slane %v2151, 4
        %v2153 = vadd.f32 %v2151, %v2152
        %v2154 = vrot.slane %v2153, 2
        %v2155 = vadd.f32 %v2153, %v2154
        %v2156 = vrot.slane %v2155, 1
        %v2157 = vadd.f32 %v2155, %v2156
        %v2158 = vpack.c.bf16 %v2094, %v2094
        %v2159 = vpack.c.bf16 %v2103, %v2103
        %v2160 = vpack.c.bf16 %v2112, %v2112
        %v2161 = vpack.c.bf16 %v2121, %v2121
        %v2162 = vpack.c.bf16 %v2130, %v2130
        %v2163 = vpack.c.bf16 %v2139, %v2139
        %v2164 = vpack.c.bf16 %v2148, %v2148
        %v2165 = vpack.c.bf16 %v2157, %v2157
        %v2166 = vld [vmem:[%s10] sm:$0xf]
        %v2167 = vld [vmem:[%s10 + $0x4] sm:$0xf]
        %v2168 = vld [vmem:[%s10 + $0x8] sm:$0xf]
        %v2169 = vld [vmem:[%s10 + $0xc] sm:$0xf]
        %v2170 = vld [vmem:[%s11] sm:$0x1]
        %v2172 = vlaneseq
        %v2173 = vshrl.u32 %v2172, 7
        %v2174 = vsub.s32 0, %v2173
        %v2175 = vrot.slane %v2170, %v2174
        %v2185 = vunpack.c.l.b16 %v2158
        %v2186 = vunpack.c.l.b16 %v2159
        %v2187 = vunpack.c.l.b16 %v2160
        %v2188 = vunpack.c.l.b16 %v2161
        %v2189 = vunpack.c.l.b16 %v2162
        %v2190 = vunpack.c.l.b16 %v2163
        %v2191 = vunpack.c.l.b16 %v2164
        %v2192 = vunpack.c.l.b16 %v2165
        %vm2193 = vcmask 1041409
        %v2194 = vsel %vm2193, %v2186, %v2185
        %vm2195 = vcmask 1042434
        %v2196 = vsel %vm2195, %v2187, %v2194
        %vm2197 = vcmask 1043459
        %v2198 = vsel %vm2197, %v2188, %v2196
        %vm2199 = vcmask 1044484
        %v2200 = vsel %vm2199, %v2189, %v2198
        %vm2201 = vcmask 1045509
        %v2202 = vsel %vm2201, %v2190, %v2200
        %vm2203 = vcmask 1046534
        %v2204 = vsel %vm2203, %v2191, %v2202
        %vm2205 = vcmask 1047559
        %v2206 = vsel %vm2205, %v2192, %v2204
        %v2207 = vpack.c.b16 %v2206, %v2206
        %v2212 = vunpack.c.l.b16 %v2166
        %v2213 = vunpack.c.l.b16 %v2167
        %v2214 = vunpack.c.l.b16 %v2168
        %v2215 = vunpack.c.l.b16 %v2169
        %v2216 = vpack.c.b16 %v2213, %v2212
        %v2217 = vpack.c.b16 %v2215, %v2214
        %v2219 = vsel %vm593, %v2207, 0
        %v2222 = vsel %vm593, %v2216, 0
        %v2225 = vsel %vm593, %v2217, 0
        %2227 = vmatprep.subr.bf16.mxu0 0
        %2228 = vmatpush1.bf16.xpose.msra.mxu0 %v2222
        %2229 = vmatprep.subr.bf16.mxu0 0
        %2230 = vmatpush1.bf16.xpose.msra.mxu0 %v2225
        %2231 = vmatprep.subr.bf16.mxu0 0
        %2232 = vmatpush1.bf16.xpose.msra.mxu0 0
        %2233 = vmatprep.subr.bf16.mxu0 0
        %2234 = vmatpush1.bf16.xpose.msra.mxu0 0
        %2235 = vmatprep.subr.bf16.mxu0 0
        %2236 = vmatpush1.bf16.xpose.msra.mxu0 0
        %2237 = vmatprep.subr.bf16.mxu0 0
        %2238 = vmatpush1.bf16.xpose.msra.mxu0 0
        %2239 = vmatprep.subr.bf16.mxu0 0
        %2240 = vmatpush1.bf16.xpose.msra.mxu0 0
        %2241 = vmatprep.subr.bf16.mxu0 0
        %2242 = vmatpush1.bf16.xpose.msra.mxu0 0
        %2243 = vmatprep.subr.bf16.mxu0 0
        %2244 = vmatpush1.bf16.xpose.msra.mxu0 0
        %2245 = vmatprep.subr.bf16.mxu0 0
        %2246 = vmatpush1.bf16.xpose.msra.mxu0 0
        %2247 = vmatprep.subr.bf16.mxu0 0
        %2248 = vmatpush1.bf16.xpose.msra.mxu0 0
        %2249 = vmatprep.subr.bf16.mxu0 0
        %2250 = vmatpush1.bf16.xpose.msra.mxu0 0
        %2251 = vmatprep.subr.bf16.mxu0 0
        %2252 = vmatpush1.bf16.xpose.msra.mxu0 0
        %2253 = vmatprep.subr.bf16.mxu0 0
        %2254 = vmatpush1.bf16.xpose.msra.mxu0 0
        %2255 = vmatprep.subr.bf16.mxu0 0
        %2256 = vmatpush1.bf16.xpose.msra.mxu0 0
        %2257 = vmatprep.subr.bf16.mxu0 0
        %2258 = vmatpush1.bf16.xpose.msra.mxu0 0
        %2259 = vmatprep.mubr.bf16.mxu0 0
        %2260 = vmatmul.mubr.bf16.gmra.mrb[0].mxu0 %v2219
        %v2261 = vpop.f32.mrb[0].mxu0
        %v2262 = vadd.f32 %v2175, %v2261
        %v2263 = vpop.f32.mrb[0].mxu0
        %v2264 = vpop.f32.mrb[0].mxu0
        %v2265 = vpop.f32.mrb[0].mxu0
        %2266 = vdwg.mxu0
        %2267 = vst.msk [vmem:[%s534] sm:$0xff] %vm593, %v2262
        %s2268 = sand.u32 %s352, 1
        %s2269 = scalar_lea.sflag [#allocation3], %s2268
        %s2270 = sand.u32 %s352, 1
        %s2271 = smul.addr %s2270, 8
        %s2272 = scalar_lea.vmem [#allocation2], %s2271
        %s2273 = smul.u32 8, %s30
        %p2274 = scmp.lt.s32.totalorder %s2273, 31
        %s2275 = scalar_select %p2274, %s2273, 31
        %s2276 = smul.addr %s2275, 4
        %s2277 = scalar_lea.vmem %s15, %s2276
        // Predicated region
        $region77: #{tpu_custom_call.1} parent=75 // pred_check
          %p2278 = pneg %p362
        $region78: #{tpu_custom_call.1} parent=75 // pred_check_branch
          %2280 = sbr.rel (%p2278) target = $region80
        $region79: #{tpu_custom_call.1} parent=75 // pred_region
          %s2282 = ssub.s32 128, 128
          %2283 = vsyncadd %s2269, %s2282
          %s2284 = smul.addr %s30, 128
          %s2285 = scalar_lea.hbm %s14, %s2284
          %s2287 = sshll.u32 %s2272, 4
          %s2288 = int_to_ptr.vmem [resolvable:$true] %s2287
          %2290 = dma.vmem_to_hbm [thread:$0]  %s2288, 128, %s2285, %s2269
        $region80: #{tpu_custom_call.1} parent=75 // pred_fallthru
          _
        // Predicated region
        $region81: #{tpu_custom_call.1} parent=75 // pred_check
          %p2291 = pneg %p388
        $region82: #{tpu_custom_call.1} parent=75 // pred_check_branch
          %2293 = sbr.rel (%p2291) target = $region84
        $region83: #{tpu_custom_call.1} parent=75 // pred_region
          %s2294 = smul.u32 8, %s30
        $region84: #{tpu_custom_call.1} parent=75 // pred_fallthru
          _
      $region76: #{tpu_custom_call.1} parent=5 // pred_fallthru
        _
      %p2295 = scmp.le.s32.totalorder 2, %s25
      // Predicated region
      $region85: #{tpu_custom_call.1} parent=5 // pred_check
        %p2296 = pneg %p2295
      $region86: #{tpu_custom_call.1} parent=5 // pred_check_branch
        %2298 = sbr.rel (%p2296) target = $region88
      $region87: #{tpu_custom_call.1} parent=5 // pred_region
        %s2299 = ssub.s32 %s25, 2
        // Predicated region
        $region89: #{tpu_custom_call.1} parent=87 // pred_check
          %p2300 = pneg %p368
        $region90: #{tpu_custom_call.1} parent=87 // pred_check_branch
          %2302 = sbr.rel (%p2300) target = $region92
        $region91: #{tpu_custom_call.1} parent=87 // pred_region
          %s2303 = sand.u32 %s353, 1
          %s2304 = scalar_lea.sflag [#allocation3], %s2303
          %s2305 = sand.u32 %s353, 1
          %s2306 = smul.addr %s2305, 8
          %s2307 = scalar_lea.vmem [#allocation2], %s2306
          %2308 = dma.done %s2304, 128
        $region92: #{tpu_custom_call.1} parent=87 // pred_fallthru
          _
        // Predicated region
        $region93: #{tpu_custom_call.1} parent=87 // pred_check
          %p2309 = pneg %p394
        $region94: #{tpu_custom_call.1} parent=87 // pred_check_branch
          %2311 = sbr.rel (%p2309) target = $region96
        $region95: #{tpu_custom_call.1} parent=87 // pred_region
          %s2312 = smul.u32 8, %s31
          %p2313 = scmp.lt.s32.totalorder %s2312, 31
          %s2314 = scalar_select %p2313, %s2312, 31
          %s2315 = smul.addr %s2314, 4
          %s2316 = scalar_lea.vmem %s15, %s2315
        $region96: #{tpu_custom_call.1} parent=87 // pred_fallthru
          _
      $region88: #{tpu_custom_call.1} parent=5 // pred_fallthru
        _
    $region6: #{tpu_custom_call.1} parent=1 // loop_footer
      %s29 = sadd.s32 1, %s25
    $region7: #{tpu_custom_call.1} parent=1 // loop_footer_branch
      %24 = sbr.rel target = $region3
    $region8: #{tpu_custom_call.1} parent=1 // loop_exit
      _
    %2317 = vsyncpa [#allocation3], 1
    %s2318 = scalar_lea.sflag [#allocation3], 1
    %2319 = vsyncpa %s2318, 1

// kernel: tpu_custom_call.1
$region0: #{tpu_custom_call.1}
  #allocation0 [shape = 'u32[]', space=smem, size = 0x4, offset = 0x4, fixed_abs, tag = 'smem constant byte address 0x4 - core index']
  #allocation1 [shape = 'u32[144,128]{1,0:T(1,128)}', space=vmem, size = 0x12000, scoped, tag = 'internal scratch']
  %s0 = inlined_call_operand.vmem [shape: bf16[32,32], index: 0, kind: input, shape index: {}]
  %s1 = inlined_call_operand.vmem [shape: bf16[512,32], index: 1, kind: input, shape index: {}]
  %s2 = inlined_call_operand.vmem [shape: bf16[512,32], index: 2, kind: input, shape index: {}]
  %s3 = inlined_call_operand.vmem [shape: bf16[32,4,16], index: 3, kind: input, shape index: {}]
  %s4 = inlined_call_operand.vmem [shape: bf16[32,32], index: 4, kind: input, shape index: {}]
  %s5 = inlined_call_operand.vmem [shape: f32[1,32], index: 5, kind: input, shape index: {}]
  %s6 = inlined_call_operand.vmem [shape: bf16[32,32], index: 6, kind: input, shape index: {}]
  %s7 = inlined_call_operand.vmem [shape: f32[1,32], index: 7, kind: input, shape index: {}]
  %s8 = inlined_call_operand.vmem [shape: bf16[32,32], index: 8, kind: input, shape index: {}]
  %s9 = inlined_call_operand.vmem [shape: f32[1,32], index: 9, kind: input, shape index: {}]
  %s10 = inlined_call_operand.vmem [shape: bf16[32,32], index: 10, kind: input, shape index: {}]
  %s11 = inlined_call_operand.vmem [shape: f32[1,32], index: 11, kind: input, shape index: {}]
  %s12 = inlined_call_operand.vmem [shape: bf16[32,4], index: 12, kind: input, shape index: {}]
  %s13 = inlined_call_operand.vmem [shape: bf16[4,32], index: 13, kind: input, shape index: {}]
  %s14 = inlined_call_operand.hbm [shape: f32[32,32], index: 14, kind: output, shape index: {0}]
  %s15 = inlined_call_operand.vmem [shape: f32[32,4,16], index: 15, kind: output, shape index: {1}]
  %16 = xla_tuple %s14, %s15
  %s17 = sld [smem:[#allocation0]]
  $region97: #{tpu_custom_call.1} parent=0
    _
  %s19 = ssub.s32 1, %s17
  %s20 = scalar_select 0, %s19, %s17
  $region1: #{tpu_custom_call.1} parent=0
    #allocation2 [shape = 'u8[8192]{0}', space=vmem, size = 0x2000, scoped, tag = 'output window, operand 0']
    #allocation3 [shape = 's32[2]{0}', space=sflag, size = 0x8, scoped, tag = 'scoped memory for tpu_custom_call.1']
    %21 = vsyncpa [#allocation3], 0
    %s22 = scalar_lea.sflag [#allocation3], 1
    %23 = vsyncpa %s22, 0
    loop: start=0, step=1, limit=6
    $region2: #{tpu_custom_call.1} parent=1 // loop_pre_header
      _
    $region3: #{tpu_custom_call.1} parent=1 // loop_header
      %s25 = sphi 0, %s29
      %p26 = scmp.ge.s32.totalorder %s25, 6
      %s35 = sphi 0, %s37
      %s38 = sphi 0, %s35
      %s39 = sphi 0, %s38
      %s55 = sphi 0, %s39
      %s61 = sphi 0, %s63
      %s64 = sphi 0, %s61
      %s65 = sphi 0, %s64
      %s81 = sphi 0, %s65
      %s87 = sphi 0, %s89
      %s90 = sphi 0, %s87
      %s91 = sphi 0, %s90
      %s107 = sphi 0, %s91
      %s113 = sphi 0, %s115
      %s116 = sphi 0, %s113
      %s117 = sphi 0, %s116
      %s133 = sphi 0, %s117
      %s137 = sphi 0, %s137
      %s139 = sphi 0, %s137
      %s140 = sphi 0, %s139
      %s154 = sphi 0, %s140
      %s158 = sphi 0, %s158
      %s160 = sphi 0, %s158
      %s161 = sphi 0, %s160
      %s175 = sphi 0, %s161
      %s179 = sphi 0, %s179
      %s181 = sphi 0, %s179
      %s182 = sphi 0, %s181
      %s196 = sphi 0, %s182
      %s200 = sphi 0, %s200
      %s202 = sphi 0, %s200
      %s203 = sphi 0, %s202
      %s217 = sphi 0, %s203
      %s221 = sphi 0, %s221
      %s223 = sphi 0, %s221
      %s224 = sphi 0, %s223
      %s238 = sphi 0, %s224
      %s242 = sphi 0, %s242
      %s244 = sphi 0, %s242
      %s245 = sphi 0, %s244
      %s259 = sphi 0, %s245
      %s263 = sphi 0, %s263
      %s265 = sphi 0, %s263
      %s266 = sphi 0, %s265
      %s280 = sphi 0, %s266
      %s284 = sphi 0, %s284
      %s286 = sphi 0, %s284
      %s287 = sphi 0, %s286
      %s301 = sphi 0, %s287
      %s305 = sphi 0, %s305
      %s307 = sphi 0, %s305
      %s308 = sphi 0, %s307
      %s322 = sphi 0, %s308
      %s326 = sphi 0, %s326
      %s328 = sphi 0, %s326
      %s329 = sphi 0, %s328
      %s343 = sphi 0, %s329
      %s349 = sphi 0, %s351
      %s352 = sphi 0, %s349
      %s353 = sphi 0, %s352
      %s369 = sphi 0, %s353
      %s375 = sphi 0, %s377
      %s378 = sphi 0, %s375
      %s379 = sphi 0, %s378
      %s395 = sphi 0, %s379
    $region4: #{tpu_custom_call.1} parent=1 // loop_header_branch
      %28 = sbr.rel (%p26) target = $region8
    $region5: #{tpu_custom_call.1} parent=1 // loop_body
      %s30 = ssub.s32 %s25, 1
      %s31 = ssub.s32 %s25, 2
      %s32 = sadd.s32 %s25, 1
      %s33 = ssub.s32 %s25, %s32
      %p34 = scmp.eq.s32.totalorder %s33, 0
      %s36 = sadd.s32 %s35, 1
      %s37 = scalar_select %p34, %s35, %s36
      %p40 = pneg %p34
      %p41 = scmp.eq.s32.totalorder %s25, 3
      %p42 = por %p40, %p41
      %p43 = scmp.ne.s32.totalorder %s35, %s38
      %p44 = scmp.eq.s32.totalorder %s25, 0
      %p45 = por %p43, %p44
      %p46 = scmp.ne.s32.totalorder %s35, %s38
      %p47 = scmp.eq.s32.totalorder %s30, 3
      %p48 = por %p46, %p47
      %p49 = scmp.ne.s32.totalorder %s38, %s39
      %p50 = scmp.eq.s32.totalorder %s30, 0
      %p51 = por %p49, %p50
      %p52 = scmp.ne.s32.totalorder %s38, %s39
      %p53 = scmp.eq.s32.totalorder %s31, 3
      %p54 = por %p52, %p53
      %p56 = scmp.ne.s32.totalorder %s39, %s55
      %p57 = scmp.eq.s32.totalorder %s31, 0
      %p58 = por %p56, %p57
      %s59 = ssub.s32 %s25, %s32
      %p60 = scmp.eq.s32.totalorder %s59, 0
      %s62 = sadd.s32 %s61, 1
      %s63 = scalar_select %p60, %s61, %s62
      %p66 = pneg %p60
      %p67 = scmp.eq.s32.totalorder %s25, 3
      %p68 = por %p66, %p67
      %p69 = scmp.ne.s32.totalorder %s61, %s64
      %p70 = scmp.eq.s32.totalorder %s25, 0
      %p71 = por %p69, %p70
      %p72 = scmp.ne.s32.totalorder %s61, %s64
      %p73 = scmp.eq.s32.totalorder %s30, 3
      %p74 = por %p72, %p73
      %p75 = scmp.ne.s32.totalorder %s64, %s65
      %p76 = scmp.eq.s32.totalorder %s30, 0
      %p77 = por %p75, %p76
      %p78 = scmp.ne.s32.totalorder %s64, %s65
      %p79 = scmp.eq.s32.totalorder %s31, 3
      %p80 = por %p78, %p79
      %p82 = scmp.ne.s32.totalorder %s65, %s81
      %p83 = scmp.eq.s32.totalorder %s31, 0
      %p84 = por %p82, %p83
      %s85 = ssub.s32 %s25, %s32
      %p86 = scmp.eq.s32.totalorder %s85, 0
      %s88 = sadd.s32 %s87, 1
      %s89 = scalar_select %p86, %s87, %s88
      %p92 = pneg %p86
      %p93 = scmp.eq.s32.totalorder %s25, 3
      %p94 = por %p92, %p93
      %p95 = scmp.ne.s32.totalorder %s87, %s90
      %p96 = scmp.eq.s32.totalorder %s25, 0
      %p97 = por %p95, %p96
      %p98 = scmp.ne.s32.totalorder %s87, %s90
      %p99 = scmp.eq.s32.totalorder %s30, 3
      %p100 = por %p98, %p99
      %p101 = scmp.ne.s32.totalorder %s90, %s91
      %p102 = scmp.eq.s32.totalorder %s30, 0
      %p103 = por %p101, %p102
      %p104 = scmp.ne.s32.totalorder %s90, %s91
      %p105 = scmp.eq.s32.totalorder %s31, 3
      %p106 = por %p104, %p105
      %p108 = scmp.ne.s32.totalorder %s91, %s107
      %p109 = scmp.eq.s32.totalorder %s31, 0
      %p110 = por %p108, %p109
      %s111 = ssub.s32 %s25, %s32
      %p112 = scmp.eq.s32.totalorder %s111, 0
      %s114 = sadd.s32 %s113, 1
      %s115 = scalar_select %p112, %s113, %s114
      %p118 = pneg %p112
      %p119 = scmp.eq.s32.totalorder %s25, 3
      %p120 = por %p118, %p119
      %p121 = scmp.ne.s32.totalorder %s113, %s116
      %p122 = scmp.eq.s32.totalorder %s25, 0
      %p123 = por %p121, %p122
      %p124 = scmp.ne.s32.totalorder %s113, %s116
      %p125 = scmp.eq.s32.totalorder %s30, 3
      %p126 = por %p124, %p125
      %p127 = scmp.ne.s32.totalorder %s116, %s117
      %p128 = scmp.eq.s32.totalorder %s30, 0
      %p129 = por %p127, %p128
      %p130 = scmp.ne.s32.totalorder %s116, %s117
      %p131 = scmp.eq.s32.totalorder %s31, 3
      %p132 = por %p130, %p131
      %p134 = scmp.ne.s32.totalorder %s117, %s133
      %p135 = scmp.eq.s32.totalorder %s31, 0
      %p136 = por %p134, %p135
      %s138 = sadd.s32 %s137, 1
      %p141 = scmp.eq.s32.totalorder %s25, 3
      %p142 = scmp.ne.s32.totalorder %s137, %s139
      %p143 = scmp.eq.s32.totalorder %s25, 0
      %p144 = por %p142, %p143
      %p145 = scmp.ne.s32.totalorder %s137, %s139
      %p146 = scmp.eq.s32.totalorder %s30, 3
      %p147 = por %p145, %p146
      %p148 = scmp.ne.s32.totalorder %s139, %s140
      %p149 = scmp.eq.s32.totalorder %s30, 0
      %p150 = por %p148, %p149
      %p151 = scmp.ne.s32.totalorder %s139, %s140
      %p152 = scmp.eq.s32.totalorder %s31, 3
      %p153 = por %p151, %p152
      %p155 = scmp.ne.s32.totalorder %s140, %s154
      %p156 = scmp.eq.s32.totalorder %s31, 0
      %p157 = por %p155, %p156
      %s159 = sadd.s32 %s158, 1
      %p162 = scmp.eq.s32.totalorder %s25, 3
      %p163 = scmp.ne.s32.totalorder %s158, %s160
      %p164 = scmp.eq.s32.totalorder %s25, 0
      %p165 = por %p163, %p164
      %p166 = scmp.ne.s32.totalorder %s158, %s160
      %p167 = scmp.eq.s32.totalorder %s30, 3
      %p168 = por %p166, %p167
      %p169 = scmp.ne.s32.totalorder %s160, %s161
      %p170 = scmp.eq.s32.totalorder %s30, 0
      %p171 = por %p169, %p170
      %p172 = scmp.ne.s32.totalorder %s160, %s161
      %p173 = scmp.eq.s32.totalorder %s31, 3
      %p174 = por %p172, %p173
      %p176 = scmp.ne.s32.totalorder %s161, %s175
      %p177 = scmp.eq.s32.totalorder %s31, 0
      %p178 = por %p176, %p177
      %s180 = sadd.s32 %s179, 1
      %p183 = scmp.eq.s32.totalorder %s25, 3
      %p184 = scmp.ne.s32.totalorder %s179, %s181
      %p185 = scmp.eq.s32.totalorder %s25, 0
      %p186 = por %p184, %p185
      %p187 = scmp.ne.s32.totalorder %s179, %s181
      %p188 = scmp.eq.s32.totalorder %s30, 3
      %p189 = por %p187, %p188
      %p190 = scmp.ne.s32.totalorder %s181, %s182
      %p191 = scmp.eq.s32.totalorder %s30, 0
      %p192 = por %p190, %p191
      %p193 = scmp.ne.s32.totalorder %s181, %s182
      %p194 = scmp.eq.s32.totalorder %s31, 3
      %p195 = por %p193, %p194
      %p197 = scmp.ne.s32.totalorder %s182, %s196
      %p198 = scmp.eq.s32.totalorder %s31, 0
      %p199 = por %p197, %p198
      %s201 = sadd.s32 %s200, 1
      %p204 = scmp.eq.s32.totalorder %s25, 3
      %p205 = scmp.ne.s32.totalorder %s200, %s202
      %p206 = scmp.eq.s32.totalorder %s25, 0
      %p207 = por %p205, %p206
      %p208 = scmp.ne.s32.totalorder %s200, %s202
      %p209 = scmp.eq.s32.totalorder %s30, 3
      %p210 = por %p208, %p209
      %p211 = scmp.ne.s32.totalorder %s202, %s203
      %p212 = scmp.eq.s32.totalorder %s30, 0
      %p213 = por %p211, %p212
      %p214 = scmp.ne.s32.totalorder %s202, %s203
      %p215 = scmp.eq.s32.totalorder %s31, 3
      %p216 = por %p214, %p215
      %p218 = scmp.ne.s32.totalorder %s203, %s217
      %p219 = scmp.eq.s32.totalorder %s31, 0
      %p220 = por %p218, %p219
      %s222 = sadd.s32 %s221, 1
      %p225 = scmp.eq.s32.totalorder %s25, 3
      %p226 = scmp.ne.s32.totalorder %s221, %s223
      %p227 = scmp.eq.s32.totalorder %s25, 0
      %p228 = por %p226, %p227
      %p229 = scmp.ne.s32.totalorder %s221, %s223
      %p230 = scmp.eq.s32.totalorder %s30, 3
      %p231 = por %p229, %p230
      %p232 = scmp.ne.s32.totalorder %s223, %s224
      %p233 = scmp.eq.s32.totalorder %s30, 0
      %p234 = por %p232, %p233
      %p235 = scmp.ne.s32.totalorder %s223, %s224
      %p236 = scmp.eq.s32.totalorder %s31, 3
      %p237 = por %p235, %p236
      %p239 = scmp.ne.s32.totalorder %s224, %s238
      %p240 = scmp.eq.s32.totalorder %s31, 0
      %p241 = por %p239, %p240
      %s243 = sadd.s32 %s242, 1
      %p246 = scmp.eq.s32.totalorder %s25, 3
      %p247 = scmp.ne.s32.totalorder %s242, %s244
      %p248 = scmp.eq.s32.totalorder %s25, 0
      %p249 = por %p247, %p248
      %p250 = scmp.ne.s32.totalorder %s242, %s244
      %p251 = scmp.eq.s32.totalorder %s30, 3
      %p252 = por %p250, %p251
      %p253 = scmp.ne.s32.totalorder %s244, %s245
      %p254 = scmp.eq.s32.totalorder %s30, 0
      %p255 = por %p253, %p254
      %p256 = scmp.ne.s32.totalorder %s244, %s245
      %p257 = scmp.eq.s32.totalorder %s31, 3
      %p258 = por %p256, %p257
      %p260 = scmp.ne.s32.totalorder %s245, %s259
      %p261 = scmp.eq.s32.totalorder %s31, 0
      %p262 = por %p260, %p261
      %s264 = sadd.s32 %s263, 1
      %p267 = scmp.eq.s32.totalorder %s25, 3
      %p268 = scmp.ne.s32.totalorder %s263, %s265
      %p269 = scmp.eq.s32.totalorder %s25, 0
      %p270 = por %p268, %p269
      %p271 = scmp.ne.s32.totalorder %s263, %s265
      %p272 = scmp.eq.s32.totalorder %s30, 3
      %p273 = por %p271, %p272
      %p274 = scmp.ne.s32.totalorder %s265, %s266
      %p275 = scmp.eq.s32.totalorder %s30, 0
      %p276 = por %p274, %p275
      %p277 = scmp.ne.s32.totalorder %s265, %s266
      %p278 = scmp.eq.s32.totalorder %s31, 3
      %p279 = por %p277, %p278
      %p281 = scmp.ne.s32.totalorder %s266, %s280
      %p282 = scmp.eq.s32.totalorder %s31, 0
      %p283 = por %p281, %p282
      %s285 = sadd.s32 %s284, 1
      %p288 = scmp.eq.s32.totalorder %s25, 3
      %p289 = scmp.ne.s32.totalorder %s284, %s286
      %p290 = scmp.eq.s32.totalorder %s25, 0
      %p291 = por %p289, %p290
      %p292 = scmp.ne.s32.totalorder %s284, %s286
      %p293 = scmp.eq.s32.totalorder %s30, 3
      %p294 = por %p292, %p293
      %p295 = scmp.ne.s32.totalorder %s286, %s287
      %p296 = scmp.eq.s32.totalorder %s30, 0
      %p297 = por %p295, %p296
      %p298 = scmp.ne.s32.totalorder %s286, %s287
      %p299 = scmp.eq.s32.totalorder %s31, 3
      %p300 = por %p298, %p299
      %p302 = scmp.ne.s32.totalorder %s287, %s301
      %p303 = scmp.eq.s32.totalorder %s31, 0
      %p304 = por %p302, %p303
      %s306 = sadd.s32 %s305, 1
      %p309 = scmp.eq.s32.totalorder %s25, 3
      %p310 = scmp.ne.s32.totalorder %s305, %s307
      %p311 = scmp.eq.s32.totalorder %s25, 0
      %p312 = por %p310, %p311
      %p313 = scmp.ne.s32.totalorder %s305, %s307
      %p314 = scmp.eq.s32.totalorder %s30, 3
      %p315 = por %p313, %p314
      %p316 = scmp.ne.s32.totalorder %s307, %s308
      %p317 = scmp.eq.s32.totalorder %s30, 0
      %p318 = por %p316, %p317
      %p319 = scmp.ne.s32.totalorder %s307, %s308
      %p320 = scmp.eq.s32.totalorder %s31, 3
      %p321 = por %p319, %p320
      %p323 = scmp.ne.s32.totalorder %s308, %s322
      %p324 = scmp.eq.s32.totalorder %s31, 0
      %p325 = por %p323, %p324
      %s327 = sadd.s32 %s326, 1
      %p330 = scmp.eq.s32.totalorder %s25, 3
      %p331 = scmp.ne.s32.totalorder %s326, %s328
      %p332 = scmp.eq.s32.totalorder %s25, 0
      %p333 = por %p331, %p332
      %p334 = scmp.ne.s32.totalorder %s326, %s328
      %p335 = scmp.eq.s32.totalorder %s30, 3
      %p336 = por %p334, %p335
      %p337 = scmp.ne.s32.totalorder %s328, %s329
      %p338 = scmp.eq.s32.totalorder %s30, 0
      %p339 = por %p337, %p338
      %p340 = scmp.ne.s32.totalorder %s328, %s329
      %p341 = scmp.eq.s32.totalorder %s31, 3
      %p342 = por %p340, %p341
      %p344 = scmp.ne.s32.totalorder %s329, %s343
      %p345 = scmp.eq.s32.totalorder %s31, 0
      %p346 = por %p344, %p345
      %s347 = ssub.s32 %s25, %s32
      %p348 = scmp.eq.s32.totalorder %s347, 0
      %s350 = sadd.s32 %s349, 1
      %s351 = scalar_select %p348, %s349, %s350
      %p354 = pneg %p348
      %p355 = scmp.eq.s32.totalorder %s25, 3
      %p356 = por %p354, %p355
      %p357 = scmp.ne.s32.totalorder %s349, %s352
      %p358 = scmp.eq.s32.totalorder %s25, 0
      %p359 = por %p357, %p358
      %p360 = scmp.ne.s32.totalorder %s349, %s352
      %p361 = scmp.eq.s32.totalorder %s30, 3
      %p362 = por %p360, %p361
      %p363 = scmp.ne.s32.totalorder %s352, %s353
      %p364 = scmp.eq.s32.totalorder %s30, 0
      %p365 = por %p363, %p364
      %p366 = scmp.ne.s32.totalorder %s352, %s353
      %p367 = scmp.eq.s32.totalorder %s31, 3
      %p368 = por %p366, %p367
      %p370 = scmp.ne.s32.totalorder %s353, %s369
      %p371 = scmp.eq.s32.totalorder %s31, 0
      %p372 = por %p370, %p371
      %s373 = ssub.s32 %s25, %s32
      %p374 = scmp.eq.s32.totalorder %s373, 0
      %s376 = sadd.s32 %s375, 1
      %s377 = scalar_select %p374, %s375, %s376
      %p380 = pneg %p374
      %p381 = scmp.eq.s32.totalorder %s25, 3
      %p382 = por %p380, %p381
      %p383 = scmp.ne.s32.totalorder %s375, %s378
      %p384 = scmp.eq.s32.totalorder %s25, 0
      %p385 = por %p383, %p384
      %p386 = scmp.ne.s32.totalorder %s375, %s378
      %p387 = scmp.eq.s32.totalorder %s30, 3
      %p388 = por %p386, %p387
      %p389 = scmp.ne.s32.totalorder %s378, %s379
      %p390 = scmp.eq.s32.totalorder %s30, 0
      %p391 = por %p389, %p390
      %p392 = scmp.ne.s32.totalorder %s378, %s379
      %p393 = scmp.eq.s32.totalorder %s31, 3
      %p394 = por %p392, %p393
      %p396 = scmp.ne.s32.totalorder %s379, %s395
      %p397 = scmp.eq.s32.totalorder %s31, 0
      %p398 = por %p396, %p397
      %p399 = scmp.le.s32.totalorder 1, %s25
      %p400 = scmp.lt.s32.totalorder %s25, 5
      %p401 = pnand %p399, %p400
      %p402 = pneg %p401
      // Predicated region
      $region9: #{tpu_custom_call.1} parent=5 // pred_check
        _
      $region10: #{tpu_custom_call.1} parent=5 // pred_check_branch
        %404 = sbr.rel (%p401) target = $region12
      $region11: #{tpu_custom_call.1} parent=5 // pred_region
        %s405 = ssub.s32 %s25, 1
        // Predicated region
        $region13: #{tpu_custom_call.1} parent=11 // pred_check
          %p406 = pneg %p150
        $region14: #{tpu_custom_call.1} parent=11 // pred_check_branch
          %408 = sbr.rel (%p406) target = $region16
        $region15: #{tpu_custom_call.1} parent=11 // pred_region
          _
        $region16: #{tpu_custom_call.1} parent=11 // pred_fallthru
          _
        // Predicated region
        $region17: #{tpu_custom_call.1} parent=11 // pred_check
          %p409 = pneg %p171
        $region18: #{tpu_custom_call.1} parent=11 // pred_check_branch
          %411 = sbr.rel (%p409) target = $region20
        $region19: #{tpu_custom_call.1} parent=11 // pred_region
          _
        $region20: #{tpu_custom_call.1} parent=11 // pred_fallthru
          _
        // Predicated region
        $region21: #{tpu_custom_call.1} parent=11 // pred_check
          %p412 = pneg %p192
        $region22: #{tpu_custom_call.1} parent=11 // pred_check_branch
          %414 = sbr.rel (%p412) target = $region24
        $region23: #{tpu_custom_call.1} parent=11 // pred_region
          _
        $region24: #{tpu_custom_call.1} parent=11 // pred_fallthru
          _
        // Predicated region
        $region25: #{tpu_custom_call.1} parent=11 // pred_check
          %p415 = pneg %p213
        $region26: #{tpu_custom_call.1} parent=11 // pred_check_branch
          %417 = sbr.rel (%p415) target = $region28
        $region27: #{tpu_custom_call.1} parent=11 // pred_region
          _
        $region28: #{tpu_custom_call.1} parent=11 // pred_fallthru
          _
        // Predicated region
        $region29: #{tpu_custom_call.1} parent=11 // pred_check
          %p418 = pneg %p234
        $region30: #{tpu_custom_call.1} parent=11 // pred_check_branch
          %420 = sbr.rel (%p418) target = $region32
        $region31: #{tpu_custom_call.1} parent=11 // pred_region
          _
        $region32: #{tpu_custom_call.1} parent=11 // pred_fallthru
          _
        // Predicated region
        $region33: #{tpu_custom_call.1} parent=11 // pred_check
          %p421 = pneg %p255
        $region34: #{tpu_custom_call.1} parent=11 // pred_check_branch
          %423 = sbr.rel (%p421) target = $region36
        $region35: #{tpu_custom_call.1} parent=11 // pred_region
          _
        $region36: #{tpu_custom_call.1} parent=11 // pred_fallthru
          _
        // Predicated region
        $region37: #{tpu_custom_call.1} parent=11 // pred_check
          %p424 = pneg %p276
        $region38: #{tpu_custom_call.1} parent=11 // pred_check_branch
          %426 = sbr.rel (%p424) target = $region40
        $region39: #{tpu_custom_call.1} parent=11 // pred_region
          _
        $region40: #{tpu_custom_call.1} parent=11 // pred_fallthru
          _
        // Predicated region
        $region41: #{tpu_custom_call.1} parent=11 // pred_check
          %p427 = pneg %p297
        $region42: #{tpu_custom_call.1} parent=11 // pred_check_branch
          %429 = sbr.rel (%p427) target = $region44
        $region43: #{tpu_custom_call.1} parent=11 // pred_region
          _
        $region44: #{tpu_custom_call.1} parent=11 // pred_fallthru
          _
        // Predicated region
        $region45: #{tpu_custom_call.1} parent=11 // pred_check
          %p430 = pneg %p318
        $region46: #{tpu_custom_call.1} parent=11 // pred_check_branch
          %432 = sbr.rel (%p430) target = $region48
        $region47: #{tpu_custom_call.1} parent=11 // pred_region
          _
        $region48: #{tpu_custom_call.1} parent=11 // pred_fallthru
          _
        // Predicated region
        $region49: #{tpu_custom_call.1} parent=11 // pred_check
          %p433 = pneg %p339
        $region50: #{tpu_custom_call.1} parent=11 // pred_check_branch
          %435 = sbr.rel (%p433) target = $region52
        $region51: #{tpu_custom_call.1} parent=11 // pred_region
          _
        $region52: #{tpu_custom_call.1} parent=11 // pred_fallthru
          _
      $region12: #{tpu_custom_call.1} parent=5 // pred_fallthru
        _
      %p436 = scmp.lt.s32.totalorder %s25, 4
      // Predicated region
      $region53: #{tpu_custom_call.1} parent=5 // pred_check
        %p437 = pneg %p436
      $region54: #{tpu_custom_call.1} parent=5 // pred_check_branch
        %439 = sbr.rel (%p437) target = $region56
      $region55: #{tpu_custom_call.1} parent=5 // pred_region
        // Predicated region
        $region57: #{tpu_custom_call.1} parent=55 // pred_check
          %p440 = pneg %p45
        $region58: #{tpu_custom_call.1} parent=55 // pred_check_branch
          %442 = sbr.rel (%p440) target = $region60
        $region59: #{tpu_custom_call.1} parent=55 // pred_region
          %p443 = scmp.lt.s32.totalorder %s25, 3
          %s444 = scalar_select %p443, %s25, 3
          %s445 = smul.addr %s444, 4
          %s446 = scalar_lea.vmem %s0, %s445
        $region60: #{tpu_custom_call.1} parent=55 // pred_fallthru
          _
        // Predicated region
        $region61: #{tpu_custom_call.1} parent=55 // pred_check
          %p447 = pneg %p71
        $region62: #{tpu_custom_call.1} parent=55 // pred_check_branch
          %449 = sbr.rel (%p447) target = $region64
        $region63: #{tpu_custom_call.1} parent=55 // pred_region
          %s450 = smul.u32 16, %s25
          %p451 = scmp.lt.s32.totalorder %s450, 63
          %s452 = scalar_select %p451, %s450, 63
          %s453 = smul.addr %s452, 4
          %s454 = scalar_lea.vmem %s1, %s453
          %s455 = smul.u32 16, %s25
        $region64: #{tpu_custom_call.1} parent=55 // pred_fallthru
          _
        // Predicated region
        $region65: #{tpu_custom_call.1} parent=55 // pred_check
          %p456 = pneg %p97
        $region66: #{tpu_custom_call.1} parent=55 // pred_check_branch
          %458 = sbr.rel (%p456) target = $region68
        $region67: #{tpu_custom_call.1} parent=55 // pred_region
          %s459 = smul.u32 16, %s25
          %p460 = scmp.lt.s32.totalorder %s459, 63
          %s461 = scalar_select %p460, %s459, 63
          %s462 = smul.addr %s461, 4
          %s463 = scalar_lea.vmem %s2, %s462
          %s464 = smul.u32 16, %s25
        $region68: #{tpu_custom_call.1} parent=55 // pred_fallthru
          _
        // Predicated region
        $region69: #{tpu_custom_call.1} parent=55 // pred_check
          %p465 = pneg %p123
        $region70: #{tpu_custom_call.1} parent=55 // pred_check_branch
          %467 = sbr.rel (%p465) target = $region72
        $region71: #{tpu_custom_call.1} parent=55 // pred_region
          %s468 = smul.u32 8, %s25
          %p469 = scmp.lt.s32.totalorder %s468, 31
          %s470 = scalar_select %p469, %s468, 31
          %s471 = smul.addr %s470, 2
          %s472 = scalar_lea.vmem %s3, %s471
          %s473 = smul.u32 8, %s25
        $region72: #{tpu_custom_call.1} parent=55 // pred_fallthru
          _
      $region56: #{tpu_custom_call.1} parent=5 // pred_fallthru
        _
      %p474 = scmp.le.s32.totalorder 1, %s25
      %p475 = scmp.lt.s32.totalorder %s25, 5
      %p476 = pnand %p474, %p475
      %p477 = pneg %p476
      // Predicated region
      $region73: #{tpu_custom_call.1} parent=5 // pred_check
        _
      $region74: #{tpu_custom_call.1} parent=5 // pred_check_branch
        %479 = sbr.rel (%p476) target = $region76
      $region75: #{tpu_custom_call.1} parent=5 // pred_region
        %s480 = ssub.s32 %s25, 1
        %p481 = scmp.lt.s32.totalorder %s30, 3
        %s482 = scalar_select %p481, %s30, 3
        %s483 = smul.addr %s482, 4
        %s484 = scalar_lea.vmem %s0, %s483
        %p485 = pneg %p51
        %p486 = pneg %p48
        %s487 = smul.u32 16, %s30
        %p488 = scmp.lt.s32.totalorder %s487, 63
        %s489 = scalar_select %p488, %s487, 63
        %s490 = smul.addr %s489, 4
        %s491 = scalar_lea.vmem %s1, %s490
        %p492 = pneg %p77
        %p493 = pneg %p74
        %s494 = smul.u32 16, %s30
        %p495 = scmp.lt.s32.totalorder %s494, 63
        %s496 = scalar_select %p495, %s494, 63
        %s497 = smul.addr %s496, 4
        %s498 = scalar_lea.vmem %s2, %s497
        %p499 = pneg %p103
        %p500 = pneg %p100
        %s501 = smul.u32 8, %s30
        %p502 = scmp.lt.s32.totalorder %s501, 31
        %s503 = scalar_select %p502, %s501, 31
        %s504 = smul.addr %s503, 2
        %s505 = scalar_lea.vmem %s3, %s504
        %p506 = pneg %p129
        %p507 = pneg %p126
        %p508 = pneg %p150
        %p509 = pneg %p147
        %p510 = pneg %p171
        %p511 = pneg %p168
        %p512 = pneg %p192
        %p513 = pneg %p189
        %p514 = pneg %p213
        %p515 = pneg %p210
        %p516 = pneg %p234
        %p517 = pneg %p231
        %p518 = pneg %p255
        %p519 = pneg %p252
        %p520 = pneg %p276
        %p521 = pneg %p273
        %p522 = pneg %p297
        %p523 = pneg %p294
        %p524 = pneg %p318
        %p525 = pneg %p315
        %p526 = pneg %p339
        %p527 = pneg %p336
        %p528 = pneg %p365
        %p529 = pneg %p362
        %s530 = sand.u32 %s352, 1
        %s531 = scalar_lea.sflag [#allocation3], %s530
        %s532 = sand.u32 %s352, 1
        %s533 = smul.addr %s532, 8
        %s534 = scalar_lea.vmem [#allocation2], %s533
        %p535 = pneg %p391
        %p536 = pneg %p388
        %s537 = smul.u32 8, %s30
        %p538 = scmp.lt.s32.totalorder %s537, 31
        %s539 = scalar_select %p538, %s537, 31
        %s540 = smul.addr %s539, 4
        %s541 = scalar_lea.vmem %s15, %s540
        %p542 = scmp.lt.s32.totalorder %s30, 3
        %s543 = scalar_select %p542, %s30, 3
        %s544 = smul.addr %s543, 4
        %s545 = scalar_lea.vmem %s0, %s544
        %s546 = smul.u32 16, %s30
        %p547 = scmp.lt.s32.totalorder %s546, 63
        %s548 = scalar_select %p547, %s546, 63
        %s549 = smul.addr %s548, 4
        %s550 = scalar_lea.vmem %s1, %s549
        %s551 = smul.u32 16, %s30
        %s552 = smul.u32 16, %s30
        %p553 = scmp.lt.s32.totalorder %s552, 63
        %s554 = scalar_select %p553, %s552, 63
        %s555 = smul.addr %s554, 4
        %s556 = scalar_lea.vmem %s2, %s555
        %s557 = smul.u32 16, %s30
        %s558 = smul.u32 8, %s30
        %p559 = scmp.lt.s32.totalorder %s558, 31
        %s560 = scalar_select %p559, %s558, 31
        %s561 = smul.addr %s560, 2
        %s562 = scalar_lea.vmem %s3, %s561
        %s563 = smul.u32 8, %s30
        %s564 = smul.u32 8, %s30
        %p565 = scmp.lt.s32.totalorder %s564, 31
        %s566 = scalar_select %p565, %s564, 31
        %s567 = smul.addr %s566, 4
        %s568 = scalar_lea.vmem %s15, %s567
        %s569 = smul.u32 8, %s30
        %v571 = vld [vmem:[%s545] sm:$0xf]
        %v572 = vld [vmem:[%s4] sm:$0xf]
        %v573 = vld [vmem:[%s4 + $0x4] sm:$0xf]
        %v574 = vld [vmem:[%s4 + $0x8] sm:$0xf]
        %v575 = vld [vmem:[%s4 + $0xc] sm:$0xf]
        %v576 = vld [vmem:[%s5] sm:$0x1]
        %v578 = vlaneseq
        %v579 = vshrl.u32 %v578, 7
        %v580 = vsub.s32 0, %v579
        %v581 = vrot.slane %v576, %v580
        %v587 = vunpack.c.l.b16 %v572
        %v588 = vunpack.c.l.b16 %v573
        %v589 = vunpack.c.l.b16 %v574
        %v590 = vunpack.c.l.b16 %v575
        %v591 = vpack.c.b16 %v588, %v587
        %v592 = vpack.c.b16 %v590, %v589
        %vm593 = vcmask 261120
        %v595 = vsel %vm593, %v571, 0
        %v598 = vsel %vm593, %v591, 0
        %v601 = vsel %vm593, %v592, 0
        %603 = vmatprep.subr.bf16.mxu0 0
        %604 = vmatpush1.bf16.xpose.msra.mxu0 %v598
        %605 = vmatprep.subr.bf16.mxu0 0
        %606 = vmatpush1.bf16.xpose.msra.mxu0 %v601
        %607 = vmatprep.subr.bf16.mxu0 0
        %608 = vmatpush1.bf16.xpose.msra.mxu0 0
        %609 = vmatprep.subr.bf16.mxu0 0
        %610 = vmatpush1.bf16.xpose.msra.mxu0 0
        %611 = vmatprep.subr.bf16.mxu0 0
        %612 = vmatpush1.bf16.xpose.msra.mxu0 0
        %613 = vmatprep.subr.bf16.mxu0 0
        %614 = vmatpush1.bf16.xpose.msra.mxu0 0
        %615 = vmatprep.subr.bf16.mxu0 0
        %616 = vmatpush1.bf16.xpose.msra.mxu0 0
        %617 = vmatprep.subr.bf16.mxu0 0
        %618 = vmatpush1.bf16.xpose.msra.mxu0 0
        %619 = vmatprep.subr.bf16.mxu0 0
        %620 = vmatpush1.bf16.xpose.msra.mxu0 0
        %621 = vmatprep.subr.bf16.mxu0 0
        %622 = vmatpush1.bf16.xpose.msra.mxu0 0
        %623 = vmatprep.subr.bf16.mxu0 0
        %624 = vmatpush1.bf16.xpose.msra.mxu0 0
        %625 = vmatprep.subr.bf16.mxu0 0
        %626 = vmatpush1.bf16.xpose.msra.mxu0 0
        %627 = vmatprep.subr.bf16.mxu0 0
        %628 = vmatpush1.bf16.xpose.msra.mxu0 0
        %629 = vmatprep.subr.bf16.mxu0 0
        %630 = vmatpush1.bf16.xpose.msra.mxu0 0
        %631 = vmatprep.subr.bf16.mxu0 0
        %632 = vmatpush1.bf16.xpose.msra.mxu0 0
        %633 = vmatprep.subr.bf16.mxu0 0
        %634 = vmatpush1.bf16.xpose.msra.mxu0 0
        %635 = vmatprep.mubr.bf16.mxu0 0
        %636 = vmatmul.mubr.bf16.gmra.mrb[0].mxu0 %v595
        %v637 = vpop.f32.mrb[0].mxu0
        %v638 = vadd.f32 %v581, %v637
        %v639 = vpop.f32.mrb[0].mxu0
        %v640 = vpop.f32.mrb[0].mxu0
        %v641 = vpop.f32.mrb[0].mxu0
        %642 = vdwg.mxu0
        %v643 = vld [vmem:[%s550] sm:$0xf]
        %v644 = vld [vmem:[%s550 + $0x4] sm:$0xf]
        %v645 = vld [vmem:[%s550 + $0x8] sm:$0xf]
        %v646 = vld [vmem:[%s550 + $0xc] sm:$0xf]
        %v647 = vld [vmem:[%s550 + $0x10] sm:$0xf]
        %v648 = vld [vmem:[%s550 + $0x14] sm:$0xf]
        %v649 = vld [vmem:[%s550 + $0x18] sm:$0xf]
        %v650 = vld [vmem:[%s550 + $0x1c] sm:$0xf]
        %v651 = vld [vmem:[%s550 + $0x20] sm:$0xf]
        %v652 = vld [vmem:[%s550 + $0x24] sm:$0xf]
        %v653 = vld [vmem:[%s550 + $0x28] sm:$0xf]
        %v654 = vld [vmem:[%s550 + $0x2c] sm:$0xf]
        %v655 = vld [vmem:[%s550 + $0x30] sm:$0xf]
        %v656 = vld [vmem:[%s550 + $0x34] sm:$0xf]
        %v657 = vld [vmem:[%s550 + $0x38] sm:$0xf]
        %v658 = vld [vmem:[%s550 + $0x3c] sm:$0xf]
        %v659 = vld [vmem:[%s6] sm:$0xf]
        %v660 = vld [vmem:[%s6 + $0x4] sm:$0xf]
        %v661 = vld [vmem:[%s6 + $0x8] sm:$0xf]
        %v662 = vld [vmem:[%s6 + $0xc] sm:$0xf]
        %v663 = vld [vmem:[%s7] sm:$0x1]
        %v665 = vlaneseq
        %v666 = vshrl.u32 %v665, 7
        %v667 = vsub.s32 0, %v666
        %v668 = vrot.slane %v663, %v667
        %v686 = vunpack.c.l.b16 %v643
        %v687 = vunpack.c.l.b16 %v644
        %v688 = vunpack.c.l.b16 %v645
        %v689 = vunpack.c.l.b16 %v646
        %v690 = vunpack.c.l.b16 %v647
        %v691 = vunpack.c.l.b16 %v648
        %v692 = vunpack.c.l.b16 %v649
        %v693 = vunpack.c.l.b16 %v650
        %v694 = vunpack.c.l.b16 %v651
        %v695 = vunpack.c.l.b16 %v652
        %v696 = vunpack.c.l.b16 %v653
        %v697 = vunpack.c.l.b16 %v654
        %v698 = vunpack.c.l.b16 %v655
        %v699 = vunpack.c.l.b16 %v656
        %v700 = vunpack.c.l.b16 %v657
        %v701 = vunpack.c.l.b16 %v658
        %v702 = vpack.c.b16 %v687, %v686
        %v703 = vpack.c.b16 %v689, %v688
        %v704 = vpack.c.b16 %v691, %v690
        %v705 = vpack.c.b16 %v693, %v692
        %v706 = vpack.c.b16 %v695, %v694
        %v707 = vpack.c.b16 %v697, %v696
        %v708 = vpack.c.b16 %v699, %v698
        %v709 = vpack.c.b16 %v701, %v700
        %v714 = vunpack.c.l.b16 %v659
        %v715 = vunpack.c.l.b16 %v660
        %v716 = vunpack.c.l.b16 %v661
        %v717 = vunpack.c.l.b16 %v662
        %v718 = vpack.c.b16 %v715, %v714
        %v719 = vpack.c.b16 %v717, %v716
        %v721 = vsel %vm593, %v702, 0
        %v724 = vsel %vm593, %v703, 0
        %v727 = vsel %vm593, %v704, 0
        %v730 = vsel %vm593, %v705, 0
        %v733 = vsel %vm593, %v706, 0
        %v736 = vsel %vm593, %v707, 0
        %v739 = vsel %vm593, %v708, 0
        %v742 = vsel %vm593, %v709, 0
        %v745 = vsel %vm593, %v718, 0
        %v748 = vsel %vm593, %v719, 0
        %750 = vmatprep.subr.bf16.mxu0 0
        %751 = vmatpush1.bf16.xpose.msra.mxu0 %v745
        %752 = vmatprep.subr.bf16.mxu0 0
        %753 = vmatpush1.bf16.xpose.msra.mxu0 %v748
        %754 = vmatprep.subr.bf16.mxu0 0
        %755 = vmatpush1.bf16.xpose.msra.mxu0 0
        %756 = vmatprep.subr.bf16.mxu0 0
        %757 = vmatpush1.bf16.xpose.msra.mxu0 0
        %758 = vmatprep.subr.bf16.mxu0 0
        %759 = vmatpush1.bf16.xpose.msra.mxu0 0
        %760 = vmatprep.subr.bf16.mxu0 0
        %761 = vmatpush1.bf16.xpose.msra.mxu0 0
        %762 = vmatprep.subr.bf16.mxu0 0
        %763 = vmatpush1.bf16.xpose.msra.mxu0 0
        %764 = vmatprep.subr.bf16.mxu0 0
        %765 = vmatpush1.bf16.xpose.msra.mxu0 0
        %766 = vmatprep.subr.bf16.mxu0 0
        %767 = vmatpush1.bf16.xpose.msra.mxu0 0
        %768 = vmatprep.subr.bf16.mxu0 0
        %769 = vmatpush1.bf16.xpose.msra.mxu0 0
        %770 = vmatprep.subr.bf16.mxu0 0
        %771 = vmatpush1.bf16.xpose.msra.mxu0 0
        %772 = vmatprep.subr.bf16.mxu0 0
        %773 = vmatpush1.bf16.xpose.msra.mxu0 0
        %774 = vmatprep.subr.bf16.mxu0 0
        %775 = vmatpush1.bf16.xpose.msra.mxu0 0
        %776 = vmatprep.subr.bf16.mxu0 0
        %777 = vmatpush1.bf16.xpose.msra.mxu0 0
        %778 = vmatprep.subr.bf16.mxu0 0
        %779 = vmatpush1.bf16.xpose.msra.mxu0 0
        %780 = vmatprep.subr.bf16.mxu0 0
        %781 = vmatpush1.bf16.xpose.msra.mxu0 0
        %782 = vmatprep.mubr.bf16.mxu0 0
        %783 = vmatmul.mubr.bf16.gmra.mrb[0].mxu0 %v721
        %v784 = vpop.f32.mrb[0].mxu0
        %v785 = vadd.f32 %v668, %v784
        %v786 = vpop.f32.mrb[0].mxu0
        %v787 = vpop.f32.mrb[0].mxu0
        %v788 = vadd.f32 %v668, %v787
        %v789 = vpop.f32.mrb[0].mxu0
        %790 = vmatprep.mubr.bf16.mxu0 0
        %791 = vmatmul.mubr.bf16.gmra.mrb[0].mxu0 %v724
        %v792 = vpop.f32.mrb[0].mxu0
        %v793 = vadd.f32 %v668, %v792
        %v794 = vpop.f32.mrb[0].mxu0
        %v795 = vpop.f32.mrb[0].mxu0
        %v796 = vadd.f32 %v668, %v795
        %v797 = vpop.f32.mrb[0].mxu0
        %798 = vmatprep.mubr.bf16.mxu0 0
        %799 = vmatmul.mubr.bf16.gmra.mrb[0].mxu0 %v727
        %v800 = vpop.f32.mrb[0].mxu0
        %v801 = vadd.f32 %v668, %v800
        %v802 = vpop.f32.mrb[0].mxu0
        %v803 = vpop.f32.mrb[0].mxu0
        %v804 = vadd.f32 %v668, %v803
        %v805 = vpop.f32.mrb[0].mxu0
        %806 = vmatprep.mubr.bf16.mxu0 0
        %807 = vmatmul.mubr.bf16.gmra.mrb[0].mxu0 %v730
        %v808 = vpop.f32.mrb[0].mxu0
        %v809 = vadd.f32 %v668, %v808
        %v810 = vpop.f32.mrb[0].mxu0
        %v811 = vpop.f32.mrb[0].mxu0
        %v812 = vadd.f32 %v668, %v811
        %v813 = vpop.f32.mrb[0].mxu0
        %814 = vmatprep.mubr.bf16.mxu0 0
        %815 = vmatmul.mubr.bf16.gmra.mrb[0].mxu0 %v733
        %v816 = vpop.f32.mrb[0].mxu0
        %v817 = vadd.f32 %v668, %v816
        %v818 = vpop.f32.mrb[0].mxu0
        %v819 = vpop.f32.mrb[0].mxu0
        %v820 = vadd.f32 %v668, %v819
        %v821 = vpop.f32.mrb[0].mxu0
        %822 = vmatprep.mubr.bf16.mxu0 0
        %823 = vmatmul.mubr.bf16.gmra.mrb[0].mxu0 %v736
        %v824 = vpop.f32.mrb[0].mxu0
        %v825 = vadd.f32 %v668, %v824
        %v826 = vpop.f32.mrb[0].mxu0
        %v827 = vpop.f32.mrb[0].mxu0
        %v828 = vadd.f32 %v668, %v827
        %v829 = vpop.f32.mrb[0].mxu0
        %830 = vmatprep.mubr.bf16.mxu0 0
        %831 = vmatmul.mubr.bf16.gmra.mrb[0].mxu0 %v739
        %v832 = vpop.f32.mrb[0].mxu0
        %v833 = vadd.f32 %v668, %v832
        %v834 = vpop.f32.mrb[0].mxu0
        %v835 = vpop.f32.mrb[0].mxu0
        %v836 = vadd.f32 %v668, %v835
        %v837 = vpop.f32.mrb[0].mxu0
        %838 = vmatprep.mubr.bf16.mxu0 0
        %839 = vmatmul.mubr.bf16.gmra.mrb[0].mxu0 %v742
        %v840 = vpop.f32.mrb[0].mxu0
        %v841 = vadd.f32 %v668, %v840
        %v842 = vpop.f32.mrb[0].mxu0
        %v843 = vpop.f32.mrb[0].mxu0
        %v844 = vadd.f32 %v668, %v843
        %v845 = vpop.f32.mrb[0].mxu0
        %846 = vdwg.mxu0
        %v847 = vld [vmem:[%s556] sm:$0xf]
        %v848 = vld [vmem:[%s556 + $0x4] sm:$0xf]
        %v849 = vld [vmem:[%s556 + $0x8] sm:$0xf]
        %v850 = vld [vmem:[%s556 + $0xc] sm:$0xf]
        %v851 = vld [vmem:[%s556 + $0x10] sm:$0xf]
        %v852 = vld [vmem:[%s556 + $0x14] sm:$0xf]
        %v853 = vld [vmem:[%s556 + $0x18] sm:$0xf]
        %v854 = vld [vmem:[%s556 + $0x1c] sm:$0xf]
        %v855 = vld [vmem:[%s556 + $0x20] sm:$0xf]
        %v856 = vld [vmem:[%s556 + $0x24] sm:$0xf]
        %v857 = vld [vmem:[%s556 + $0x28] sm:$0xf]
        %v858 = vld [vmem:[%s556 + $0x2c] sm:$0xf]
        %v859 = vld [vmem:[%s556 + $0x30] sm:$0xf]
        %v860 = vld [vmem:[%s556 + $0x34] sm:$0xf]
        %v861 = vld [vmem:[%s556 + $0x38] sm:$0xf]
        %v862 = vld [vmem:[%s556 + $0x3c] sm:$0xf]
        %v863 = vld [vmem:[%s8] sm:$0xf]
        %v864 = vld [vmem:[%s8 + $0x4] sm:$0xf]
        %v865 = vld [vmem:[%s8 + $0x8] sm:$0xf]
        %v866 = vld [vmem:[%s8 + $0xc] sm:$0xf]
        %v867 = vld [vmem:[%s9] sm:$0x1]
        %v869 = vlaneseq
        %v870 = vshrl.u32 %v869, 7
        %v871 = vsub.s32 0, %v870
        %v872 = vrot.slane %v867, %v871
        %v890 = vunpack.c.l.b16 %v847
        %v891 = vunpack.c.l.b16 %v848
        %v892 = vunpack.c.l.b16 %v849
        %v893 = vunpack.c.l.b16 %v850
        %v894 = vunpack.c.l.b16 %v851
        %v895 = vunpack.c.l.b16 %v852
        %v896 = vunpack.c.l.b16 %v853
        %v897 = vunpack.c.l.b16 %v854
        %v898 = vunpack.c.l.b16 %v855
        %v899 = vunpack.c.l.b16 %v856
        %v900 = vunpack.c.l.b16 %v857
        %v901 = vunpack.c.l.b16 %v858
        %v902 = vunpack.c.l.b16 %v859
        %v903 = vunpack.c.l.b16 %v860
        %v904 = vunpack.c.l.b16 %v861
        %v905 = vunpack.c.l.b16 %v862
        %v906 = vpack.c.b16 %v891, %v890
        %v907 = vpack.c.b16 %v893, %v892
        %v908 = vpack.c.b16 %v895, %v894
        %v909 = vpack.c.b16 %v897, %v896
        %v910 = vpack.c.b16 %v899, %v898
        %v911 = vpack.c.b16 %v901, %v900
        %v912 = vpack.c.b16 %v903, %v902
        %v913 = vpack.c.b16 %v905, %v904
        %v918 = vunpack.c.l.b16 %v863
        %v919 = vunpack.c.l.b16 %v864
        %v920 = vunpack.c.l.b16 %v865
        %v921 = vunpack.c.l.b16 %v866
        %v922 = vpack.c.b16 %v919, %v918
        %v923 = vpack.c.b16 %v921, %v920
        %v925 = vsel %vm593, %v906, 0
        %v928 = vsel %vm593, %v907, 0
        %v931 = vsel %vm593, %v908, 0
        %v934 = vsel %vm593, %v909, 0
        %v937 = vsel %vm593, %v910, 0
        %v940 = vsel %vm593, %v911, 0
        %v943 = vsel %vm593, %v912, 0
        %v946 = vsel %vm593, %v913, 0
        %v949 = vsel %vm593, %v922, 0
        %v952 = vsel %vm593, %v923, 0
        %954 = vmatprep.subr.bf16.mxu0 0
        %955 = vmatpush1.bf16.xpose.msra.mxu0 %v949
        %956 = vmatprep.subr.bf16.mxu0 0
        %957 = vmatpush1.bf16.xpose.msra.mxu0 %v952
        %958 = vmatprep.subr.bf16.mxu0 0
        %959 = vmatpush1.bf16.xpose.msra.mxu0 0
        %960 = vmatprep.subr.bf16.mxu0 0
        %961 = vmatpush1.bf16.xpose.msra.mxu0 0
        %962 = vmatprep.subr.bf16.mxu0 0
        %963 = vmatpush1.bf16.xpose.msra.mxu0 0
        %964 = vmatprep.subr.bf16.mxu0 0
        %965 = vmatpush1.bf16.xpose.msra.mxu0 0
        %966 = vmatprep.subr.bf16.mxu0 0
        %967 = vmatpush1.bf16.xpose.msra.mxu0 0
        %968 = vmatprep.subr.bf16.mxu0 0
        %969 = vmatpush1.bf16.xpose.msra.mxu0 0
        %970 = vmatprep.subr.bf16.mxu0 0
        %971 = vmatpush1.bf16.xpose.msra.mxu0 0
        %972 = vmatprep.subr.bf16.mxu0 0
        %973 = vmatpush1.bf16.xpose.msra.mxu0 0
        %974 = vmatprep.subr.bf16.mxu0 0
        %975 = vmatpush1.bf16.xpose.msra.mxu0 0
        %976 = vmatprep.subr.bf16.mxu0 0
        %977 = vmatpush1.bf16.xpose.msra.mxu0 0
        %978 = vmatprep.subr.bf16.mxu0 0
        %979 = vmatpush1.bf16.xpose.msra.mxu0 0
        %980 = vmatprep.subr.bf16.mxu0 0
        %981 = vmatpush1.bf16.xpose.msra.mxu0 0
        %982 = vmatprep.subr.bf16.mxu0 0
        %983 = vmatpush1.bf16.xpose.msra.mxu0 0
        %984 = vmatprep.subr.bf16.mxu0 0
        %985 = vmatpush1.bf16.xpose.msra.mxu0 0
        %986 = vmatprep.mubr.bf16.mxu0 0
        %987 = vmatmul.mubr.bf16.gmra.mrb[0].mxu0 %v925
        %v988 = vpop.f32.mrb[0].mxu0
        %v989 = vadd.f32 %v872, %v988
        %v990 = vpop.f32.mrb[0].mxu0
        %v991 = vpop.f32.mrb[0].mxu0
        %v992 = vadd.f32 %v872, %v991
        %v993 = vpop.f32.mrb[0].mxu0
        %994 = vmatprep.mubr.bf16.mxu0 0
        %995 = vmatmul.mubr.bf16.gmra.mrb[0].mxu0 %v928
        %v996 = vpop.f32.mrb[0].mxu0
        %v997 = vadd.f32 %v872, %v996
        %v998 = vpop.f32.mrb[0].mxu0
        %v999 = vpop.f32.mrb[0].mxu0
        %v1000 = vadd.f32 %v872, %v999
        %v1001 = vpop.f32.mrb[0].mxu0
        %1002 = vmatprep.mubr.bf16.mxu0 0
        %1003 = vmatmul.mubr.bf16.gmra.mrb[0].mxu0 %v931
        %v1004 = vpop.f32.mrb[0].mxu0
        %v1005 = vadd.f32 %v872, %v1004
        %v1006 = vpop.f32.mrb[0].mxu0
        %v1007 = vpop.f32.mrb[0].mxu0
        %v1008 = vadd.f32 %v872, %v1007
        %v1009 = vpop.f32.mrb[0].mxu0
        %1010 = vmatprep.mubr.bf16.mxu0 0
        %1011 = vmatmul.mubr.bf16.gmra.mrb[0].mxu0 %v934
        %v1012 = vpop.f32.mrb[0].mxu0
        %v1013 = vadd.f32 %v872, %v1012
        %v1014 = vpop.f32.mrb[0].mxu0
        %v1015 = vpop.f32.mrb[0].mxu0
        %v1016 = vadd.f32 %v872, %v1015
        %v1017 = vpop.f32.mrb[0].mxu0
        %1018 = vmatprep.mubr.bf16.mxu0 0
        %1019 = vmatmul.mubr.bf16.gmra.mrb[0].mxu0 %v937
        %v1020 = vpop.f32.mrb[0].mxu0
        %v1021 = vadd.f32 %v872, %v1020
        %v1022 = vpop.f32.mrb[0].mxu0
        %v1023 = vpop.f32.mrb[0].mxu0
        %v1024 = vadd.f32 %v872, %v1023
        %v1025 = vpop.f32.mrb[0].mxu0
        %1026 = vmatprep.mubr.bf16.mxu0 0
        %1027 = vmatmul.mubr.bf16.gmra.mrb[0].mxu0 %v940
        %v1028 = vpop.f32.mrb[0].mxu0
        %v1029 = vadd.f32 %v872, %v1028
        %v1030 = vpop.f32.mrb[0].mxu0
        %v1031 = vpop.f32.mrb[0].mxu0
        %v1032 = vadd.f32 %v872, %v1031
        %v1033 = vpop.f32.mrb[0].mxu0
        %1034 = vmatprep.mubr.bf16.mxu0 0
        %1035 = vmatmul.mubr.bf16.gmra.mrb[0].mxu0 %v943
        %v1036 = vpop.f32.mrb[0].mxu0
        %v1037 = vadd.f32 %v872, %v1036
        %v1038 = vpop.f32.mrb[0].mxu0
        %v1039 = vpop.f32.mrb[0].mxu0
        %v1040 = vadd.f32 %v872, %v1039
        %v1041 = vpop.f32.mrb[0].mxu0
        %1042 = vmatprep.mubr.bf16.mxu0 0
        %1043 = vmatmul.mubr.bf16.gmra.mrb[0].mxu0 %v946
        %v1044 = vpop.f32.mrb[0].mxu0
        %v1045 = vadd.f32 %v872, %v1044
        %v1046 = vpop.f32.mrb[0].mxu0
        %v1047 = vpop.f32.mrb[0].mxu0
        %v1048 = vadd.f32 %v872, %v1047
        %v1049 = vpop.f32.mrb[0].mxu0
        %1050 = vdwg.mxu0
        %v1052 = vcombine.high %v638, %v638
        %v1054 = vunpack.c.l.s4 1966171168
        %v1055 = vunpack.c.0.s8 %v1054
        %v1056 = vlaneseq
        %v1057 = vshrl.u32 %v1056, 7
        %v1058 = vsub.s32 %v1055, %v1057
        %v1059 = vrot.slane %v638, %v1058
        %v1061 = vunpack.c.l.s4 1966171168
        %v1062 = vunpack.c.0.s8 %v1061
        %v1063 = vlaneseq
        %v1064 = vshrl.u32 %v1063, 7
        %v1065 = vsub.s32 %v1062, %v1064
        %v1066 = vrot.slane %v1052, %v1065
        %v1067 = vcombine.high %v1059, %v1059
        %v1068 = vcombine.high %v1066, %v1066
        %v1070 = vunpack.c.l.s4 1966171168
        %v1071 = vunpack.c.0.s8 %v1070
        %v1072 = vlaneseq
        %v1073 = vshrl.u32 %v1072, 7
        %v1074 = vsub.s32 %v1071, %v1073
        %v1075 = vrot.slane %v1059, %v1074
        %v1077 = vunpack.c.l.s4 1966171168
        %v1078 = vunpack.c.0.s8 %v1077
        %v1079 = vlaneseq
        %v1080 = vshrl.u32 %v1079, 7
        %v1081 = vsub.s32 %v1078, %v1080
        %v1082 = vrot.slane %v1066, %v1081
        %v1084 = vunpack.c.l.s4 1966171168
        %v1085 = vunpack.c.0.s8 %v1084
        %v1086 = vlaneseq
        %v1087 = vshrl.u32 %v1086, 7
        %v1088 = vsub.s32 %v1085, %v1087
        %v1089 = vrot.slane %v1067, %v1088
        %v1091 = vunpack.c.l.s4 1966171168
        %v1092 = vunpack.c.0.s8 %v1091
        %v1093 = vlaneseq
        %v1094 = vshrl.u32 %v1093, 7
        %v1095 = vsub.s32 %v1092, %v1094
        %v1096 = vrot.slane %v1068, %v1095
        %v1097 = vcombine.high %v1075, %v1075
        %v1098 = vcombine.high %v1082, %v1082
        %v1099 = vcombine.high %v1089, %v1089
        %v1100 = vcombine.high %v1096, %v1096
        %v1101 = vlaneseq
        %v1102 = vshrl.u32 %v1101, 7
        %v1103 = vsub.s32 0, %v1102
        %v1104 = vrot.slane %v1075, %v1103
        %v1105 = vlaneseq
        %v1106 = vshrl.u32 %v1105, 7
        %v1107 = vsub.s32 0, %v1106
        %v1108 = vrot.slane %v1089, %v1107
        %v1109 = vlaneseq
        %v1110 = vshrl.u32 %v1109, 7
        %v1111 = vsub.s32 0, %v1110
        %v1112 = vrot.slane %v1097, %v1111
        %v1113 = vlaneseq
        %v1114 = vshrl.u32 %v1113, 7
        %v1115 = vsub.s32 0, %v1114
        %v1116 = vrot.slane %v1099, %v1115
        %v1117 = vlaneseq
        %v1118 = vshrl.u32 %v1117, 7
        %v1119 = vsub.s32 0, %v1118
        %v1120 = vrot.slane %v1082, %v1119
        %v1121 = vlaneseq
        %v1122 = vshrl.u32 %v1121, 7
        %v1123 = vsub.s32 0, %v1122
        %v1124 = vrot.slane %v1096, %v1123
        %v1125 = vlaneseq
        %v1126 = vshrl.u32 %v1125, 7
        %v1127 = vsub.s32 0, %v1126
        %v1128 = vrot.slane %v1098, %v1127
        %v1129 = vlaneseq
        %v1130 = vshrl.u32 %v1129, 7
        %v1131 = vsub.s32 0, %v1130
        %v1132 = vrot.slane %v1100, %v1131
        %v1141 = vmul.f32 %v1104, %v785
        %v1142 = vmul.f32 %v1104, %v788
        %v1143 = vmul.f32 %v1108, %v793
        %v1144 = vmul.f32 %v1108, %v796
        %v1145 = vmul.f32 %v1112, %v801
        %v1146 = vmul.f32 %v1112, %v804
        %v1147 = vmul.f32 %v1116, %v809
        %v1148 = vmul.f32 %v1116, %v812
        %v1149 = vmul.f32 %v1120, %v817
        %v1150 = vmul.f32 %v1120, %v820
        %v1151 = vmul.f32 %v1124, %v825
        %v1152 = vmul.f32 %v1124, %v828
        %v1153 = vmul.f32 %v1128, %v833
        %v1154 = vmul.f32 %v1128, %v836
        %v1155 = vmul.f32 %v1132, %v841
        %v1156 = vmul.f32 %v1132, %v844
        %v1157 = vpack.c.bf16 %v1142, %v1141
        %v1158 = vpack.c.bf16 %v1144, %v1143
        %v1159 = vpack.c.bf16 %v1146, %v1145
        %v1160 = vpack.c.bf16 %v1148, %v1147
        %v1161 = vpack.c.bf16 %v1150, %v1149
        %v1162 = vpack.c.bf16 %v1152, %v1151
        %v1163 = vpack.c.bf16 %v1154, %v1153
        %v1164 = vpack.c.bf16 %v1156, %v1155
        %v1165 = vld [vmem:[%s12] sm:$0xf]
        %v1166 = vld [vmem:[%s12 + $0x4] sm:$0xf]
        %v1167 = vld [vmem:[%s12 + $0x8] sm:$0xf]
        %v1168 = vld [vmem:[%s12 + $0xc] sm:$0xf]
        %v1173 = vunpack.c.l.b16 %v1165
        %v1174 = vunpack.c.l.b16 %v1166
        %v1175 = vunpack.c.l.b16 %v1167
        %v1176 = vunpack.c.l.b16 %v1168
        %v1177 = vpack.c.b16 %v1174, %v1173
        %v1178 = vpack.c.b16 %v1176, %v1175
        %v1182 = vsel %vm593, %v1157, 0
        %v1185 = vsel %vm593, %v1158, 0
        %v1188 = vsel %vm593, %v1159, 0
        %v1191 = vsel %vm593, %v1160, 0
        %v1194 = vsel %vm593, %v1161, 0
        %v1197 = vsel %vm593, %v1162, 0
        %v1200 = vsel %vm593, %v1163, 0
        %v1203 = vsel %vm593, %v1164, 0
        %1205 = vmatprep.subr.bf16.mxu0 0
        %1206 = vmatpush1.bf16.msra.mxu0 %v1177
        %1207 = vmatprep.subr.bf16.mxu0 0
        %1208 = vmatpush1.bf16.msra.mxu0 %v1178
        %1209 = vmatprep.subr.bf16.mxu0 0
        %1210 = vmatpush1.bf16.msra.mxu0 0
        %1211 = vmatprep.subr.bf16.mxu0 0
        %1212 = vmatpush1.bf16.msra.mxu0 0
        %1213 = vmatprep.subr.bf16.mxu0 0
        %1214 = vmatpush1.bf16.msra.mxu0 0
        %1215 = vmatprep.subr.bf16.mxu0 0
        %1216 = vmatpush1.bf16.msra.mxu0 0
        %1217 = vmatprep.subr.bf16.mxu0 0
        %1218 = vmatpush1.bf16.msra.mxu0 0
        %1219 = vmatprep.subr.bf16.mxu0 0
        %1220 = vmatpush1.bf16.msra.mxu0 0
        %1221 = vmatprep.subr.bf16.mxu0 0
        %1222 = vmatpush1.bf16.msra.mxu0 0
        %1223 = vmatprep.subr.bf16.mxu0 0
        %1224 = vmatpush1.bf16.msra.mxu0 0
        %1225 = vmatprep.subr.bf16.mxu0 0
        %1226 = vmatpush1.bf16.msra.mxu0 0
        %1227 = vmatprep.subr.bf16.mxu0 0
        %1228 = vmatpush1.bf16.msra.mxu0 0
        %1229 = vmatprep.subr.bf16.mxu0 0
        %1230 = vmatpush1.bf16.msra.mxu0 0
        %1231 = vmatprep.subr.bf16.mxu0 0
        %1232 = vmatpush1.bf16.msra.mxu0 0
        %1233 = vmatprep.subr.bf16.mxu0 0
        %1234 = vmatpush1.bf16.msra.mxu0 0
        %1235 = vmatprep.subr.bf16.mxu0 0
        %1236 = vmatpush1.bf16.msra.mxu0 0
        %1237 = vmatprep.mubr.bf16.mxu0 0
        %1238 = vmatmul.mubr.bf16.gmra.mrb[0].mxu0 %v1182
        %v1239 = vpop.f32.mrb[0].mxu0
        %v1240 = vadd.f32 0.0, %v1239
        %v1241 = vpop.f32.mrb[0].mxu0
        %v1242 = vpop.f32.mrb[0].mxu0
        %v1243 = vadd.f32 0.0, %v1242
        %v1244 = vpop.f32.mrb[0].mxu0
        %1245 = vmatprep.mubr.bf16.mxu0 0
        %1246 = vmatmul.mubr.bf16.gmra.mrb[0].mxu0 %v1185
        %v1247 = vpop.f32.mrb[0].mxu0
        %v1248 = vadd.f32 0.0, %v1247
        %v1249 = vpop.f32.mrb[0].mxu0
        %v1250 = vpop.f32.mrb[0].mxu0
        %v1251 = vadd.f32 0.0, %v1250
        %v1252 = vpop.f32.mrb[0].mxu0
        %1253 = vmatprep.mubr.bf16.mxu0 0
        %1254 = vmatmul.mubr.bf16.gmra.mrb[0].mxu0 %v1188
        %v1255 = vpop.f32.mrb[0].mxu0
        %v1256 = vadd.f32 0.0, %v1255
        %v1257 = vpop.f32.mrb[0].mxu0
        %v1258 = vpop.f32.mrb[0].mxu0
        %v1259 = vadd.f32 0.0, %v1258
        %v1260 = vpop.f32.mrb[0].mxu0
        %1261 = vmatprep.mubr.bf16.mxu0 0
        %1262 = vmatmul.mubr.bf16.gmra.mrb[0].mxu0 %v1191
        %v1263 = vpop.f32.mrb[0].mxu0
        %v1264 = vadd.f32 0.0, %v1263
        %v1265 = vpop.f32.mrb[0].mxu0
        %v1266 = vpop.f32.mrb[0].mxu0
        %v1267 = vadd.f32 0.0, %v1266
        %v1268 = vpop.f32.mrb[0].mxu0
        %1269 = vmatprep.mubr.bf16.mxu0 0
        %1270 = vmatmul.mubr.bf16.gmra.mrb[0].mxu0 %v1194
        %v1271 = vpop.f32.mrb[0].mxu0
        %v1272 = vadd.f32 0.0, %v1271
        %v1273 = vpop.f32.mrb[0].mxu0
        %v1274 = vpop.f32.mrb[0].mxu0
        %v1275 = vadd.f32 0.0, %v1274
        %v1276 = vpop.f32.mrb[0].mxu0
        %1277 = vmatprep.mubr.bf16.mxu0 0
        %1278 = vmatmul.mubr.bf16.gmra.mrb[0].mxu0 %v1197
        %v1279 = vpop.f32.mrb[0].mxu0
        %v1280 = vadd.f32 0.0, %v1279
        %v1281 = vpop.f32.mrb[0].mxu0
        %v1282 = vpop.f32.mrb[0].mxu0
        %v1283 = vadd.f32 0.0, %v1282
        %v1284 = vpop.f32.mrb[0].mxu0
        %1285 = vmatprep.mubr.bf16.mxu0 0
        %1286 = vmatmul.mubr.bf16.gmra.mrb[0].mxu0 %v1200
        %v1287 = vpop.f32.mrb[0].mxu0
        %v1288 = vadd.f32 0.0, %v1287
        %v1289 = vpop.f32.mrb[0].mxu0
        %v1290 = vpop.f32.mrb[0].mxu0
        %v1291 = vadd.f32 0.0, %v1290
        %v1292 = vpop.f32.mrb[0].mxu0
        %1293 = vmatprep.mubr.bf16.mxu0 0
        %1294 = vmatmul.mubr.bf16.gmra.mrb[0].mxu0 %v1203
        %v1295 = vpop.f32.mrb[0].mxu0
        %v1296 = vadd.f32 0.0, %v1295
        %v1297 = vpop.f32.mrb[0].mxu0
        %v1298 = vpop.f32.mrb[0].mxu0
        %v1299 = vadd.f32 0.0, %v1298
        %v1300 = vpop.f32.mrb[0].mxu0
        %1301 = vdwg.mxu0
        %1302 = vxpose.xlu0.b32.start [1/16] %v1240, 128
        %1303 = vxpose.xlu0.b32.cont [2/16] %v1243, 128
        %1304 = vxpose.xlu0.b32.cont [3/16] 0.0, 128
        %1305 = vxpose.xlu0.b32.cont [4/16] 0.0, 128
        %1306 = vxpose.xlu0.b32.cont [5/16] 0.0, 128
        %1307 = vxpose.xlu0.b32.cont [6/16] 0.0, 128
        %1308 = vxpose.xlu0.b32.cont [7/16] 0.0, 128
        %1309 = vxpose.xlu0.b32.cont [8/16] 0.0, 128
        %1310 = vxpose.xlu0.b32.cont [9/16] 0.0, 128
        %1311 = vxpose.xlu0.b32.cont [10/16] 0.0, 128
        %1312 = vxpose.xlu0.b32.cont [11/16] 0.0, 128
        %1313 = vxpose.xlu0.b32.cont [12/16] 0.0, 128
        %1314 = vxpose.xlu0.b32.cont [13/16] 0.0, 128
        %1315 = vxpose.xlu0.b32.cont [14/16] 0.0, 128
        %1316 = vxpose.xlu0.b32.cont [15/16] 0.0, 128
        %1317 = vxpose.xlu0.b32.end [16/16] 0.0, 128
        %v1318 = vpop.trf.xlu0
        %v1319 = vpop.trf.xlu0
        %v1320 = vpop.trf.xlu0
        %v1321 = vpop.trf.xlu0
        %v1322 = vpop.trf.xlu0
        %v1323 = vpop.trf.xlu0
        %v1324 = vpop.trf.xlu0
        %v1325 = vpop.trf.xlu0
        %v1326 = vpop.trf.xlu0
        %v1327 = vpop.trf.xlu0
        %v1328 = vpop.trf.xlu0
        %v1329 = vpop.trf.xlu0
        %v1330 = vpop.trf.xlu0
        %v1331 = vpop.trf.xlu0
        %v1332 = vpop.trf.xlu0
        %v1333 = vpop.trf.xlu0
        %1334 = vxpose.xlu0.b32.start [1/16] %v1248, 128
        %1335 = vxpose.xlu0.b32.cont [2/16] %v1251, 128
        %1336 = vxpose.xlu0.b32.cont [3/16] 0.0, 128
        %1337 = vxpose.xlu0.b32.cont [4/16] 0.0, 128
        %1338 = vxpose.xlu0.b32.cont [5/16] 0.0, 128
        %1339 = vxpose.xlu0.b32.cont [6/16] 0.0, 128
        %1340 = vxpose.xlu0.b32.cont [7/16] 0.0, 128
        %1341 = vxpose.xlu0.b32.cont [8/16] 0.0, 128
        %1342 = vxpose.xlu0.b32.cont [9/16] 0.0, 128
        %1343 = vxpose.xlu0.b32.cont [10/16] 0.0, 128
        %1344 = vxpose.xlu0.b32.cont [11/16] 0.0, 128
        %1345 = vxpose.xlu0.b32.cont [12/16] 0.0, 128
        %1346 = vxpose.xlu0.b32.cont [13/16] 0.0, 128
        %1347 = vxpose.xlu0.b32.cont [14/16] 0.0, 128
        %1348 = vxpose.xlu0.b32.cont [15/16] 0.0, 128
        %1349 = vxpose.xlu0.b32.end [16/16] 0.0, 128
        %v1350 = vpop.trf.xlu0
        %v1351 = vpop.trf.xlu0
        %v1352 = vpop.trf.xlu0
        %v1353 = vpop.trf.xlu0
        %v1354 = vpop.trf.xlu0
        %v1355 = vpop.trf.xlu0
        %v1356 = vpop.trf.xlu0
        %v1357 = vpop.trf.xlu0
        %v1358 = vpop.trf.xlu0
        %v1359 = vpop.trf.xlu0
        %v1360 = vpop.trf.xlu0
        %v1361 = vpop.trf.xlu0
        %v1362 = vpop.trf.xlu0
        %v1363 = vpop.trf.xlu0
        %v1364 = vpop.trf.xlu0
        %v1365 = vpop.trf.xlu0
        %1366 = vxpose.xlu0.b32.start [1/16] %v1256, 128
        %1367 = vxpose.xlu0.b32.cont [2/16] %v1259, 128
        %1368 = vxpose.xlu0.b32.cont [3/16] 0.0, 128
        %1369 = vxpose.xlu0.b32.cont [4/16] 0.0, 128
        %1370 = vxpose.xlu0.b32.cont [5/16] 0.0, 128
        %1371 = vxpose.xlu0.b32.cont [6/16] 0.0, 128
        %1372 = vxpose.xlu0.b32.cont [7/16] 0.0, 128
        %1373 = vxpose.xlu0.b32.cont [8/16] 0.0, 128
        %1374 = vxpose.xlu0.b32.cont [9/16] 0.0, 128
        %1375 = vxpose.xlu0.b32.cont [10/16] 0.0, 128
        %1376 = vxpose.xlu0.b32.cont [11/16] 0.0, 128
        %1377 = vxpose.xlu0.b32.cont [12/16] 0.0, 128
        %1378 = vxpose.xlu0.b32.cont [13/16] 0.0, 128
        %1379 = vxpose.xlu0.b32.cont [14/16] 0.0, 128
        %1380 = vxpose.xlu0.b32.cont [15/16] 0.0, 128
        %1381 = vxpose.xlu0.b32.end [16/16] 0.0, 128
        %v1382 = vpop.trf.xlu0
        %v1383 = vpop.trf.xlu0
        %v1384 = vpop.trf.xlu0
        %v1385 = vpop.trf.xlu0
        %v1386 = vpop.trf.xlu0
        %v1387 = vpop.trf.xlu0
        %v1388 = vpop.trf.xlu0
        %v1389 = vpop.trf.xlu0
        %v1390 = vpop.trf.xlu0
        %v1391 = vpop.trf.xlu0
        %v1392 = vpop.trf.xlu0
        %v1393 = vpop.trf.xlu0
        %v1394 = vpop.trf.xlu0
        %v1395 = vpop.trf.xlu0
        %v1396 = vpop.trf.xlu0
        %v1397 = vpop.trf.xlu0
        %1398 = vxpose.xlu0.b32.start [1/16] %v1264, 128
        %1399 = vxpose.xlu0.b32.cont [2/16] %v1267, 128
        %1400 = vxpose.xlu0.b32.cont [3/16] 0.0, 128
        %1401 = vxpose.xlu0.b32.cont [4/16] 0.0, 128
        %1402 = vxpose.xlu0.b32.cont [5/16] 0.0, 128
        %1403 = vxpose.xlu0.b32.cont [6/16] 0.0, 128
        %1404 = vxpose.xlu0.b32.cont [7/16] 0.0, 128
        %1405 = vxpose.xlu0.b32.cont [8/16] 0.0, 128
        %1406 = vxpose.xlu0.b32.cont [9/16] 0.0, 128
        %1407 = vxpose.xlu0.b32.cont [10/16] 0.0, 128
        %1408 = vxpose.xlu0.b32.cont [11/16] 0.0, 128
        %1409 = vxpose.xlu0.b32.cont [12/16] 0.0, 128
        %1410 = vxpose.xlu0.b32.cont [13/16] 0.0, 128
        %1411 = vxpose.xlu0.b32.cont [14/16] 0.0, 128
        %1412 = vxpose.xlu0.b32.cont [15/16] 0.0, 128
        %1413 = vxpose.xlu0.b32.end [16/16] 0.0, 128
        %v1414 = vpop.trf.xlu0
        %v1415 = vpop.trf.xlu0
        %v1416 = vpop.trf.xlu0
        %v1417 = vpop.trf.xlu0
        %v1418 = vpop.trf.xlu0
        %v1419 = vpop.trf.xlu0
        %v1420 = vpop.trf.xlu0
        %v1421 = vpop.trf.xlu0
        %v1422 = vpop.trf.xlu0
        %v1423 = vpop.trf.xlu0
        %v1424 = vpop.trf.xlu0
        %v1425 = vpop.trf.xlu0
        %v1426 = vpop.trf.xlu0
        %v1427 = vpop.trf.xlu0
        %v1428 = vpop.trf.xlu0
        %v1429 = vpop.trf.xlu0
        %1430 = vxpose.xlu0.b32.start [1/16] %v1272, 128
        %1431 = vxpose.xlu0.b32.cont [2/16] %v1275, 128
        %1432 = vxpose.xlu0.b32.cont [3/16] 0.0, 128
        %1433 = vxpose.xlu0.b32.cont [4/16] 0.0, 128
        %1434 = vxpose.xlu0.b32.cont [5/16] 0.0, 128
        %1435 = vxpose.xlu0.b32.cont [6/16] 0.0, 128
        %1436 = vxpose.xlu0.b32.cont [7/16] 0.0, 128
        %1437 = vxpose.xlu0.b32.cont [8/16] 0.0, 128
        %1438 = vxpose.xlu0.b32.cont [9/16] 0.0, 128
        %1439 = vxpose.xlu0.b32.cont [10/16] 0.0, 128
        %1440 = vxpose.xlu0.b32.cont [11/16] 0.0, 128
        %1441 = vxpose.xlu0.b32.cont [12/16] 0.0, 128
        %1442 = vxpose.xlu0.b32.cont [13/16] 0.0, 128
        %1443 = vxpose.xlu0.b32.cont [14/16] 0.0, 128
        %1444 = vxpose.xlu0.b32.cont [15/16] 0.0, 128
        %1445 = vxpose.xlu0.b32.end [16/16] 0.0, 128
        %v1446 = vpop.trf.xlu0
        %v1447 = vpop.trf.xlu0
        %v1448 = vpop.trf.xlu0
        %v1449 = vpop.trf.xlu0
        %v1450 = vpop.trf.xlu0
        %v1451 = vpop.trf.xlu0
        %v1452 = vpop.trf.xlu0
        %v1453 = vpop.trf.xlu0
        %v1454 = vpop.trf.xlu0
        %v1455 = vpop.trf.xlu0
        %v1456 = vpop.trf.xlu0
        %v1457 = vpop.trf.xlu0
        %v1458 = vpop.trf.xlu0
        %v1459 = vpop.trf.xlu0
        %v1460 = vpop.trf.xlu0
        %v1461 = vpop.trf.xlu0
        %1462 = vxpose.xlu0.b32.start [1/16] %v1280, 128
        %1463 = vxpose.xlu0.b32.cont [2/16] %v1283, 128
        %1464 = vxpose.xlu0.b32.cont [3/16] 0.0, 128
        %1465 = vxpose.xlu0.b32.cont [4/16] 0.0, 128
        %1466 = vxpose.xlu0.b32.cont [5/16] 0.0, 128
        %1467 = vxpose.xlu0.b32.cont [6/16] 0.0, 128
        %1468 = vxpose.xlu0.b32.cont [7/16] 0.0, 128
        %1469 = vxpose.xlu0.b32.cont [8/16] 0.0, 128
        %1470 = vxpose.xlu0.b32.cont [9/16] 0.0, 128
        %1471 = vxpose.xlu0.b32.cont [10/16] 0.0, 128
        %1472 = vxpose.xlu0.b32.cont [11/16] 0.0, 128
        %1473 = vxpose.xlu0.b32.cont [12/16] 0.0, 128
        %1474 = vxpose.xlu0.b32.cont [13/16] 0.0, 128
        %1475 = vxpose.xlu0.b32.cont [14/16] 0.0, 128
        %1476 = vxpose.xlu0.b32.cont [15/16] 0.0, 128
        %1477 = vxpose.xlu0.b32.end [16/16] 0.0, 128
        %v1478 = vpop.trf.xlu0
        %v1479 = vpop.trf.xlu0
        %v1480 = vpop.trf.xlu0
        %v1481 = vpop.trf.xlu0
        %v1482 = vpop.trf.xlu0
        %v1483 = vpop.trf.xlu0
        %v1484 = vpop.trf.xlu0
        %v1485 = vpop.trf.xlu0
        %v1486 = vpop.trf.xlu0
        %v1487 = vpop.trf.xlu0
        %v1488 = vpop.trf.xlu0
        %v1489 = vpop.trf.xlu0
        %v1490 = vpop.trf.xlu0
        %v1491 = vpop.trf.xlu0
        %v1492 = vpop.trf.xlu0
        %v1493 = vpop.trf.xlu0
        %1494 = vxpose.xlu0.b32.start [1/16] %v1288, 128
        %1495 = vxpose.xlu0.b32.cont [2/16] %v1291, 128
        %1496 = vxpose.xlu0.b32.cont [3/16] 0.0, 128
        %1497 = vxpose.xlu0.b32.cont [4/16] 0.0, 128
        %1498 = vxpose.xlu0.b32.cont [5/16] 0.0, 128
        %1499 = vxpose.xlu0.b32.cont [6/16] 0.0, 128
        %1500 = vxpose.xlu0.b32.cont [7/16] 0.0, 128
        %1501 = vxpose.xlu0.b32.cont [8/16] 0.0, 128
        %1502 = vxpose.xlu0.b32.cont [9/16] 0.0, 128
        %1503 = vxpose.xlu0.b32.cont [10/16] 0.0, 128
        %1504 = vxpose.xlu0.b32.cont [11/16] 0.0, 128
        %1505 = vxpose.xlu0.b32.cont [12/16] 0.0, 128
        %1506 = vxpose.xlu0.b32.cont [13/16] 0.0, 128
        %1507 = vxpose.xlu0.b32.cont [14/16] 0.0, 128
        %1508 = vxpose.xlu0.b32.cont [15/16] 0.0, 128
        %1509 = vxpose.xlu0.b32.end [16/16] 0.0, 128
        %v1510 = vpop.trf.xlu0
        %v1511 = vpop.trf.xlu0
        %v1512 = vpop.trf.xlu0
        %v1513 = vpop.trf.xlu0
        %v1514 = vpop.trf.xlu0
        %v1515 = vpop.trf.xlu0
        %v1516 = vpop.trf.xlu0
        %v1517 = vpop.trf.xlu0
        %v1518 = vpop.trf.xlu0
        %v1519 = vpop.trf.xlu0
        %v1520 = vpop.trf.xlu0
        %v1521 = vpop.trf.xlu0
        %v1522 = vpop.trf.xlu0
        %v1523 = vpop.trf.xlu0
        %v1524 = vpop.trf.xlu0
        %v1525 = vpop.trf.xlu0
        %1526 = vxpose.xlu0.b32.start [1/16] %v1296, 128
        %1527 = vxpose.xlu0.b32.cont [2/16] %v1299, 128
        %1528 = vxpose.xlu0.b32.cont [3/16] 0.0, 128
        %1529 = vxpose.xlu0.b32.cont [4/16] 0.0, 128
        %1530 = vxpose.xlu0.b32.cont [5/16] 0.0, 128
        %1531 = vxpose.xlu0.b32.cont [6/16] 0.0, 128
        %1532 = vxpose.xlu0.b32.cont [7/16] 0.0, 128
        %1533 = vxpose.xlu0.b32.cont [8/16] 0.0, 128
        %1534 = vxpose.xlu0.b32.cont [9/16] 0.0, 128
        %1535 = vxpose.xlu0.b32.cont [10/16] 0.0, 128
        %1536 = vxpose.xlu0.b32.cont [11/16] 0.0, 128
        %1537 = vxpose.xlu0.b32.cont [12/16] 0.0, 128
        %1538 = vxpose.xlu0.b32.cont [13/16] 0.0, 128
        %1539 = vxpose.xlu0.b32.cont [14/16] 0.0, 128
        %1540 = vxpose.xlu0.b32.cont [15/16] 0.0, 128
        %1541 = vxpose.xlu0.b32.end [16/16] 0.0, 128
        %v1542 = vpop.trf.xlu0
        %v1543 = vpop.trf.xlu0
        %v1544 = vpop.trf.xlu0
        %v1545 = vpop.trf.xlu0
        %v1546 = vpop.trf.xlu0
        %v1547 = vpop.trf.xlu0
        %v1548 = vpop.trf.xlu0
        %v1549 = vpop.trf.xlu0
        %v1550 = vpop.trf.xlu0
        %v1551 = vpop.trf.xlu0
        %v1552 = vpop.trf.xlu0
        %v1553 = vpop.trf.xlu0
        %v1554 = vpop.trf.xlu0
        %v1555 = vpop.trf.xlu0
        %v1556 = vpop.trf.xlu0
        %v1557 = vpop.trf.xlu0
        %v1558 = vld [vmem:[%s562] sm:$0x3]
        %v1559 = vld [vmem:[%s562 + $0x2] sm:$0x3]
        %v1560 = vld [vmem:[%s562 + $0x4] sm:$0x3]
        %v1561 = vld [vmem:[%s562 + $0x6] sm:$0x3]
        %v1562 = vld [vmem:[%s562 + $0x8] sm:$0x3]
        %v1563 = vld [vmem:[%s562 + $0xa] sm:$0x3]
        %v1564 = vld [vmem:[%s562 + $0xc] sm:$0x3]
        %v1565 = vld [vmem:[%s562 + $0xe] sm:$0x3]
        %v1566 = vunpack.c.l.bf16 %v1558
        %v1567 = vunpack.c.l.bf16 %v1559
        %v1568 = vunpack.c.l.bf16 %v1560
        %v1569 = vunpack.c.l.bf16 %v1561
        %v1570 = vunpack.c.l.bf16 %v1562
        %v1571 = vunpack.c.l.bf16 %v1563
        %v1572 = vunpack.c.l.bf16 %v1564
        %v1573 = vunpack.c.l.bf16 %v1565
        %v1574 = vadd.f32 %v1318, %v1566
        %v1575 = vadd.f32 %v1350, %v1567
        %v1576 = vadd.f32 %v1382, %v1568
        %v1577 = vadd.f32 %v1414, %v1569
        %v1578 = vadd.f32 %v1446, %v1570
        %v1579 = vadd.f32 %v1478, %v1571
        %v1580 = vadd.f32 %v1510, %v1572
        %v1581 = vadd.f32 %v1542, %v1573
        %vm1582 = vcmask 125952
        %v1583 = vsel %vm1582, %v1574, -inf
        %1584 = vmax.xlane.f32.xlu0 %v1583
        %v1585 = vpop.xlane.xlu0 %1584
        %v1586 = vsel %vm1582, %v1575, -inf
        %1587 = vmax.xlane.f32.xlu0 %v1586
        %v1588 = vpop.xlane.xlu0 %1587
        %v1589 = vsel %vm1582, %v1576, -inf
        %1590 = vmax.xlane.f32.xlu0 %v1589
        %v1591 = vpop.xlane.xlu0 %1590
        %v1592 = vsel %vm1582, %v1577, -inf
        %1593 = vmax.xlane.f32.xlu0 %v1592
        %v1594 = vpop.xlane.xlu0 %1593
        %v1595 = vsel %vm1582, %v1578, -inf
        %1596 = vmax.xlane.f32.xlu0 %v1595
        %v1597 = vpop.xlane.xlu0 %1596
        %v1598 = vsel %vm1582, %v1579, -inf
        %1599 = vmax.xlane.f32.xlu0 %v1598
        %v1600 = vpop.xlane.xlu0 %1599
        %v1601 = vsel %vm1582, %v1580, -inf
        %1602 = vmax.xlane.f32.xlu0 %v1601
        %v1603 = vpop.xlane.xlu0 %1602
        %v1604 = vsel %vm1582, %v1581, -inf
        %1605 = vmax.xlane.f32.xlu0 %v1604
        %v1606 = vpop.xlane.xlu0 %1605
        %v1607 = vsub.f32 %v1574, %v1585
        %v1608 = vsub.f32 %v1575, %v1588
        %v1609 = vsub.f32 %v1576, %v1591
        %v1610 = vsub.f32 %v1577, %v1594
        %v1611 = vsub.f32 %v1578, %v1597
        %v1612 = vsub.f32 %v1579, %v1600
        %v1613 = vsub.f32 %v1580, %v1603
        %v1614 = vsub.f32 %v1581, %v1606
        %v1615 = vmul.f32 %v1607, 1.442695
        %v1616 = vpow.pop %v1615
        %v1617 = vmul.f32 %v1608, 1.442695
        %v1618 = vpow.pop %v1617
        %v1619 = vmul.f32 %v1609, 1.442695
        %v1620 = vpow.pop %v1619
        %v1621 = vmul.f32 %v1610, 1.442695
        %v1622 = vpow.pop %v1621
        %v1623 = vmul.f32 %v1611, 1.442695
        %v1624 = vpow.pop %v1623
        %v1625 = vmul.f32 %v1612, 1.442695
        %v1626 = vpow.pop %v1625
        %v1627 = vmul.f32 %v1613, 1.442695
        %v1628 = vpow.pop %v1627
        %v1629 = vmul.f32 %v1614, 1.442695
        %v1630 = vpow.pop %v1629
        %v1631 = vsel %vm1582, %v1616, 0.0
        %1632 = vadd.xlane.f32.xlu0 %v1631
        %v1633 = vpop.xlane.xlu0 %1632
        %v1634 = vsel %vm1582, %v1618, 0.0
        %1635 = vadd.xlane.f32.xlu0 %v1634
        %v1636 = vpop.xlane.xlu0 %1635
        %v1637 = vsel %vm1582, %v1620, 0.0
        %1638 = vadd.xlane.f32.xlu0 %v1637
        %v1639 = vpop.xlane.xlu0 %1638
        %v1640 = vsel %vm1582, %v1622, 0.0
        %1641 = vadd.xlane.f32.xlu0 %v1640
        %v1642 = vpop.xlane.xlu0 %1641
        %v1643 = vsel %vm1582, %v1624, 0.0
        %1644 = vadd.xlane.f32.xlu0 %v1643
        %v1645 = vpop.xlane.xlu0 %1644
        %v1646 = vsel %vm1582, %v1626, 0.0
        %1647 = vadd.xlane.f32.xlu0 %v1646
        %v1648 = vpop.xlane.xlu0 %1647
        %v1649 = vsel %vm1582, %v1628, 0.0
        %1650 = vadd.xlane.f32.xlu0 %v1649
        %v1651 = vpop.xlane.xlu0 %1650
        %v1652 = vsel %vm1582, %v1630, 0.0
        %1653 = vadd.xlane.f32.xlu0 %v1652
        %v1654 = vpop.xlane.xlu0 %1653
        %v1655 = vrcp.pop %v1633
        %v1656 = vrcp.pop %v1636
        %v1657 = vrcp.pop %v1639
        %v1658 = vrcp.pop %v1642
        %v1659 = vrcp.pop %v1645
        %v1660 = vrcp.pop %v1648
        %v1661 = vrcp.pop %v1651
        %v1662 = vrcp.pop %v1654
        %v1663 = vmul.f32 %v1616, %v1655
        %v1664 = vmul.f32 %v1618, %v1656
        %v1665 = vmul.f32 %v1620, %v1657
        %v1666 = vmul.f32 %v1622, %v1658
        %v1667 = vmul.f32 %v1624, %v1659
        %v1668 = vmul.f32 %v1626, %v1660
        %v1669 = vmul.f32 %v1628, %v1661
        %v1670 = vmul.f32 %v1630, %v1662
        %1671 = vst.msk [vmem:[%s568] sm:$0xf] %vm1582, %v1663
        %1672 = vst.msk [vmem:[%s568 + $0x4] sm:$0xf] %vm1582, %v1664
        %1673 = vst.msk [vmem:[%s568 + $0x8] sm:$0xf] %vm1582, %v1665
        %1674 = vst.msk [vmem:[%s568 + $0xc] sm:$0xf] %vm1582, %v1666
        %1675 = vst.msk [vmem:[%s568 + $0x10] sm:$0xf] %vm1582, %v1667
        %1676 = vst.msk [vmem:[%s568 + $0x14] sm:$0xf] %vm1582, %v1668
        %1677 = vst.msk [vmem:[%s568 + $0x18] sm:$0xf] %vm1582, %v1669
        %1678 = vst.msk [vmem:[%s568 + $0x1c] sm:$0xf] %vm1582, %v1670
        %1679 = vxpose.xlu0.b32.start [1/16] %v1663, 128
        %1680 = vxpose.xlu0.b32.cont [2/16] 0.0, 128
        %1681 = vxpose.xlu0.b32.cont [3/16] 0.0, 128
        %1682 = vxpose.xlu0.b32.cont [4/16] 0.0, 128
        %1683 = vxpose.xlu0.b32.cont [5/16] 0.0, 128
        %1684 = vxpose.xlu0.b32.cont [6/16] 0.0, 128
        %1685 = vxpose.xlu0.b32.cont [7/16] 0.0, 128
        %1686 = vxpose.xlu0.b32.cont [8/16] 0.0, 128
        %1687 = vxpose.xlu0.b32.cont [9/16] 0.0, 128
        %1688 = vxpose.xlu0.b32.cont [10/16] 0.0, 128
        %1689 = vxpose.xlu0.b32.cont [11/16] 0.0, 128
        %1690 = vxpose.xlu0.b32.cont [12/16] 0.0, 128
        %1691 = vxpose.xlu0.b32.cont [13/16] 0.0, 128
        %1692 = vxpose.xlu0.b32.cont [14/16] 0.0, 128
        %1693 = vxpose.xlu0.b32.cont [15/16] 0.0, 128
        %1694 = vxpose.xlu0.b32.end [16/16] 0.0, 128
        %v1695 = vpop.trf.xlu0
        %v1696 = vpop.trf.xlu0
        %v1697 = vpop.trf.xlu0
        %v1698 = vpop.trf.xlu0
        %v1699 = vpop.trf.xlu0
        %v1700 = vpop.trf.xlu0
        %v1701 = vpop.trf.xlu0
        %v1702 = vpop.trf.xlu0
        %v1703 = vpop.trf.xlu0
        %v1704 = vpop.trf.xlu0
        %v1705 = vpop.trf.xlu0
        %v1706 = vpop.trf.xlu0
        %v1707 = vpop.trf.xlu0
        %v1708 = vpop.trf.xlu0
        %v1709 = vpop.trf.xlu0
        %v1710 = vpop.trf.xlu0
        %1711 = vxpose.xlu0.b32.start [1/16] %v1664, 128
        %1712 = vxpose.xlu0.b32.cont [2/16] 0.0, 128
        %1713 = vxpose.xlu0.b32.cont [3/16] 0.0, 128
        %1714 = vxpose.xlu0.b32.cont [4/16] 0.0, 128
        %1715 = vxpose.xlu0.b32.cont [5/16] 0.0, 128
        %1716 = vxpose.xlu0.b32.cont [6/16] 0.0, 128
        %1717 = vxpose.xlu0.b32.cont [7/16] 0.0, 128
        %1718 = vxpose.xlu0.b32.cont [8/16] 0.0, 128
        %1719 = vxpose.xlu0.b32.cont [9/16] 0.0, 128
        %1720 = vxpose.xlu0.b32.cont [10/16] 0.0, 128
        %1721 = vxpose.xlu0.b32.cont [11/16] 0.0, 128
        %1722 = vxpose.xlu0.b32.cont [12/16] 0.0, 128
        %1723 = vxpose.xlu0.b32.cont [13/16] 0.0, 128
        %1724 = vxpose.xlu0.b32.cont [14/16] 0.0, 128
        %1725 = vxpose.xlu0.b32.cont [15/16] 0.0, 128
        %1726 = vxpose.xlu0.b32.end [16/16] 0.0, 128
        %v1727 = vpop.trf.xlu0
        %v1728 = vpop.trf.xlu0
        %v1729 = vpop.trf.xlu0
        %v1730 = vpop.trf.xlu0
        %v1731 = vpop.trf.xlu0
        %v1732 = vpop.trf.xlu0
        %v1733 = vpop.trf.xlu0
        %v1734 = vpop.trf.xlu0
        %v1735 = vpop.trf.xlu0
        %v1736 = vpop.trf.xlu0
        %v1737 = vpop.trf.xlu0
        %v1738 = vpop.trf.xlu0
        %v1739 = vpop.trf.xlu0
        %v1740 = vpop.trf.xlu0
        %v1741 = vpop.trf.xlu0
        %v1742 = vpop.trf.xlu0
        %1743 = vxpose.xlu0.b32.start [1/16] %v1665, 128
        %1744 = vxpose.xlu0.b32.cont [2/16] 0.0, 128
        %1745 = vxpose.xlu0.b32.cont [3/16] 0.0, 128
        %1746 = vxpose.xlu0.b32.cont [4/16] 0.0, 128
        %1747 = vxpose.xlu0.b32.cont [5/16] 0.0, 128
        %1748 = vxpose.xlu0.b32.cont [6/16] 0.0, 128
        %1749 = vxpose.xlu0.b32.cont [7/16] 0.0, 128
        %1750 = vxpose.xlu0.b32.cont [8/16] 0.0, 128
        %1751 = vxpose.xlu0.b32.cont [9/16] 0.0, 128
        %1752 = vxpose.xlu0.b32.cont [10/16] 0.0, 128
        %1753 = vxpose.xlu0.b32.cont [11/16] 0.0, 128
        %1754 = vxpose.xlu0.b32.cont [12/16] 0.0, 128
        %1755 = vxpose.xlu0.b32.cont [13/16] 0.0, 128
        %1756 = vxpose.xlu0.b32.cont [14/16] 0.0, 128
        %1757 = vxpose.xlu0.b32.cont [15/16] 0.0, 128
        %1758 = vxpose.xlu0.b32.end [16/16] 0.0, 128
        %v1759 = vpop.trf.xlu0
        %v1760 = vpop.trf.xlu0
        %v1761 = vpop.trf.xlu0
        %v1762 = vpop.trf.xlu0
        %v1763 = vpop.trf.xlu0
        %v1764 = vpop.trf.xlu0
        %v1765 = vpop.trf.xlu0
        %v1766 = vpop.trf.xlu0
        %v1767 = vpop.trf.xlu0
        %v1768 = vpop.trf.xlu0
        %v1769 = vpop.trf.xlu0
        %v1770 = vpop.trf.xlu0
        %v1771 = vpop.trf.xlu0
        %v1772 = vpop.trf.xlu0
        %v1773 = vpop.trf.xlu0
        %v1774 = vpop.trf.xlu0
        %1775 = vxpose.xlu0.b32.start [1/16] %v1666, 128
        %1776 = vxpose.xlu0.b32.cont [2/16] 0.0, 128
        %1777 = vxpose.xlu0.b32.cont [3/16] 0.0, 128
        %1778 = vxpose.xlu0.b32.cont [4/16] 0.0, 128
        %1779 = vxpose.xlu0.b32.cont [5/16] 0.0, 128
        %1780 = vxpose.xlu0.b32.cont [6/16] 0.0, 128
        %1781 = vxpose.xlu0.b32.cont [7/16] 0.0, 128
        %1782 = vxpose.xlu0.b32.cont [8/16] 0.0, 128
        %1783 = vxpose.xlu0.b32.cont [9/16] 0.0, 128
        %1784 = vxpose.xlu0.b32.cont [10/16] 0.0, 128
        %1785 = vxpose.xlu0.b32.cont [11/16] 0.0, 128
        %1786 = vxpose.xlu0.b32.cont [12/16] 0.0, 128
        %1787 = vxpose.xlu0.b32.cont [13/16] 0.0, 128
        %1788 = vxpose.xlu0.b32.cont [14/16] 0.0, 128
        %1789 = vxpose.xlu0.b32.cont [15/16] 0.0, 128
        %1790 = vxpose.xlu0.b32.end [16/16] 0.0, 128
        %v1791 = vpop.trf.xlu0
        %v1792 = vpop.trf.xlu0
        %v1793 = vpop.trf.xlu0
        %v1794 = vpop.trf.xlu0
        %v1795 = vpop.trf.xlu0
        %v1796 = vpop.trf.xlu0
        %v1797 = vpop.trf.xlu0
        %v1798 = vpop.trf.xlu0
        %v1799 = vpop.trf.xlu0
        %v1800 = vpop.trf.xlu0
        %v1801 = vpop.trf.xlu0
        %v1802 = vpop.trf.xlu0
        %v1803 = vpop.trf.xlu0
        %v1804 = vpop.trf.xlu0
        %v1805 = vpop.trf.xlu0
        %v1806 = vpop.trf.xlu0
        %1807 = vxpose.xlu0.b32.start [1/16] %v1667, 128
        %1808 = vxpose.xlu0.b32.cont [2/16] 0.0, 128
        %1809 = vxpose.xlu0.b32.cont [3/16] 0.0, 128
        %1810 = vxpose.xlu0.b32.cont [4/16] 0.0, 128
        %1811 = vxpose.xlu0.b32.cont [5/16] 0.0, 128
        %1812 = vxpose.xlu0.b32.cont [6/16] 0.0, 128
        %1813 = vxpose.xlu0.b32.cont [7/16] 0.0, 128
        %1814 = vxpose.xlu0.b32.cont [8/16] 0.0, 128
        %1815 = vxpose.xlu0.b32.cont [9/16] 0.0, 128
        %1816 = vxpose.xlu0.b32.cont [10/16] 0.0, 128
        %1817 = vxpose.xlu0.b32.cont [11/16] 0.0, 128
        %1818 = vxpose.xlu0.b32.cont [12/16] 0.0, 128
        %1819 = vxpose.xlu0.b32.cont [13/16] 0.0, 128
        %1820 = vxpose.xlu0.b32.cont [14/16] 0.0, 128
        %1821 = vxpose.xlu0.b32.cont [15/16] 0.0, 128
        %1822 = vxpose.xlu0.b32.end [16/16] 0.0, 128
        %v1823 = vpop.trf.xlu0
        %v1824 = vpop.trf.xlu0
        %v1825 = vpop.trf.xlu0
        %v1826 = vpop.trf.xlu0
        %v1827 = vpop.trf.xlu0
        %v1828 = vpop.trf.xlu0
        %v1829 = vpop.trf.xlu0
        %v1830 = vpop.trf.xlu0
        %v1831 = vpop.trf.xlu0
        %v1832 = vpop.trf.xlu0
        %v1833 = vpop.trf.xlu0
        %v1834 = vpop.trf.xlu0
        %v1835 = vpop.trf.xlu0
        %v1836 = vpop.trf.xlu0
        %v1837 = vpop.trf.xlu0
        %v1838 = vpop.trf.xlu0
        %1839 = vxpose.xlu0.b32.start [1/16] %v1668, 128
        %1840 = vxpose.xlu0.b32.cont [2/16] 0.0, 128
        %1841 = vxpose.xlu0.b32.cont [3/16] 0.0, 128
        %1842 = vxpose.xlu0.b32.cont [4/16] 0.0, 128
        %1843 = vxpose.xlu0.b32.cont [5/16] 0.0, 128
        %1844 = vxpose.xlu0.b32.cont [6/16] 0.0, 128
        %1845 = vxpose.xlu0.b32.cont [7/16] 0.0, 128
        %1846 = vxpose.xlu0.b32.cont [8/16] 0.0, 128
        %1847 = vxpose.xlu0.b32.cont [9/16] 0.0, 128
        %1848 = vxpose.xlu0.b32.cont [10/16] 0.0, 128
        %1849 = vxpose.xlu0.b32.cont [11/16] 0.0, 128
        %1850 = vxpose.xlu0.b32.cont [12/16] 0.0, 128
        %1851 = vxpose.xlu0.b32.cont [13/16] 0.0, 128
        %1852 = vxpose.xlu0.b32.cont [14/16] 0.0, 128
        %1853 = vxpose.xlu0.b32.cont [15/16] 0.0, 128
        %1854 = vxpose.xlu0.b32.end [16/16] 0.0, 128
        %v1855 = vpop.trf.xlu0
        %v1856 = vpop.trf.xlu0
        %v1857 = vpop.trf.xlu0
        %v1858 = vpop.trf.xlu0
        %v1859 = vpop.trf.xlu0
        %v1860 = vpop.trf.xlu0
        %v1861 = vpop.trf.xlu0
        %v1862 = vpop.trf.xlu0
        %v1863 = vpop.trf.xlu0
        %v1864 = vpop.trf.xlu0
        %v1865 = vpop.trf.xlu0
        %v1866 = vpop.trf.xlu0
        %v1867 = vpop.trf.xlu0
        %v1868 = vpop.trf.xlu0
        %v1869 = vpop.trf.xlu0
        %v1870 = vpop.trf.xlu0
        %1871 = vxpose.xlu0.b32.start [1/16] %v1669, 128
        %1872 = vxpose.xlu0.b32.cont [2/16] 0.0, 128
        %1873 = vxpose.xlu0.b32.cont [3/16] 0.0, 128
        %1874 = vxpose.xlu0.b32.cont [4/16] 0.0, 128
        %1875 = vxpose.xlu0.b32.cont [5/16] 0.0, 128
        %1876 = vxpose.xlu0.b32.cont [6/16] 0.0, 128
        %1877 = vxpose.xlu0.b32.cont [7/16] 0.0, 128
        %1878 = vxpose.xlu0.b32.cont [8/16] 0.0, 128
        %1879 = vxpose.xlu0.b32.cont [9/16] 0.0, 128
        %1880 = vxpose.xlu0.b32.cont [10/16] 0.0, 128
        %1881 = vxpose.xlu0.b32.cont [11/16] 0.0, 128
        %1882 = vxpose.xlu0.b32.cont [12/16] 0.0, 128
        %1883 = vxpose.xlu0.b32.cont [13/16] 0.0, 128
        %1884 = vxpose.xlu0.b32.cont [14/16] 0.0, 128
        %1885 = vxpose.xlu0.b32.cont [15/16] 0.0, 128
        %1886 = vxpose.xlu0.b32.end [16/16] 0.0, 128
        %v1887 = vpop.trf.xlu0
        %v1888 = vpop.trf.xlu0
        %v1889 = vpop.trf.xlu0
        %v1890 = vpop.trf.xlu0
        %v1891 = vpop.trf.xlu0
        %v1892 = vpop.trf.xlu0
        %v1893 = vpop.trf.xlu0
        %v1894 = vpop.trf.xlu0
        %v1895 = vpop.trf.xlu0
        %v1896 = vpop.trf.xlu0
        %v1897 = vpop.trf.xlu0
        %v1898 = vpop.trf.xlu0
        %v1899 = vpop.trf.xlu0
        %v1900 = vpop.trf.xlu0
        %v1901 = vpop.trf.xlu0
        %v1902 = vpop.trf.xlu0
        %1903 = vxpose.xlu0.b32.start [1/16] %v1670, 128
        %1904 = vxpose.xlu0.b32.cont [2/16] 0.0, 128
        %1905 = vxpose.xlu0.b32.cont [3/16] 0.0, 128
        %1906 = vxpose.xlu0.b32.cont [4/16] 0.0, 128
        %1907 = vxpose.xlu0.b32.cont [5/16] 0.0, 128
        %1908 = vxpose.xlu0.b32.cont [6/16] 0.0, 128
        %1909 = vxpose.xlu0.b32.cont [7/16] 0.0, 128
        %1910 = vxpose.xlu0.b32.cont [8/16] 0.0, 128
        %1911 = vxpose.xlu0.b32.cont [9/16] 0.0, 128
        %1912 = vxpose.xlu0.b32.cont [10/16] 0.0, 128
        %1913 = vxpose.xlu0.b32.cont [11/16] 0.0, 128
        %1914 = vxpose.xlu0.b32.cont [12/16] 0.0, 128
        %1915 = vxpose.xlu0.b32.cont [13/16] 0.0, 128
        %1916 = vxpose.xlu0.b32.cont [14/16] 0.0, 128
        %1917 = vxpose.xlu0.b32.cont [15/16] 0.0, 128
        %1918 = vxpose.xlu0.b32.end [16/16] 0.0, 128
        %v1919 = vpop.trf.xlu0
        %v1920 = vpop.trf.xlu0
        %v1921 = vpop.trf.xlu0
        %v1922 = vpop.trf.xlu0
        %v1923 = vpop.trf.xlu0
        %v1924 = vpop.trf.xlu0
        %v1925 = vpop.trf.xlu0
        %v1926 = vpop.trf.xlu0
        %v1927 = vpop.trf.xlu0
        %v1928 = vpop.trf.xlu0
        %v1929 = vpop.trf.xlu0
        %v1930 = vpop.trf.xlu0
        %v1931 = vpop.trf.xlu0
        %v1932 = vpop.trf.xlu0
        %v1933 = vpop.trf.xlu0
        %v1934 = vpop.trf.xlu0
        %v1935 = vpack.c.bf16 %v1696, %v1695
        %v1936 = vpack.c.bf16 %v1728, %v1727
        %v1937 = vpack.c.bf16 %v1760, %v1759
        %v1938 = vpack.c.bf16 %v1792, %v1791
        %v1939 = vpack.c.bf16 %v1824, %v1823
        %v1940 = vpack.c.bf16 %v1856, %v1855
        %v1941 = vpack.c.bf16 %v1888, %v1887
        %v1942 = vpack.c.bf16 %v1920, %v1919
        %v1943 = vld [vmem:[%s13] sm:$0x3]
        %vm1944 = vcmask 31744
        %v1946 = vsel %vm1944, %v1935, 0
        %v1949 = vsel %vm1944, %v1936, 0
        %v1952 = vsel %vm1944, %v1937, 0
        %v1955 = vsel %vm1944, %v1938, 0
        %v1958 = vsel %vm1944, %v1939, 0
        %v1961 = vsel %vm1944, %v1940, 0
        %v1964 = vsel %vm1944, %v1941, 0
        %v1967 = vsel %vm1944, %v1942, 0
        %vm1969 = vcmask 1041408
        %v1971 = vsel %vm1969, %v1943, 0
        %1973 = vmatprep.subr.bf16.mxu0 0
        %1974 = vmatpush1.bf16.msra.mxu0 %v1971
        %1975 = vmatprep.subr.bf16.mxu0 0
        %1976 = vmatpush1.bf16.msra.mxu0 0
        %1977 = vmatprep.subr.bf16.mxu0 0
        %1978 = vmatpush1.bf16.msra.mxu0 0
        %1979 = vmatprep.subr.bf16.mxu0 0
        %1980 = vmatpush1.bf16.msra.mxu0 0
        %1981 = vmatprep.subr.bf16.mxu0 0
        %1982 = vmatpush1.bf16.msra.mxu0 0
        %1983 = vmatprep.subr.bf16.mxu0 0
        %1984 = vmatpush1.bf16.msra.mxu0 0
        %1985 = vmatprep.subr.bf16.mxu0 0
        %1986 = vmatpush1.bf16.msra.mxu0 0
        %1987 = vmatprep.subr.bf16.mxu0 0
        %1988 = vmatpush1.bf16.msra.mxu0 0
        %1989 = vmatprep.subr.bf16.mxu0 0
        %1990 = vmatpush1.bf16.msra.mxu0 0
        %1991 = vmatprep.subr.bf16.mxu0 0
        %1992 = vmatpush1.bf16.msra.mxu0 0
        %1993 = vmatprep.subr.bf16.mxu0 0
        %1994 = vmatpush1.bf16.msra.mxu0 0
        %1995 = vmatprep.subr.bf16.mxu0 0
        %1996 = vmatpush1.bf16.msra.mxu0 0
        %1997 = vmatprep.subr.bf16.mxu0 0
        %1998 = vmatpush1.bf16.msra.mxu0 0
        %1999 = vmatprep.subr.bf16.mxu0 0
        %2000 = vmatpush1.bf16.msra.mxu0 0
        %2001 = vmatprep.subr.bf16.mxu0 0
        %2002 = vmatpush1.bf16.msra.mxu0 0
        %2003 = vmatprep.subr.bf16.mxu0 0
        %2004 = vmatpush1.bf16.msra.mxu0 0
        %2005 = vmatprep.mubr.bf16.mxu0 0
        %2006 = vmatmul.mubr.bf16.gmra.mrb[0].mxu0 %v1946
        %v2007 = vpop.f32.mrb[0].mxu0
        %v2008 = vadd.f32 0.0, %v2007
        %v2009 = vpop.f32.mrb[0].mxu0
        %v2010 = vpop.f32.mrb[0].mxu0
        %v2011 = vadd.f32 0.0, %v2010
        %v2012 = vpop.f32.mrb[0].mxu0
        %2013 = vmatprep.mubr.bf16.mxu0 0
        %2014 = vmatmul.mubr.bf16.gmra.mrb[0].mxu0 %v1949
        %v2015 = vpop.f32.mrb[0].mxu0
        %v2016 = vadd.f32 0.0, %v2015
        %v2017 = vpop.f32.mrb[0].mxu0
        %v2018 = vpop.f32.mrb[0].mxu0
        %v2019 = vadd.f32 0.0, %v2018
        %v2020 = vpop.f32.mrb[0].mxu0
        %2021 = vmatprep.mubr.bf16.mxu0 0
        %2022 = vmatmul.mubr.bf16.gmra.mrb[0].mxu0 %v1952
        %v2023 = vpop.f32.mrb[0].mxu0
        %v2024 = vadd.f32 0.0, %v2023
        %v2025 = vpop.f32.mrb[0].mxu0
        %v2026 = vpop.f32.mrb[0].mxu0
        %v2027 = vadd.f32 0.0, %v2026
        %v2028 = vpop.f32.mrb[0].mxu0
        %2029 = vmatprep.mubr.bf16.mxu0 0
        %2030 = vmatmul.mubr.bf16.gmra.mrb[0].mxu0 %v1955
        %v2031 = vpop.f32.mrb[0].mxu0
        %v2032 = vadd.f32 0.0, %v2031
        %v2033 = vpop.f32.mrb[0].mxu0
        %v2034 = vpop.f32.mrb[0].mxu0
        %v2035 = vadd.f32 0.0, %v2034
        %v2036 = vpop.f32.mrb[0].mxu0
        %2037 = vmatprep.mubr.bf16.mxu0 0
        %2038 = vmatmul.mubr.bf16.gmra.mrb[0].mxu0 %v1958
        %v2039 = vpop.f32.mrb[0].mxu0
        %v2040 = vadd.f32 0.0, %v2039
        %v2041 = vpop.f32.mrb[0].mxu0
        %v2042 = vpop.f32.mrb[0].mxu0
        %v2043 = vadd.f32 0.0, %v2042
        %v2044 = vpop.f32.mrb[0].mxu0
        %2045 = vmatprep.mubr.bf16.mxu0 0
        %2046 = vmatmul.mubr.bf16.gmra.mrb[0].mxu0 %v1961
        %v2047 = vpop.f32.mrb[0].mxu0
        %v2048 = vadd.f32 0.0, %v2047
        %v2049 = vpop.f32.mrb[0].mxu0
        %v2050 = vpop.f32.mrb[0].mxu0
        %v2051 = vadd.f32 0.0, %v2050
        %v2052 = vpop.f32.mrb[0].mxu0
        %2053 = vmatprep.mubr.bf16.mxu0 0
        %2054 = vmatmul.mubr.bf16.gmra.mrb[0].mxu0 %v1964
        %v2055 = vpop.f32.mrb[0].mxu0
        %v2056 = vadd.f32 0.0, %v2055
        %v2057 = vpop.f32.mrb[0].mxu0
        %v2058 = vpop.f32.mrb[0].mxu0
        %v2059 = vadd.f32 0.0, %v2058
        %v2060 = vpop.f32.mrb[0].mxu0
        %2061 = vmatprep.mubr.bf16.mxu0 0
        %2062 = vmatmul.mubr.bf16.gmra.mrb[0].mxu0 %v1967
        %v2063 = vpop.f32.mrb[0].mxu0
        %v2064 = vadd.f32 0.0, %v2063
        %v2065 = vpop.f32.mrb[0].mxu0
        %v2066 = vpop.f32.mrb[0].mxu0
        %v2067 = vadd.f32 0.0, %v2066
        %v2068 = vpop.f32.mrb[0].mxu0
        %2069 = vdwg.mxu0
        %v2070 = vmul.f32 %v2008, %v989
        %v2071 = vmul.f32 %v2011, %v992
        %v2072 = vmul.f32 %v2016, %v997
        %v2073 = vmul.f32 %v2019, %v1000
        %v2074 = vmul.f32 %v2024, %v1005
        %v2075 = vmul.f32 %v2027, %v1008
        %v2076 = vmul.f32 %v2032, %v1013
        %v2077 = vmul.f32 %v2035, %v1016
        %v2078 = vmul.f32 %v2040, %v1021
        %v2079 = vmul.f32 %v2043, %v1024
        %v2080 = vmul.f32 %v2048, %v1029
        %v2081 = vmul.f32 %v2051, %v1032
        %v2082 = vmul.f32 %v2056, %v1037
        %v2083 = vmul.f32 %v2059, %v1040
        %v2084 = vmul.f32 %v2064, %v1045
        %v2085 = vmul.f32 %v2067, %v1048
        %v2086 = vsel %vm593, %v2070, 0.0
        %v2087 = vsel %vm593, %v2071, 0.0
        %v2088 = vadd.f32 %v2086, %v2087
        %v2089 = vrot.slane %v2088, 4
        %v2090 = vadd.f32 %v2088, %v2089
        %v2091 = vrot.slane %v2090, 2
        %v2092 = vadd.f32 %v2090, %v2091
        %v2093 = vrot.slane %v2092, 1
        %v2094 = vadd.f32 %v2092, %v2093
        %v2095 = vsel %vm593, %v2072, 0.0
        %v2096 = vsel %vm593, %v2073, 0.0
        %v2097 = vadd.f32 %v2095, %v2096
        %v2098 = vrot.slane %v2097, 4
        %v2099 = vadd.f32 %v2097, %v2098
        %v2100 = vrot.slane %v2099, 2
        %v2101 = vadd.f32 %v2099, %v2100
        %v2102 = vrot.slane %v2101, 1
        %v2103 = vadd.f32 %v2101, %v2102
        %v2104 = vsel %vm593, %v2074, 0.0
        %v2105 = vsel %vm593, %v2075, 0.0
        %v2106 = vadd.f32 %v2104, %v2105
        %v2107 = vrot.slane %v2106, 4
        %v2108 = vadd.f32 %v2106, %v2107
        %v2109 = vrot.slane %v2108, 2
        %v2110 = vadd.f32 %v2108, %v2109
        %v2111 = vrot.slane %v2110, 1
        %v2112 = vadd.f32 %v2110, %v2111
        %v2113 = vsel %vm593, %v2076, 0.0
        %v2114 = vsel %vm593, %v2077, 0.0
        %v2115 = vadd.f32 %v2113, %v2114
        %v2116 = vrot.slane %v2115, 4
        %v2117 = vadd.f32 %v2115, %v2116
        %v2118 = vrot.slane %v2117, 2
        %v2119 = vadd.f32 %v2117, %v2118
        %v2120 = vrot.slane %v2119, 1
        %v2121 = vadd.f32 %v2119, %v2120
        %v2122 = vsel %vm593, %v2078, 0.0
        %v2123 = vsel %vm593, %v2079, 0.0
        %v2124 = vadd.f32 %v2122, %v2123
        %v2125 = vrot.slane %v2124, 4
        %v2126 = vadd.f32 %v2124, %v2125
        %v2127 = vrot.slane %v2126, 2
        %v2128 = vadd.f32 %v2126, %v2127
        %v2129 = vrot.slane %v2128, 1
        %v2130 = vadd.f32 %v2128, %v2129
        %v2131 = vsel %vm593, %v2080, 0.0
        %v2132 = vsel %vm593, %v2081, 0.0
        %v2133 = vadd.f32 %v2131, %v2132
        %v2134 = vrot.slane %v2133, 4
        %v2135 = vadd.f32 %v2133, %v2134
        %v2136 = vrot.slane %v2135, 2
        %v2137 = vadd.f32 %v2135, %v2136
        %v2138 = vrot.slane %v2137, 1
        %v2139 = vadd.f32 %v2137, %v2138
        %v2140 = vsel %vm593, %v2082, 0.0
        %v2141 = vsel %vm593, %v2083, 0.0
        %v2142 = vadd.f32 %v2140, %v2141
        %v2143 = vrot.slane %v2142, 4
        %v2144 = vadd.f32 %v2142, %v2143
        %v2145 = vrot.slane %v2144, 2
        %v2146 = vadd.f32 %v2144, %v2145
        %v2147 = vrot.slane %v2146, 1
        %v2148 = vadd.f32 %v2146, %v2147
        %v2149 = vsel %vm593, %v2084, 0.0
        %v2150 = vsel %vm593, %v2085, 0.0
        %v2151 = vadd.f32 %v2149, %v2150
        %v2152 = vrot.slane %v2151, 4
        %v2153 = vadd.f32 %v2151, %v2152
        %v2154 = vrot.slane %v2153, 2
        %v2155 = vadd.f32 %v2153, %v2154
        %v2156 = vrot.slane %v2155, 1
        %v2157 = vadd.f32 %v2155, %v2156
        %v2158 = vpack.c.bf16 %v2094, %v2094
        %v2159 = vpack.c.bf16 %v2103, %v2103
        %v2160 = vpack.c.bf16 %v2112, %v2112
        %v2161 = vpack.c.bf16 %v2121, %v2121
        %v2162 = vpack.c.bf16 %v2130, %v2130
        %v2163 = vpack.c.bf16 %v2139, %v2139
        %v2164 = vpack.c.bf16 %v2148, %v2148
        %v2165 = vpack.c.bf16 %v2157, %v2157
        %v2166 = vld [vmem:[%s10] sm:$0xf]
        %v2167 = vld [vmem:[%s10 + $0x4] sm:$0xf]
        %v2168 = vld [vmem:[%s10 + $0x8] sm:$0xf]
        %v2169 = vld [vmem:[%s10 + $0xc] sm:$0xf]
        %v2170 = vld [vmem:[%s11] sm:$0x1]
        %v2172 = vlaneseq
        %v2173 = vshrl.u32 %v2172, 7
        %v2174 = vsub.s32 0, %v2173
        %v2175 = vrot.slane %v2170, %v2174
        %v2185 = vunpack.c.l.b16 %v2158
        %v2186 = vunpack.c.l.b16 %v2159
        %v2187 = vunpack.c.l.b16 %v2160
        %v2188 = vunpack.c.l.b16 %v2161
        %v2189 = vunpack.c.l.b16 %v2162
        %v2190 = vunpack.c.l.b16 %v2163
        %v2191 = vunpack.c.l.b16 %v2164
        %v2192 = vunpack.c.l.b16 %v2165
        %vm2193 = vcmask 1041409
        %v2194 = vsel %vm2193, %v2186, %v2185
        %vm2195 = vcmask 1042434
        %v2196 = vsel %vm2195, %v2187, %v2194
        %vm2197 = vcmask 1043459
        %v2198 = vsel %vm2197, %v2188, %v2196
        %vm2199 = vcmask 1044484
        %v2200 = vsel %vm2199, %v2189, %v2198
        %vm2201 = vcmask 1045509
        %v2202 = vsel %vm2201, %v2190, %v2200
        %vm2203 = vcmask 1046534
        %v2204 = vsel %vm2203, %v2191, %v2202
        %vm2205 = vcmask 1047559
        %v2206 = vsel %vm2205, %v2192, %v2204
        %v2207 = vpack.c.b16 %v2206, %v2206
        %v2212 = vunpack.c.l.b16 %v2166
        %v2213 = vunpack.c.l.b16 %v2167
        %v2214 = vunpack.c.l.b16 %v2168
        %v2215 = vunpack.c.l.b16 %v2169
        %v2216 = vpack.c.b16 %v2213, %v2212
        %v2217 = vpack.c.b16 %v2215, %v2214
        %v2219 = vsel %vm593, %v2207, 0
        %v2222 = vsel %vm593, %v2216, 0
        %v2225 = vsel %vm593, %v2217, 0
        %2227 = vmatprep.subr.bf16.mxu0 0
        %2228 = vmatpush1.bf16.xpose.msra.mxu0 %v2222
        %2229 = vmatprep.subr.bf16.mxu0 0
        %2230 = vmatpush1.bf16.xpose.msra.mxu0 %v2225
        %2231 = vmatprep.subr.bf16.mxu0 0
        %2232 = vmatpush1.bf16.xpose.msra.mxu0 0
        %2233 = vmatprep.subr.bf16.mxu0 0
        %2234 = vmatpush1.bf16.xpose.msra.mxu0 0
        %2235 = vmatprep.subr.bf16.mxu0 0
        %2236 = vmatpush1.bf16.xpose.msra.mxu0 0
        %2237 = vmatprep.subr.bf16.mxu0 0
        %2238 = vmatpush1.bf16.xpose.msra.mxu0 0
        %2239 = vmatprep.subr.bf16.mxu0 0
        %2240 = vmatpush1.bf16.xpose.msra.mxu0 0
        %2241 = vmatprep.subr.bf16.mxu0 0
        %2242 = vmatpush1.bf16.xpose.msra.mxu0 0
        %2243 = vmatprep.subr.bf16.mxu0 0
        %2244 = vmatpush1.bf16.xpose.msra.mxu0 0
        %2245 = vmatprep.subr.bf16.mxu0 0
        %2246 = vmatpush1.bf16.xpose.msra.mxu0 0
        %2247 = vmatprep.subr.bf16.mxu0 0
        %2248 = vmatpush1.bf16.xpose.msra.mxu0 0
        %2249 = vmatprep.subr.bf16.mxu0 0
        %2250 = vmatpush1.bf16.xpose.msra.mxu0 0
        %2251 = vmatprep.subr.bf16.mxu0 0
        %2252 = vmatpush1.bf16.xpose.msra.mxu0 0
        %2253 = vmatprep.subr.bf16.mxu0 0
        %2254 = vmatpush1.bf16.xpose.msra.mxu0 0
        %2255 = vmatprep.subr.bf16.mxu0 0
        %2256 = vmatpush1.bf16.xpose.msra.mxu0 0
        %2257 = vmatprep.subr.bf16.mxu0 0
        %2258 = vmatpush1.bf16.xpose.msra.mxu0 0
        %2259 = vmatprep.mubr.bf16.mxu0 0
        %2260 = vmatmul.mubr.bf16.gmra.mrb[0].mxu0 %v2219
        %v2261 = vpop.f32.mrb[0].mxu0
        %v2262 = vadd.f32 %v2175, %v2261
        %v2263 = vpop.f32.mrb[0].mxu0
        %v2264 = vpop.f32.mrb[0].mxu0
        %v2265 = vpop.f32.mrb[0].mxu0
        %2266 = vdwg.mxu0
        %2267 = vst.msk [vmem:[%s534] sm:$0xff] %vm593, %v2262
        %s2268 = sand.u32 %s352, 1
        %s2269 = scalar_lea.sflag [#allocation3], %s2268
        %s2270 = sand.u32 %s352, 1
        %s2271 = smul.addr %s2270, 8
        %s2272 = scalar_lea.vmem [#allocation2], %s2271
        %s2273 = smul.u32 8, %s30
        %p2274 = scmp.lt.s32.totalorder %s2273, 31
        %s2275 = scalar_select %p2274, %s2273, 31
        %s2276 = smul.addr %s2275, 4
        %s2277 = scalar_lea.vmem %s15, %s2276
        // Predicated region
        $region77: #{tpu_custom_call.1} parent=75 // pred_check
          %p2278 = pneg %p362
        $region78: #{tpu_custom_call.1} parent=75 // pred_check_branch
          %2280 = sbr.rel (%p2278) target = $region80
        $region79: #{tpu_custom_call.1} parent=75 // pred_region
          %s2282 = ssub.s32 128, 128
          %2283 = vsyncadd %s2269, %s2282
          %s2284 = smul.addr %s30, 128
          %s2285 = scalar_lea.hbm %s14, %s2284
          %s2287 = sshll.u32 %s2272, 4
          %s2288 = int_to_ptr.vmem [resolvable:$true] %s2287
          %2290 = dma.vmem_to_hbm [thread:$0]  %s2288, 128, %s2285, %s2269
        $region80: #{tpu_custom_call.1} parent=75 // pred_fallthru
          _
        // Predicated region
        $region81: #{tpu_custom_call.1} parent=75 // pred_check
          %p2291 = pneg %p388
        $region82: #{tpu_custom_call.1} parent=75 // pred_check_branch
          %2293 = sbr.rel (%p2291) target = $region84
        $region83: #{tpu_custom_call.1} parent=75 // pred_region
          %s2294 = smul.u32 8, %s30
        $region84: #{tpu_custom_call.1} parent=75 // pred_fallthru
          _
      $region76: #{tpu_custom_call.1} parent=5 // pred_fallthru
        _
      %p2295 = scmp.le.s32.totalorder 2, %s25
      // Predicated region
      $region85: #{tpu_custom_call.1} parent=5 // pred_check
        %p2296 = pneg %p2295
      $region86: #{tpu_custom_call.1} parent=5 // pred_check_branch
        %2298 = sbr.rel (%p2296) target = $region88
      $region87: #{tpu_custom_call.1} parent=5 // pred_region
        %s2299 = ssub.s32 %s25, 2
        // Predicated region
        $region89: #{tpu_custom_call.1} parent=87 // pred_check
          %p2300 = pneg %p368
        $region90: #{tpu_custom_call.1} parent=87 // pred_check_branch
          %2302 = sbr.rel (%p2300) target = $region92
        $region91: #{tpu_custom_call.1} parent=87 // pred_region
          %s2303 = sand.u32 %s353, 1
          %s2304 = scalar_lea.sflag [#allocation3], %s2303
          %s2305 = sand.u32 %s353, 1
          %s2306 = smul.addr %s2305, 8
          %s2307 = scalar_lea.vmem [#allocation2], %s2306
          %2308 = dma.done %s2304, 128
        $region92: #{tpu_custom_call.1} parent=87 // pred_fallthru
          _
        // Predicated region
        $region93: #{tpu_custom_call.1} parent=87 // pred_check
          %p2309 = pneg %p394
        $region94: #{tpu_custom_call.1} parent=87 // pred_check_branch
          %2311 = sbr.rel (%p2309) target = $region96
        $region95: #{tpu_custom_call.1} parent=87 // pred_region
          %s2312 = smul.u32 8, %s31
          %p2313 = scmp.lt.s32.totalorder %s2312, 31
          %s2314 = scalar_select %p2313, %s2312, 31
          %s2315 = smul.addr %s2314, 4
          %s2316 = scalar_lea.vmem %s15, %s2315
        $region96: #{tpu_custom_call.1} parent=87 // pred_fallthru
          _
      $region88: #{tpu_custom_call.1} parent=5 // pred_fallthru
        _
    $region6: #{tpu_custom_call.1} parent=1 // loop_footer
      %s29 = sadd.s32 1, %s25
    $region7: #{tpu_custom_call.1} parent=1 // loop_footer_branch
      %24 = sbr.rel target = $region3
    $region8: #{tpu_custom_call.1} parent=1 // loop_exit
      _
    %2317 = vsyncpa [#allocation3], 1
    %s2318 = scalar_lea.sflag [#allocation3], 1
    %2319 = vsyncpa %s2318, 1

</llo_original>
